<compile_context>
chip_gen: v5e
topology: v5e:2x2
jax: 0.10.0
libtpu: 0.0.40
codegen_flags: <defaults>
</compile_context>

<pallas_src>
import functools

import jax
import jax.numpy as jnp
from jax.experimental import pallas as pl
from jax.experimental.pallas import tpu as pltpu

KSIZE = 3
EPS = 1e-5


def _style_block_kernel(*refs, has_y, mxu_dtype):
    if has_y:
        (style_ref, x_ref, y_ref, wl_ref, bl_ref, gamma_ref, beta_ref,
         wk_ref, bconv_ref, out_ref, apad_ref) = refs
    else:
        (style_ref, x_ref, wl_ref, bl_ref, gamma_ref, beta_ref,
         wk_ref, bconv_ref, out_ref, apad_ref) = refs
        y_ref = None

    N, H, W, Cin = x_ref.shape
    Cout = bconv_ref.shape[-1]
    NHW = N * H * W

    # ---- fused optional residual add (was a separate XLA HBM round trip) ----
    x = x_ref[...]
    if has_y:
        x = x + y_ref[...]

    # ---- Linear: features = style @ Wl + bl (== style @ weight.T + bias) ----
    feats = jnp.dot(style_ref[...].astype(wl_ref.dtype), wl_ref[...],
                    preferred_element_type=jnp.float32) + bl_ref[...]      # (N, Cout)

    # ---- z = x + features broadcast over (H, W) ------------------------------
    z2 = (x + feats[:, None, None, :]).reshape(NHW, Cin)                   # (NHW, C)

    # ---- BatchNorm2d (training): single-pass batch stats, biased variance ----
    inv_n = 1.0 / NHW
    s1 = jnp.sum(z2, axis=0, keepdims=True)                                # (1, C)
    s2 = jnp.sum(z2 * z2, axis=0, keepdims=True)                           # (1, C)
    mean = s1 * inv_n
    var = s2 * inv_n - mean * mean
    a = gamma_ref[...] * ((z2 - mean) * jax.lax.rsqrt(var + EPS)) + beta_ref[...]
    a = jnp.maximum(a, 0.0)                                                # ReLU

    # ---- zero-pad into VMEM scratch: borders + interior written exactly once -
    apad_ref[:, 0:1, :, :] = jnp.zeros((N, 1, W + 2, Cin), jnp.float32)
    apad_ref[:, H + 1:H + 2, :, :] = jnp.zeros((N, 1, W + 2, Cin), jnp.float32)
    apad_ref[:, 1:H + 1, 0:1, :] = jnp.zeros((N, H, 1, Cin), jnp.float32)
    apad_ref[:, 1:H + 1, W + 1:W + 2, :] = jnp.zeros((N, H, 1, Cin), jnp.float32)
    apad_ref[:, 1:H + 1, 1:W + 1, :] = a.reshape(N, H, W, Cin)

    # ---- 3x3 conv as ONE im2col matmul: (NHW, 9*Cin) @ (9*Cin, Cout) ---------
    patches = jnp.concatenate(
        [apad_ref[:, dy:dy + H, dx:dx + W, :].reshape(NHW, Cin)
         for dy in range(KSIZE) for dx in range(KSIZE)], axis=-1)          # (NHW, 288)
    acc = jnp.dot(patches.astype(mxu_dtype), wk_ref[...],
                  preferred_element_type=jnp.float32) + bconv_ref[...]     # (NHW, Cout)

    # ---- lane-dense output store: (N*H, W*Cout) slab instead of 32-lane rows -
    # (built from tile-aligned slices + lane concat; fine for per-tile W sizes)
    acc3 = acc.reshape(N * H, W, Cout)
    out_ref[...] = jnp.concatenate(
        [acc3[:, w, :] for w in range(W)], axis=-1).astype(out_ref.dtype)


def batch_conv_style_block(style, x, params, y=None, *, mxu_dtype=jnp.float32):
    """Single fused pallas_call. mxu_dtype=jnp.bfloat16 enables the v6e/v7x
    MXU fast path (bf16 operands, f32 accumulation); default keeps full f32."""
    N, H, W, Cin = x.shape
    S = style.shape[-1]
    Cout = params["conv_w"].shape[-1]
    has_y = y is not None

    # One-off parameter prep (weight flatten / dtype cast only; no activation math).
    wk = params["conv_w"].reshape(KSIZE * KSIZE * Cin, Cout).astype(mxu_dtype)
    wl = params["lin_w"].astype(mxu_dtype)

    inputs = [style, x]
    if has_y:
        inputs.append(y)
    inputs += [wl, params["lin_b"], params["bn_gamma"], params["bn_beta"],
               wk, params["conv_b"]]

    vmem = pl.BlockSpec(memory_space=pltpu.MemorySpace.VMEM)

    flops = (2 * N * H * W * (KSIZE * KSIZE * Cin) * Cout   # conv matmul
             + 2 * N * S * Cout                             # linear
             + 12 * N * H * W * Cin)                        # add / BN / ReLU
    bytes_accessed = 4 * (x.size * (2 if has_y else 1) + style.size
                          + N * H * W * Cout) \
        + wk.size * wk.dtype.itemsize + wl.size * wl.dtype.itemsize \
        + 4 * (2 * Cin + 2 * Cout)

    out = pl.pallas_call(
        functools.partial(_style_block_kernel, has_y=has_y, mxu_dtype=mxu_dtype),
        out_shape=jax.ShapeDtypeStruct((N * H, W * Cout), jnp.float32),
        in_specs=[vmem] * len(inputs),
        out_specs=vmem,
        scratch_shapes=[pltpu.VMEM((N, H + 2, W + 2, Cin), jnp.float32)],
        compiler_params=pltpu.CompilerParams(vmem_limit_bytes=32 * 1024 * 1024),
        cost_estimate=pl.CostEstimate(flops=int(flops),
                                      transcendentals=int(Cin),
                                      bytes_accessed=int(bytes_accessed)),
    )(*inputs)
    # Free metadata reshape of the contiguous lane-dense slab back to NHWC.
    return out.reshape(N, H, W, Cout)


def reference(style, x, params, y=None):
    """Pure-JAX reference mirroring the PyTorch forward (NHWC / HWIO)."""
    if y is not None:
        x = x + y
    feats = style @ params["lin_w"] + params["lin_b"]                      # (N, Cout)
    z = x + feats[:, None, None, :]
    mean = jnp.mean(z, axis=(0, 1, 2), keepdims=True)
    var = jnp.mean((z - mean) ** 2, axis=(0, 1, 2), keepdims=True)
    a = params["bn_gamma"].reshape(1, 1, 1, -1) * (
        (z - mean) * jax.lax.rsqrt(var + EPS)) + params["bn_beta"].reshape(1, 1, 1, -1)
    a = jnp.maximum(a, 0.0)
    out = jax.lax.conv_general_dilated(
        a, params["conv_w"], window_strides=(1, 1), padding="SAME",
        dimension_numbers=("NHWC", "HWIO", "NHWC"))
    return out + params["conv_b"].reshape(1, 1, 1, -1)


if __name__ == "__main__":
    N, H, W = 2, 16, 16
    Cin = Cout = 32   # broadcast add (x + linear(style)) requires in_ch == out_ch
    S = 16            # style_channels

    key = jax.random.PRNGKey(0)
    ks = jax.random.split(key, 9)
    style = jax.random.normal(ks[0], (N, S), jnp.float32)
    x = jax.random.normal(ks[1], (N, H, W, Cin), jnp.float32)
    y_in = jax.random.normal(ks[2], (N, H, W, Cin), jnp.float32)

    params = dict(
        lin_w=0.1 * jax.random.normal(ks[3], (S, Cout), jnp.float32),
        lin_b=0.1 * jax.random.normal(ks[4], (1, Cout), jnp.float32),
        bn_gamma=1.0 + 0.1 * jax.random.normal(ks[5], (1, Cin), jnp.float32),
        bn_beta=0.1 * jax.random.normal(ks[6], (1, Cin), jnp.float32),
        conv_w=jax.random.normal(ks[7], (KSIZE, KSIZE, Cin, Cout), jnp.float32)
        * (1.0 / (KSIZE * KSIZE * Cin) ** 0.5),
        conv_b=0.1 * jax.random.normal(ks[8], (1, Cout), jnp.float32),
    )

    # 1) full-f32 path, fused residual add (exact vs reference)
    out = jax.block_until_ready(batch_conv_style_block(style, x, params, y=y_in))
    ref = reference(style, x, params, y=y_in)
    assert out.shape == (N, H, W, Cout)
    err = float(jnp.max(jnp.abs(out - ref)))
    assert jnp.allclose(out, ref, atol=1e-3, rtol=1e-3), f"f32(+y) max abs err {err}"

    # 2) path without the optional residual input
    out2 = jax.block_until_ready(batch_conv_style_block(style, x, params))
    ref2 = reference(style, x, params)
    err2 = float(jnp.max(jnp.abs(out2 - ref2)))
    assert jnp.allclose(out2, ref2, atol=1e-3, rtol=1e-3), f"f32(no y) max abs err {err2}"

    # 3) bf16 MXU-operand fast path (v6e/v7x), f32 accumulation, looser tolerance
    out3 = jax.block_until_ready(
        batch_conv_style_block(style, x, params, y=y_in, mxu_dtype=jnp.bfloat16))
    err3 = float(jnp.max(jnp.abs(out3 - ref)))
    assert jnp.allclose(out3, ref, atol=5e-2, rtol=5e-2), f"bf16 max abs err {err3}"

    print("KERNEL_OK")
</pallas_src>

<mosaic_0001>
module attributes {stable_mosaic.version = 11 : i64} {
  func.func @_style_block_kernel(%arg0: memref<2x16xf32, #tpu.memory_space<vmem>>, %arg1: memref<2x16x16x32xf32, #tpu.memory_space<vmem>>, %arg2: memref<2x16x16x32xf32, #tpu.memory_space<vmem>>, %arg3: memref<16x32xf32, #tpu.memory_space<vmem>>, %arg4: memref<1x32xf32, #tpu.memory_space<vmem>>, %arg5: memref<1x32xf32, #tpu.memory_space<vmem>>, %arg6: memref<1x32xf32, #tpu.memory_space<vmem>>, %arg7: memref<288x32xf32, #tpu.memory_space<vmem>>, %arg8: memref<1x32xf32, #tpu.memory_space<vmem>>, %arg9: memref<32x512xf32, #tpu.memory_space<vmem>>, %arg10: memref<2x18x18x32xf32, #tpu.memory_space<vmem>>) attributes {dimension_semantics = [], scalar_prefetch = 0 : i64, scratch_operands = 1 : i64, tpu.core_type = #tpu.core_type<tc>} {
    %c0 = arith.constant 0 : index
    %c0_0 = arith.constant 0 : index
    %c0_1 = arith.constant 0 : index
    %c0_2 = arith.constant 0 : index
    %0 = vector.load %arg1[%c0, %c0_0, %c0_1, %c0_2] : memref<2x16x16x32xf32, #tpu.memory_space<vmem>>, vector<2x16x16x32xf32>
    %c0_3 = arith.constant 0 : index
    %c0_4 = arith.constant 0 : index
    %c0_5 = arith.constant 0 : index
    %c0_6 = arith.constant 0 : index
    %1 = vector.load %arg2[%c0_3, %c0_4, %c0_5, %c0_6] : memref<2x16x16x32xf32, #tpu.memory_space<vmem>>, vector<2x16x16x32xf32>
    %2 = arith.addf %0, %1 : vector<2x16x16x32xf32>
    %c0_7 = arith.constant 0 : index
    %c0_8 = arith.constant 0 : index
    %3 = vector.load %arg0[%c0_7, %c0_8] : memref<2x16xf32, #tpu.memory_space<vmem>>, vector<2x16xf32>
    %c0_9 = arith.constant 0 : index
    %c0_10 = arith.constant 0 : index
    %4 = vector.load %arg3[%c0_9, %c0_10] : memref<16x32xf32, #tpu.memory_space<vmem>>, vector<16x32xf32>
    %cst = arith.constant dense<0.000000e+00> : vector<2x32xf32>
    %5 = tpu.matmul %3, %4, %cst {dimension_numbers = #tpu.dot_dimension_numbers<[1], [0], [0], [1], [0, 0, 1, 1], [], []>} : vector<2x16xf32>, vector<16x32xf32>, vector<2x32xf32> -> vector<2x32xf32>
    %c0_11 = arith.constant 0 : index
    %c0_12 = arith.constant 0 : index
    %6 = vector.load %arg4[%c0_11, %c0_12] : memref<1x32xf32, #tpu.memory_space<vmem>>, vector<1x32xf32>
    %7 = vector.broadcast %6 : vector<1x32xf32> to vector<2x32xf32>
    %8 = arith.addf %5, %7 : vector<2x32xf32>
    %9 = vector.shape_cast %8 : vector<2x32xf32> to vector<2x1x1x32xf32>
    %10 = vector.broadcast %9 : vector<2x1x1x32xf32> to vector<2x16x16x32xf32>
    %11 = arith.addf %2, %10 : vector<2x16x16x32xf32>
    %12 = vector.shape_cast %11 : vector<2x16x16x32xf32> to vector<512x32xf32>
    %cst_13 = arith.constant dense<0.000000e+00> : vector<32xf32>
    %13 = vector.multi_reduction <add>, %12, %cst_13 [0] : vector<512x32xf32> to vector<32xf32>
    %14 = vector.shape_cast %13 : vector<32xf32> to vector<1x32xf32>
    %15 = arith.mulf %12, %12 : vector<512x32xf32>
    %cst_14 = arith.constant dense<0.000000e+00> : vector<32xf32>
    %16 = vector.multi_reduction <add>, %15, %cst_14 [0] : vector<512x32xf32> to vector<32xf32>
    %17 = vector.shape_cast %16 : vector<32xf32> to vector<1x32xf32>
    %cst_15 = arith.constant 0.001953125 : f32
    %18 = vector.broadcast %cst_15 : f32 to vector<1x32xf32>
    %19 = arith.mulf %14, %18 : vector<1x32xf32>
    %cst_16 = arith.constant 0.001953125 : f32
    %20 = vector.broadcast %cst_16 : f32 to vector<1x32xf32>
    %21 = arith.mulf %17, %20 : vector<1x32xf32>
    %22 = arith.mulf %19, %19 : vector<1x32xf32>
    %23 = arith.subf %21, %22 : vector<1x32xf32>
    %c0_17 = arith.constant 0 : index
    %c0_18 = arith.constant 0 : index
    %24 = vector.load %arg5[%c0_17, %c0_18] : memref<1x32xf32, #tpu.memory_space<vmem>>, vector<1x32xf32>
    %25 = vector.broadcast %19 : vector<1x32xf32> to vector<512x32xf32>
    %26 = arith.subf %12, %25 : vector<512x32xf32>
    %cst_19 = arith.constant 9.99999974E-6 : f32
    %27 = vector.broadcast %cst_19 : f32 to vector<1x32xf32>
    %28 = arith.addf %23, %27 : vector<1x32xf32>
    %29 = math.rsqrt %28 : vector<1x32xf32>
    %30 = vector.broadcast %29 : vector<1x32xf32> to vector<512x32xf32>
    %31 = arith.mulf %26, %30 : vector<512x32xf32>
    %32 = vector.broadcast %24 : vector<1x32xf32> to vector<512x32xf32>
    %33 = arith.mulf %32, %31 : vector<512x32xf32>
    %c0_20 = arith.constant 0 : index
    %c0_21 = arith.constant 0 : index
    %34 = vector.load %arg6[%c0_20, %c0_21] : memref<1x32xf32, #tpu.memory_space<vmem>>, vector<1x32xf32>
    %35 = vector.broadcast %34 : vector<1x32xf32> to vector<512x32xf32>
    %36 = arith.addf %33, %35 : vector<512x32xf32>
    %cst_22 = arith.constant 0.000000e+00 : f32
    %37 = vector.broadcast %cst_22 : f32 to vector<512x32xf32>
    %38 = arith.maximumf %36, %37 : vector<512x32xf32>
    %cst_23 = arith.constant 0.000000e+00 : f32
    %39 = vector.broadcast %cst_23 : f32 to vector<2x1x18x32xf32>
    %c0_24 = arith.constant 0 : index
    %c0_25 = arith.constant 0 : index
    %c0_26 = arith.constant 0 : index
    %c0_27 = arith.constant 0 : index
    %40 = vector.load %arg10[%c0_24, %c0_25, %c0_26, %c0_27] : memref<2x18x18x32xf32, #tpu.memory_space<vmem>>, vector<2x1x18x32xf32>
    tpu.vector_store %arg10[%c0_24, %c0_25, %c0_26, %c0_27], %39 {strides = array<i32>} : memref<2x18x18x32xf32, #tpu.memory_space<vmem>>, vector<2x1x18x32xf32>,
    %cst_28 = arith.constant 0.000000e+00 : f32
    %41 = vector.broadcast %cst_28 : f32 to vector<2x1x18x32xf32>
    %c0_29 = arith.constant 0 : index
    %c17 = arith.constant 17 : index
    %c0_30 = arith.constant 0 : index
    %c0_31 = arith.constant 0 : index
    %42 = vector.load %arg10[%c0_29, %c17, %c0_30, %c0_31] : memref<2x18x18x32xf32, #tpu.memory_space<vmem>>, vector<2x1x18x32xf32>
    tpu.vector_store %arg10[%c0_29, %c17, %c0_30, %c0_31], %41 {strides = array<i32>} : memref<2x18x18x32xf32, #tpu.memory_space<vmem>>, vector<2x1x18x32xf32>,
    %cst_32 = arith.constant 0.000000e+00 : f32
    %43 = vector.broadcast %cst_32 : f32 to vector<2x16x1x32xf32>
    %c0_33 = arith.constant 0 : index
    %c1 = arith.constant 1 : index
    %c0_34 = arith.constant 0 : index
    %c0_35 = arith.constant 0 : index
    %44 = vector.load %arg10[%c0_33, %c1, %c0_34, %c0_35] : memref<2x18x18x32xf32, #tpu.memory_space<vmem>>, vector<2x16x1x32xf32>
    tpu.vector_store %arg10[%c0_33, %c1, %c0_34, %c0_35], %43 {strides = array<i32>} : memref<2x18x18x32xf32, #tpu.memory_space<vmem>>, vector<2x16x1x32xf32>,
    %cst_36 = arith.constant 0.000000e+00 : f32
    %45 = vector.broadcast %cst_36 : f32 to vector<2x16x1x32xf32>
    %c0_37 = arith.constant 0 : index
    %c1_38 = arith.constant 1 : index
    %c17_39 = arith.constant 17 : index
    %c0_40 = arith.constant 0 : index
    %46 = vector.load %arg10[%c0_37, %c1_38, %c17_39, %c0_40] : memref<2x18x18x32xf32, #tpu.memory_space<vmem>>, vector<2x16x1x32xf32>
    tpu.vector_store %arg10[%c0_37, %c1_38, %c17_39, %c0_40], %45 {strides = array<i32>} : memref<2x18x18x32xf32, #tpu.memory_space<vmem>>, vector<2x16x1x32xf32>,
    %47 = vector.shape_cast %38 : vector<512x32xf32> to vector<2x16x16x32xf32>
    %c0_41 = arith.constant 0 : index
    %c1_42 = arith.constant 1 : index
    %c1_43 = arith.constant 1 : index
    %c0_44 = arith.constant 0 : index
    %48 = vector.load %arg10[%c0_41, %c1_42, %c1_43, %c0_44] : memref<2x18x18x32xf32, #tpu.memory_space<vmem>>, vector<2x16x16x32xf32>
    tpu.vector_store %arg10[%c0_41, %c1_42, %c1_43, %c0_44], %47 {strides = array<i32>} : memref<2x18x18x32xf32, #tpu.memory_space<vmem>>, vector<2x16x16x32xf32>,
    %c0_45 = arith.constant 0 : index
    %c0_46 = arith.constant 0 : index
    %c0_47 = arith.constant 0 : index
    %c0_48 = arith.constant 0 : index
    %49 = vector.load %arg10[%c0_45, %c0_46, %c0_47, %c0_48] : memref<2x18x18x32xf32, #tpu.memory_space<vmem>>, vector<2x16x16x32xf32>
    %50 = vector.shape_cast %49 : vector<2x16x16x32xf32> to vector<512x32xf32>
    %c0_49 = arith.constant 0 : index
    %c0_50 = arith.constant 0 : index
    %c1_51 = arith.constant 1 : index
    %c0_52 = arith.constant 0 : index
    %51 = vector.load %arg10[%c0_49, %c0_50, %c1_51, %c0_52] : memref<2x18x18x32xf32, #tpu.memory_space<vmem>>, vector<2x16x16x32xf32>
    %52 = vector.shape_cast %51 : vector<2x16x16x32xf32> to vector<512x32xf32>
    %c0_53 = arith.constant 0 : index
    %c0_54 = arith.constant 0 : index
    %c2 = arith.constant 2 : index
    %c0_55 = arith.constant 0 : index
    %53 = vector.load %arg10[%c0_53, %c0_54, %c2, %c0_55] : memref<2x18x18x32xf32, #tpu.memory_space<vmem>>, vector<2x16x16x32xf32>
    %54 = vector.shape_cast %53 : vector<2x16x16x32xf32> to vector<512x32xf32>
    %c0_56 = arith.constant 0 : index
    %c1_57 = arith.constant 1 : index
    %c0_58 = arith.constant 0 : index
    %c0_59 = arith.constant 0 : index
    %55 = vector.load %arg10[%c0_56, %c1_57, %c0_58, %c0_59] : memref<2x18x18x32xf32, #tpu.memory_space<vmem>>, vector<2x16x16x32xf32>
    %56 = vector.shape_cast %55 : vector<2x16x16x32xf32> to vector<512x32xf32>
    %c0_60 = arith.constant 0 : index
    %c1_61 = arith.constant 1 : index
    %c1_62 = arith.constant 1 : index
    %c0_63 = arith.constant 0 : index
    %57 = vector.load %arg10[%c0_60, %c1_61, %c1_62, %c0_63] : memref<2x18x18x32xf32, #tpu.memory_space<vmem>>, vector<2x16x16x32xf32>
    %58 = vector.shape_cast %57 : vector<2x16x16x32xf32> to vector<512x32xf32>
    %c0_64 = arith.constant 0 : index
    %c1_65 = arith.constant 1 : index
    %c2_66 = arith.constant 2 : index
    %c0_67 = arith.constant 0 : index
    %59 = vector.load %arg10[%c0_64, %c1_65, %c2_66, %c0_67] : memref<2x18x18x32xf32, #tpu.memory_space<vmem>>, vector<2x16x16x32xf32>
    %60 = vector.shape_cast %59 : vector<2x16x16x32xf32> to vector<512x32xf32>
    %c0_68 = arith.constant 0 : index
    %c2_69 = arith.constant 2 : index
    %c0_70 = arith.constant 0 : index
    %c0_71 = arith.constant 0 : index
    %61 = vector.load %arg10[%c0_68, %c2_69, %c0_70, %c0_71] : memref<2x18x18x32xf32, #tpu.memory_space<vmem>>, vector<2x16x16x32xf32>
    %62 = vector.shape_cast %61 : vector<2x16x16x32xf32> to vector<512x32xf32>
    %c0_72 = arith.constant 0 : index
    %c2_73 = arith.constant 2 : index
    %c1_74 = arith.constant 1 : index
    %c0_75 = arith.constant 0 : index
    %63 = vector.load %arg10[%c0_72, %c2_73, %c1_74, %c0_75] : memref<2x18x18x32xf32, #tpu.memory_space<vmem>>, vector<2x16x16x32xf32>
    %64 = vector.shape_cast %63 : vector<2x16x16x32xf32> to vector<512x32xf32>
    %c0_76 = arith.constant 0 : index
    %c2_77 = arith.constant 2 : index
    %c2_78 = arith.constant 2 : index
    %c0_79 = arith.constant 0 : index
    %65 = vector.load %arg10[%c0_76, %c2_77, %c2_78, %c0_79] : memref<2x18x18x32xf32, #tpu.memory_space<vmem>>, vector<2x16x16x32xf32>
    %66 = vector.shape_cast %65 : vector<2x16x16x32xf32> to vector<512x32xf32>
    %67 = tpu.concatenate %50, %52, %54, %56, %58, %60, %62, %64, %66 in 1 : vector<512x32xf32>, vector<512x32xf32>, vector<512x32xf32>, vector<512x32xf32>, vector<512x32xf32>, vector<512x32xf32>, vector<512x32xf32>, vector<512x32xf32>, vector<512x32xf32> -> vector<512x288xf32>
    %c0_80 = arith.constant 0 : index
    %c0_81 = arith.constant 0 : index
    %68 = vector.load %arg7[%c0_80, %c0_81] : memref<288x32xf32, #tpu.memory_space<vmem>>, vector<288x32xf32>
    %cst_82 = arith.constant dense<0.000000e+00> : vector<512x32xf32>
    %69 = tpu.matmul %67, %68, %cst_82 {dimension_numbers = #tpu.dot_dimension_numbers<[1], [0], [0], [1], [0, 0, 1, 1], [], []>} : vector<512x288xf32>, vector<288x32xf32>, vector<512x32xf32> -> vector<512x32xf32>
    %c0_83 = arith.constant 0 : index
    %c0_84 = arith.constant 0 : index
    %70 = vector.load %arg8[%c0_83, %c0_84] : memref<1x32xf32, #tpu.memory_space<vmem>>, vector<1x32xf32>
    %71 = vector.broadcast %70 : vector<1x32xf32> to vector<512x32xf32>
    %72 = arith.addf %69, %71 : vector<512x32xf32>
    %73 = vector.shape_cast %72 : vector<512x32xf32> to vector<32x16x32xf32>
    %74 = vector.extract_strided_slice %73 {offsets = [0, 0, 0], sizes = [32, 1, 32], strides = [1, 1, 1]} : vector<32x16x32xf32> to vector<32x1x32xf32>
    %75 = vector.shape_cast %74 : vector<32x1x32xf32> to vector<32x32xf32>
    %76 = vector.extract_strided_slice %73 {offsets = [0, 1, 0], sizes = [32, 1, 32], strides = [1, 1, 1]} : vector<32x16x32xf32> to vector<32x1x32xf32>
    %77 = vector.shape_cast %76 : vector<32x1x32xf32> to vector<32x32xf32>
    %78 = vector.extract_strided_slice %73 {offsets = [0, 2, 0], sizes = [32, 1, 32], strides = [1, 1, 1]} : vector<32x16x32xf32> to vector<32x1x32xf32>
    %79 = vector.shape_cast %78 : vector<32x1x32xf32> to vector<32x32xf32>
    %80 = vector.extract_strided_slice %73 {offsets = [0, 3, 0], sizes = [32, 1, 32], strides = [1, 1, 1]} : vector<32x16x32xf32> to vector<32x1x32xf32>
    %81 = vector.shape_cast %80 : vector<32x1x32xf32> to vector<32x32xf32>
    %82 = vector.extract_strided_slice %73 {offsets = [0, 4, 0], sizes = [32, 1, 32], strides = [1, 1, 1]} : vector<32x16x32xf32> to vector<32x1x32xf32>
    %83 = vector.shape_cast %82 : vector<32x1x32xf32> to vector<32x32xf32>
    %84 = vector.extract_strided_slice %73 {offsets = [0, 5, 0], sizes = [32, 1, 32], strides = [1, 1, 1]} : vector<32x16x32xf32> to vector<32x1x32xf32>
    %85 = vector.shape_cast %84 : vector<32x1x32xf32> to vector<32x32xf32>
    %86 = vector.extract_strided_slice %73 {offsets = [0, 6, 0], sizes = [32, 1, 32], strides = [1, 1, 1]} : vector<32x16x32xf32> to vector<32x1x32xf32>
    %87 = vector.shape_cast %86 : vector<32x1x32xf32> to vector<32x32xf32>
    %88 = vector.extract_strided_slice %73 {offsets = [0, 7, 0], sizes = [32, 1, 32], strides = [1, 1, 1]} : vector<32x16x32xf32> to vector<32x1x32xf32>
    %89 = vector.shape_cast %88 : vector<32x1x32xf32> to vector<32x32xf32>
    %90 = vector.extract_strided_slice %73 {offsets = [0, 8, 0], sizes = [32, 1, 32], strides = [1, 1, 1]} : vector<32x16x32xf32> to vector<32x1x32xf32>
    %91 = vector.shape_cast %90 : vector<32x1x32xf32> to vector<32x32xf32>
    %92 = vector.extract_strided_slice %73 {offsets = [0, 9, 0], sizes = [32, 1, 32], strides = [1, 1, 1]} : vector<32x16x32xf32> to vector<32x1x32xf32>
    %93 = vector.shape_cast %92 : vector<32x1x32xf32> to vector<32x32xf32>
    %94 = vector.extract_strided_slice %73 {offsets = [0, 10, 0], sizes = [32, 1, 32], strides = [1, 1, 1]} : vector<32x16x32xf32> to vector<32x1x32xf32>
    %95 = vector.shape_cast %94 : vector<32x1x32xf32> to vector<32x32xf32>
    %96 = vector.extract_strided_slice %73 {offsets = [0, 11, 0], sizes = [32, 1, 32], strides = [1, 1, 1]} : vector<32x16x32xf32> to vector<32x1x32xf32>
    %97 = vector.shape_cast %96 : vector<32x1x32xf32> to vector<32x32xf32>
    %98 = vector.extract_strided_slice %73 {offsets = [0, 12, 0], sizes = [32, 1, 32], strides = [1, 1, 1]} : vector<32x16x32xf32> to vector<32x1x32xf32>
    %99 = vector.shape_cast %98 : vector<32x1x32xf32> to vector<32x32xf32>
    %100 = vector.extract_strided_slice %73 {offsets = [0, 13, 0], sizes = [32, 1, 32], strides = [1, 1, 1]} : vector<32x16x32xf32> to vector<32x1x32xf32>
    %101 = vector.shape_cast %100 : vector<32x1x32xf32> to vector<32x32xf32>
    %102 = vector.extract_strided_slice %73 {offsets = [0, 14, 0], sizes = [32, 1, 32], strides = [1, 1, 1]} : vector<32x16x32xf32> to vector<32x1x32xf32>
    %103 = vector.shape_cast %102 : vector<32x1x32xf32> to vector<32x32xf32>
    %104 = vector.extract_strided_slice %73 {offsets = [0, 15, 0], sizes = [32, 1, 32], strides = [1, 1, 1]} : vector<32x16x32xf32> to vector<32x1x32xf32>
    %105 = vector.shape_cast %104 : vector<32x1x32xf32> to vector<32x32xf32>
    %106 = tpu.concatenate %75, %77, %79, %81, %83, %85, %87, %89, %91, %93, %95, %97, %99, %101, %103, %105 in 1 : vector<32x32xf32>, vector<32x32xf32>, vector<32x32xf32>, vector<32x32xf32>, vector<32x32xf32>, vector<32x32xf32>, vector<32x32xf32>, vector<32x32xf32>, vector<32x32xf32>, vector<32x32xf32>, vector<32x32xf32>, vector<32x32xf32>, vector<32x32xf32>, vector<32x32xf32>, vector<32x32xf32>, vector<32x32xf32> -> vector<32x512xf32>
    %c0_85 = arith.constant 0 : index
    %c0_86 = arith.constant 0 : index
    %107 = vector.load %arg9[%c0_85, %c0_86] : memref<32x512xf32, #tpu.memory_space<vmem>>, vector<32x512xf32>
    tpu.vector_store %arg9[%c0_85, %c0_86], %106 {strides = array<i32>} : memref<32x512xf32, #tpu.memory_space<vmem>>, vector<32x512xf32>,
    return
  }
}

</mosaic_0001>

<llo_original>
// kernel: tpu_custom_call.1
$region0: #{tpu_custom_call.1}
  #allocation0 [shape = 'u32[]', space=smem, size = 0x4, offset = 0x4, fixed_abs, tag = 'smem constant byte address 0x4 - core index']
  #allocation1 [shape = 'u32[72,128]{1,0:T(1,128)}', space=vmem, size = 0x9000, scoped, tag = 'internal scratch']
  #allocation2 [shape = 'f32[2,18,18,32]{3,2,1,0:T(8,128)}', space=vmem, size = 0x6c000, scoped, tag = 'scratch operand']
  %s0 = inlined_call_operand.vmem [shape: f32[2,16], index: 0, kind: input, shape index: {}]
  %s1 = inlined_call_operand.hbm [shape: f32[2,16,16,32], index: 1, kind: input, shape index: {}]
  %s2 = inlined_call_operand.hbm [shape: f32[2,16,16,32], index: 2, kind: input, shape index: {}]
  %s3 = inlined_call_operand.vmem [shape: f32[16,32], index: 3, kind: input, shape index: {}]
  %s4 = inlined_call_operand.vmem [shape: f32[1,32], index: 4, kind: input, shape index: {}]
  %s5 = inlined_call_operand.vmem [shape: f32[1,32], index: 5, kind: input, shape index: {}]
  %s6 = inlined_call_operand.vmem [shape: f32[1,32], index: 6, kind: input, shape index: {}]
  %s7 = inlined_call_operand.vmem [shape: f32[288,32], index: 7, kind: input, shape index: {}]
  %s8 = inlined_call_operand.vmem [shape: f32[1,32], index: 8, kind: input, shape index: {}]
  %s9 = inlined_call_operand.hbm [shape: f32[32,512], index: 9, kind: output, shape index: {}]
  %s10 = sld [smem:[#allocation0]]
  $region54: #{tpu_custom_call.1} parent=0
    _
  %s12 = ssub.s32 1, %s10
  %s13 = scalar_select 0, %s12, %s10
  $region1: #{tpu_custom_call.1} parent=0
    #allocation3 [shape = 'u8[262144]{0}', space=vmem, size = 0x40000, scoped, tag = 'input window, operand 1, single buffered']
    #allocation4 [shape = 's32[1]{0}', space=sflag, size = 0x4, scoped, tag = 'scoped memory for tpu_custom_call.1']
    #allocation5 [shape = 's32[1]{0}', space=sflag, size = 0x4, scoped, tag = 'scoped memory for tpu_custom_call.1']
    #allocation6 [shape = 'u8[262144]{0}', space=vmem, size = 0x40000, scoped, tag = 'input window, operand 2, single buffered']
    #allocation7 [shape = 's32[1]{0}', space=sflag, size = 0x4, scoped, tag = 'scoped memory for tpu_custom_call.1']
    #allocation8 [shape = 'u8[65536]{0}', space=vmem, size = 0x10000, scoped, tag = 'output window, operand 0, single buffered']
    %14 = vsyncpa [#allocation4], 0
    %15 = vsyncpa [#allocation7], 0
    %16 = vsyncpa [#allocation5], 0
    // Predicated region
    $region2: #{tpu_custom_call.1} parent=1 // pred_check
      _
    $region3: #{tpu_custom_call.1} parent=1 // pred_check_branch
      %18 = sbr.rel (0) target = $region5
    $region4: #{tpu_custom_call.1} parent=1 // pred_region
      _
    $region5: #{tpu_custom_call.1} parent=1 // pred_fallthru
      _
    // Predicated region
    $region6: #{tpu_custom_call.1} parent=1 // pred_check
      _
    $region7: #{tpu_custom_call.1} parent=1 // pred_check_branch
      %20 = sbr.rel (0) target = $region9
    $region8: #{tpu_custom_call.1} parent=1 // pred_region
      %22 = vsyncadd [#allocation4], 0
      %s23 = sshll.u32 %s1, 4
      %s24 = int_to_ptr.hbm [resolvable:$true] %s23
      %s25 = sshll.u32 [#allocation3], 4
      %s26 = int_to_ptr.vmem [resolvable:$true] %s25
      %31 = dma.hbm_to_vmem [thread:$0]  %s24, 8192, %s26, [#allocation4], 128, 128, 8
    $region9: #{tpu_custom_call.1} parent=1 // pred_fallthru
      _
    // Predicated region
    $region10: #{tpu_custom_call.1} parent=1 // pred_check
      _
    $region11: #{tpu_custom_call.1} parent=1 // pred_check_branch
      %33 = sbr.rel (0) target = $region13
    $region12: #{tpu_custom_call.1} parent=1 // pred_region
      %35 = vsyncadd [#allocation7], 0
      %s36 = sshll.u32 %s2, 4
      %s37 = int_to_ptr.hbm [resolvable:$true] %s36
      %s38 = sshll.u32 [#allocation6], 4
      %s39 = int_to_ptr.vmem [resolvable:$true] %s38
      %44 = dma.hbm_to_vmem [thread:$0]  %s37, 8192, %s39, [#allocation7], 128, 128, 8
    $region13: #{tpu_custom_call.1} parent=1 // pred_fallthru
      _
    // Predicated region
    $region14: #{tpu_custom_call.1} parent=1 // pred_check
      _
    $region15: #{tpu_custom_call.1} parent=1 // pred_check_branch
      %46 = sbr.rel (0) target = $region17
    $region16: #{tpu_custom_call.1} parent=1 // pred_region
      _
    $region17: #{tpu_custom_call.1} parent=1 // pred_fallthru
      _
    // Predicated region
    $region18: #{tpu_custom_call.1} parent=1 // pred_check
      _
    $region19: #{tpu_custom_call.1} parent=1 // pred_check_branch
      %48 = sbr.rel (0) target = $region21
    $region20: #{tpu_custom_call.1} parent=1 // pred_region
      _
    $region21: #{tpu_custom_call.1} parent=1 // pred_fallthru
      _
    // Predicated region
    $region22: #{tpu_custom_call.1} parent=1 // pred_check
      _
    $region23: #{tpu_custom_call.1} parent=1 // pred_check_branch
      %50 = sbr.rel (0) target = $region25
    $region24: #{tpu_custom_call.1} parent=1 // pred_region
      _
    $region25: #{tpu_custom_call.1} parent=1 // pred_fallthru
      _
    // Predicated region
    $region26: #{tpu_custom_call.1} parent=1 // pred_check
      _
    $region27: #{tpu_custom_call.1} parent=1 // pred_check_branch
      %52 = sbr.rel (0) target = $region29
    $region28: #{tpu_custom_call.1} parent=1 // pred_region
      _
    $region29: #{tpu_custom_call.1} parent=1 // pred_fallthru
      _
    // Predicated region
    $region30: #{tpu_custom_call.1} parent=1 // pred_check
      _
    $region31: #{tpu_custom_call.1} parent=1 // pred_check_branch
      %54 = sbr.rel (0) target = $region33
    $region32: #{tpu_custom_call.1} parent=1 // pred_region
      _
    $region33: #{tpu_custom_call.1} parent=1 // pred_fallthru
      _
    // Predicated region
    $region34: #{tpu_custom_call.1} parent=1 // pred_check
      _
    $region35: #{tpu_custom_call.1} parent=1 // pred_check_branch
      %56 = sbr.rel (0) target = $region37
    $region36: #{tpu_custom_call.1} parent=1 // pred_region
      _
    $region37: #{tpu_custom_call.1} parent=1 // pred_fallthru
      _
    // Predicated region
    $region38: #{tpu_custom_call.1} parent=1 // pred_check
      _
    $region39: #{tpu_custom_call.1} parent=1 // pred_check_branch
      %58 = sbr.rel (0) target = $region41
    $region40: #{tpu_custom_call.1} parent=1 // pred_region
      %60 = dma.done [#allocation4], 8192
    $region41: #{tpu_custom_call.1} parent=1 // pred_fallthru
      _
    // Predicated region
    $region42: #{tpu_custom_call.1} parent=1 // pred_check
      _
    $region43: #{tpu_custom_call.1} parent=1 // pred_check_branch
      %62 = sbr.rel (0) target = $region45
    $region44: #{tpu_custom_call.1} parent=1 // pred_region
      %64 = dma.done [#allocation7], 8192
    $region45: #{tpu_custom_call.1} parent=1 // pred_fallthru
      _
    %v65 = vld [vmem:[#allocation3] sm:$0xff]
    %v66 = vld [vmem:[#allocation3 + $0x8] sm:$0xff]
    %v67 = vld [vmem:[#allocation3 + $0x10] sm:$0xff]
    %v68 = vld [vmem:[#allocation3 + $0x18] sm:$0xff]
    %v69 = vld [vmem:[#allocation3 + $0x20] sm:$0xff]
    %v70 = vld [vmem:[#allocation3 + $0x28] sm:$0xff]
    %v71 = vld [vmem:[#allocation3 + $0x30] sm:$0xff]
    %v72 = vld [vmem:[#allocation3 + $0x38] sm:$0xff]
    %v73 = vld [vmem:[#allocation3 + $0x40] sm:$0xff]
    %v74 = vld [vmem:[#allocation3 + $0x48] sm:$0xff]
    %v75 = vld [vmem:[#allocation3 + $0x50] sm:$0xff]
    %v76 = vld [vmem:[#allocation3 + $0x58] sm:$0xff]
    %v77 = vld [vmem:[#allocation3 + $0x60] sm:$0xff]
    %v78 = vld [vmem:[#allocation3 + $0x68] sm:$0xff]
    %v79 = vld [vmem:[#allocation3 + $0x70] sm:$0xff]
    %v80 = vld [vmem:[#allocation3 + $0x78] sm:$0xff]
    %v81 = vld [vmem:[#allocation3 + $0x80] sm:$0xff]
    %v82 = vld [vmem:[#allocation3 + $0x88] sm:$0xff]
    %v83 = vld [vmem:[#allocation3 + $0x90] sm:$0xff]
    %v84 = vld [vmem:[#allocation3 + $0x98] sm:$0xff]
    %v85 = vld [vmem:[#allocation3 + $0xa0] sm:$0xff]
    %v86 = vld [vmem:[#allocation3 + $0xa8] sm:$0xff]
    %v87 = vld [vmem:[#allocation3 + $0xb0] sm:$0xff]
    %v88 = vld [vmem:[#allocation3 + $0xb8] sm:$0xff]
    %v89 = vld [vmem:[#allocation3 + $0xc0] sm:$0xff]
    %v90 = vld [vmem:[#allocation3 + $0xc8] sm:$0xff]
    %v91 = vld [vmem:[#allocation3 + $0xd0] sm:$0xff]
    %v92 = vld [vmem:[#allocation3 + $0xd8] sm:$0xff]
    %v93 = vld [vmem:[#allocation3 + $0xe0] sm:$0xff]
    %v94 = vld [vmem:[#allocation3 + $0xe8] sm:$0xff]
    %v95 = vld [vmem:[#allocation3 + $0xf0] sm:$0xff]
    %v96 = vld [vmem:[#allocation3 + $0xf8] sm:$0xff]
    %v97 = vld [vmem:[#allocation3 + $0x100] sm:$0xff]
    %v98 = vld [vmem:[#allocation3 + $0x108] sm:$0xff]
    %v99 = vld [vmem:[#allocation3 + $0x110] sm:$0xff]
    %v100 = vld [vmem:[#allocation3 + $0x118] sm:$0xff]
    %v101 = vld [vmem:[#allocation3 + $0x120] sm:$0xff]
    %v102 = vld [vmem:[#allocation3 + $0x128] sm:$0xff]
    %v103 = vld [vmem:[#allocation3 + $0x130] sm:$0xff]
    %v104 = vld [vmem:[#allocation3 + $0x138] sm:$0xff]
    %v105 = vld [vmem:[#allocation3 + $0x140] sm:$0xff]
    %v106 = vld [vmem:[#allocation3 + $0x148] sm:$0xff]
    %v107 = vld [vmem:[#allocation3 + $0x150] sm:$0xff]
    %v108 = vld [vmem:[#allocation3 + $0x158] sm:$0xff]
    %v109 = vld [vmem:[#allocation3 + $0x160] sm:$0xff]
    %v110 = vld [vmem:[#allocation3 + $0x168] sm:$0xff]
    %v111 = vld [vmem:[#allocation3 + $0x170] sm:$0xff]
    %v112 = vld [vmem:[#allocation3 + $0x178] sm:$0xff]
    %v113 = vld [vmem:[#allocation3 + $0x180] sm:$0xff]
    %v114 = vld [vmem:[#allocation3 + $0x188] sm:$0xff]
    %v115 = vld [vmem:[#allocation3 + $0x190] sm:$0xff]
    %v116 = vld [vmem:[#allocation3 + $0x198] sm:$0xff]
    %v117 = vld [vmem:[#allocation3 + $0x1a0] sm:$0xff]
    %v118 = vld [vmem:[#allocation3 + $0x1a8] sm:$0xff]
    %v119 = vld [vmem:[#allocation3 + $0x1b0] sm:$0xff]
    %v120 = vld [vmem:[#allocation3 + $0x1b8] sm:$0xff]
    %v121 = vld [vmem:[#allocation3 + $0x1c0] sm:$0xff]
    %v122 = vld [vmem:[#allocation3 + $0x1c8] sm:$0xff]
    %v123 = vld [vmem:[#allocation3 + $0x1d0] sm:$0xff]
    %v124 = vld [vmem:[#allocation3 + $0x1d8] sm:$0xff]
    %v125 = vld [vmem:[#allocation3 + $0x1e0] sm:$0xff]
    %v126 = vld [vmem:[#allocation3 + $0x1e8] sm:$0xff]
    %v127 = vld [vmem:[#allocation3 + $0x1f0] sm:$0xff]
    %v128 = vld [vmem:[#allocation3 + $0x1f8] sm:$0xff]
    %v129 = vld [vmem:[#allocation6] sm:$0xff]
    %v130 = vld [vmem:[#allocation6 + $0x8] sm:$0xff]
    %v131 = vld [vmem:[#allocation6 + $0x10] sm:$0xff]
    %v132 = vld [vmem:[#allocation6 + $0x18] sm:$0xff]
    %v133 = vld [vmem:[#allocation6 + $0x20] sm:$0xff]
    %v134 = vld [vmem:[#allocation6 + $0x28] sm:$0xff]
    %v135 = vld [vmem:[#allocation6 + $0x30] sm:$0xff]
    %v136 = vld [vmem:[#allocation6 + $0x38] sm:$0xff]
    %v137 = vld [vmem:[#allocation6 + $0x40] sm:$0xff]
    %v138 = vld [vmem:[#allocation6 + $0x48] sm:$0xff]
    %v139 = vld [vmem:[#allocation6 + $0x50] sm:$0xff]
    %v140 = vld [vmem:[#allocation6 + $0x58] sm:$0xff]
    %v141 = vld [vmem:[#allocation6 + $0x60] sm:$0xff]
    %v142 = vld [vmem:[#allocation6 + $0x68] sm:$0xff]
    %v143 = vld [vmem:[#allocation6 + $0x70] sm:$0xff]
    %v144 = vld [vmem:[#allocation6 + $0x78] sm:$0xff]
    %v145 = vld [vmem:[#allocation6 + $0x80] sm:$0xff]
    %v146 = vld [vmem:[#allocation6 + $0x88] sm:$0xff]
    %v147 = vld [vmem:[#allocation6 + $0x90] sm:$0xff]
    %v148 = vld [vmem:[#allocation6 + $0x98] sm:$0xff]
    %v149 = vld [vmem:[#allocation6 + $0xa0] sm:$0xff]
    %v150 = vld [vmem:[#allocation6 + $0xa8] sm:$0xff]
    %v151 = vld [vmem:[#allocation6 + $0xb0] sm:$0xff]
    %v152 = vld [vmem:[#allocation6 + $0xb8] sm:$0xff]
    %v153 = vld [vmem:[#allocation6 + $0xc0] sm:$0xff]
    %v154 = vld [vmem:[#allocation6 + $0xc8] sm:$0xff]
    %v155 = vld [vmem:[#allocation6 + $0xd0] sm:$0xff]
    %v156 = vld [vmem:[#allocation6 + $0xd8] sm:$0xff]
    %v157 = vld [vmem:[#allocation6 + $0xe0] sm:$0xff]
    %v158 = vld [vmem:[#allocation6 + $0xe8] sm:$0xff]
    %v159 = vld [vmem:[#allocation6 + $0xf0] sm:$0xff]
    %v160 = vld [vmem:[#allocation6 + $0xf8] sm:$0xff]
    %v161 = vld [vmem:[#allocation6 + $0x100] sm:$0xff]
    %v162 = vld [vmem:[#allocation6 + $0x108] sm:$0xff]
    %v163 = vld [vmem:[#allocation6 + $0x110] sm:$0xff]
    %v164 = vld [vmem:[#allocation6 + $0x118] sm:$0xff]
    %v165 = vld [vmem:[#allocation6 + $0x120] sm:$0xff]
    %v166 = vld [vmem:[#allocation6 + $0x128] sm:$0xff]
    %v167 = vld [vmem:[#allocation6 + $0x130] sm:$0xff]
    %v168 = vld [vmem:[#allocation6 + $0x138] sm:$0xff]
    %v169 = vld [vmem:[#allocation6 + $0x140] sm:$0xff]
    %v170 = vld [vmem:[#allocation6 + $0x148] sm:$0xff]
    %v171 = vld [vmem:[#allocation6 + $0x150] sm:$0xff]
    %v172 = vld [vmem:[#allocation6 + $0x158] sm:$0xff]
    %v173 = vld [vmem:[#allocation6 + $0x160] sm:$0xff]
    %v174 = vld [vmem:[#allocation6 + $0x168] sm:$0xff]
    %v175 = vld [vmem:[#allocation6 + $0x170] sm:$0xff]
    %v176 = vld [vmem:[#allocation6 + $0x178] sm:$0xff]
    %v177 = vld [vmem:[#allocation6 + $0x180] sm:$0xff]
    %v178 = vld [vmem:[#allocation6 + $0x188] sm:$0xff]
    %v179 = vld [vmem:[#allocation6 + $0x190] sm:$0xff]
    %v180 = vld [vmem:[#allocation6 + $0x198] sm:$0xff]
    %v181 = vld [vmem:[#allocation6 + $0x1a0] sm:$0xff]
    %v182 = vld [vmem:[#allocation6 + $0x1a8] sm:$0xff]
    %v183 = vld [vmem:[#allocation6 + $0x1b0] sm:$0xff]
    %v184 = vld [vmem:[#allocation6 + $0x1b8] sm:$0xff]
    %v185 = vld [vmem:[#allocation6 + $0x1c0] sm:$0xff]
    %v186 = vld [vmem:[#allocation6 + $0x1c8] sm:$0xff]
    %v187 = vld [vmem:[#allocation6 + $0x1d0] sm:$0xff]
    %v188 = vld [vmem:[#allocation6 + $0x1d8] sm:$0xff]
    %v189 = vld [vmem:[#allocation6 + $0x1e0] sm:$0xff]
    %v190 = vld [vmem:[#allocation6 + $0x1e8] sm:$0xff]
    %v191 = vld [vmem:[#allocation6 + $0x1f0] sm:$0xff]
    %v192 = vld [vmem:[#allocation6 + $0x1f8] sm:$0xff]
    %v193 = vadd.f32 %v65, %v129
    %v194 = vadd.f32 %v66, %v130
    %v195 = vadd.f32 %v67, %v131
    %v196 = vadd.f32 %v68, %v132
    %v197 = vadd.f32 %v69, %v133
    %v198 = vadd.f32 %v70, %v134
    %v199 = vadd.f32 %v71, %v135
    %v200 = vadd.f32 %v72, %v136
    %v201 = vadd.f32 %v73, %v137
    %v202 = vadd.f32 %v74, %v138
    %v203 = vadd.f32 %v75, %v139
    %v204 = vadd.f32 %v76, %v140
    %v205 = vadd.f32 %v77, %v141
    %v206 = vadd.f32 %v78, %v142
    %v207 = vadd.f32 %v79, %v143
    %v208 = vadd.f32 %v80, %v144
    %v209 = vadd.f32 %v81, %v145
    %v210 = vadd.f32 %v82, %v146
    %v211 = vadd.f32 %v83, %v147
    %v212 = vadd.f32 %v84, %v148
    %v213 = vadd.f32 %v85, %v149
    %v214 = vadd.f32 %v86, %v150
    %v215 = vadd.f32 %v87, %v151
    %v216 = vadd.f32 %v88, %v152
    %v217 = vadd.f32 %v89, %v153
    %v218 = vadd.f32 %v90, %v154
    %v219 = vadd.f32 %v91, %v155
    %v220 = vadd.f32 %v92, %v156
    %v221 = vadd.f32 %v93, %v157
    %v222 = vadd.f32 %v94, %v158
    %v223 = vadd.f32 %v95, %v159
    %v224 = vadd.f32 %v96, %v160
    %v225 = vadd.f32 %v97, %v161
    %v226 = vadd.f32 %v98, %v162
    %v227 = vadd.f32 %v99, %v163
    %v228 = vadd.f32 %v100, %v164
    %v229 = vadd.f32 %v101, %v165
    %v230 = vadd.f32 %v102, %v166
    %v231 = vadd.f32 %v103, %v167
    %v232 = vadd.f32 %v104, %v168
    %v233 = vadd.f32 %v105, %v169
    %v234 = vadd.f32 %v106, %v170
    %v235 = vadd.f32 %v107, %v171
    %v236 = vadd.f32 %v108, %v172
    %v237 = vadd.f32 %v109, %v173
    %v238 = vadd.f32 %v110, %v174
    %v239 = vadd.f32 %v111, %v175
    %v240 = vadd.f32 %v112, %v176
    %v241 = vadd.f32 %v113, %v177
    %v242 = vadd.f32 %v114, %v178
    %v243 = vadd.f32 %v115, %v179
    %v244 = vadd.f32 %v116, %v180
    %v245 = vadd.f32 %v117, %v181
    %v246 = vadd.f32 %v118, %v182
    %v247 = vadd.f32 %v119, %v183
    %v248 = vadd.f32 %v120, %v184
    %v249 = vadd.f32 %v121, %v185
    %v250 = vadd.f32 %v122, %v186
    %v251 = vadd.f32 %v123, %v187
    %v252 = vadd.f32 %v124, %v188
    %v253 = vadd.f32 %v125, %v189
    %v254 = vadd.f32 %v126, %v190
    %v255 = vadd.f32 %v127, %v191
    %v256 = vadd.f32 %v128, %v192
    %v257 = vld [vmem:[%s0] sm:$0x3]
    %v258 = vld [vmem:[%s3] sm:$0xff]
    %v259 = vld [vmem:[%s3 + $0x8] sm:$0xff]
    %v260 = vld [vmem:[%s4] sm:$0x1]
    %v262 = vperm.slane %v260, 0
    %vm264 = vcmask 130048
    %v266 = vsel %vm264, %v257, 0
    %268 = vmatpush.msra.mxu0 0.0
    %269 = vmatpush.msra.mxu0 0.0
    %270 = vmatpush.msra.mxu0 0.0
    %271 = vmatpush.msra.mxu0 0.0
    %272 = vmatpush.msra.mxu0 0.0
    %273 = vmatpush.msra.mxu0 0.0
    %274 = vmatpush.msra.mxu0 0.0
    %275 = vmatpush.msra.mxu0 0.0
    %276 = vmatpush.msra.mxu0 0.0
    %277 = vmatpush.msra.mxu0 0.0
    %278 = vmatpush.msra.mxu0 0.0
    %279 = vmatpush.msra.mxu0 0.0
    %280 = vmatpush.msra.mxu0 0.0
    %281 = vmatpush.msra.mxu0 0.0
    %282 = vmatpush.msra.mxu0 %v259
    %283 = vmatpush.msra.mxu0 %v258
    %284 = vmatmul.f32.gmra.mxu0 %v266
    %v285 = vpop.f32.mrf.mxu0
    %v286 = vadd.f32 %v262, %v285
    %287 = vdwg.mxu0
    %v289 = vrot.slane %v286, 1
    %v290 = vperm.slane %v286, 0
    %v291 = vperm.slane %v289, 0
    %v294 = vadd.f32 %v193, %v290
    %v295 = vadd.f32 %v194, %v290
    %v296 = vadd.f32 %v195, %v290
    %v297 = vadd.f32 %v196, %v290
    %v298 = vadd.f32 %v197, %v290
    %v299 = vadd.f32 %v198, %v290
    %v300 = vadd.f32 %v199, %v290
    %v301 = vadd.f32 %v200, %v290
    %v302 = vadd.f32 %v201, %v290
    %v303 = vadd.f32 %v202, %v290
    %v304 = vadd.f32 %v203, %v290
    %v305 = vadd.f32 %v204, %v290
    %v306 = vadd.f32 %v205, %v290
    %v307 = vadd.f32 %v206, %v290
    %v308 = vadd.f32 %v207, %v290
    %v309 = vadd.f32 %v208, %v290
    %v310 = vadd.f32 %v209, %v290
    %v311 = vadd.f32 %v210, %v290
    %v312 = vadd.f32 %v211, %v290
    %v313 = vadd.f32 %v212, %v290
    %v314 = vadd.f32 %v213, %v290
    %v315 = vadd.f32 %v214, %v290
    %v316 = vadd.f32 %v215, %v290
    %v317 = vadd.f32 %v216, %v290
    %v318 = vadd.f32 %v217, %v290
    %v319 = vadd.f32 %v218, %v290
    %v320 = vadd.f32 %v219, %v290
    %v321 = vadd.f32 %v220, %v290
    %v322 = vadd.f32 %v221, %v290
    %v323 = vadd.f32 %v222, %v290
    %v324 = vadd.f32 %v223, %v290
    %v325 = vadd.f32 %v224, %v290
    %v326 = vadd.f32 %v225, %v291
    %v327 = vadd.f32 %v226, %v291
    %v328 = vadd.f32 %v227, %v291
    %v329 = vadd.f32 %v228, %v291
    %v330 = vadd.f32 %v229, %v291
    %v331 = vadd.f32 %v230, %v291
    %v332 = vadd.f32 %v231, %v291
    %v333 = vadd.f32 %v232, %v291
    %v334 = vadd.f32 %v233, %v291
    %v335 = vadd.f32 %v234, %v291
    %v336 = vadd.f32 %v235, %v291
    %v337 = vadd.f32 %v236, %v291
    %v338 = vadd.f32 %v237, %v291
    %v339 = vadd.f32 %v238, %v291
    %v340 = vadd.f32 %v239, %v291
    %v341 = vadd.f32 %v240, %v291
    %v342 = vadd.f32 %v241, %v291
    %v343 = vadd.f32 %v242, %v291
    %v344 = vadd.f32 %v243, %v291
    %v345 = vadd.f32 %v244, %v291
    %v346 = vadd.f32 %v245, %v291
    %v347 = vadd.f32 %v246, %v291
    %v348 = vadd.f32 %v247, %v291
    %v349 = vadd.f32 %v248, %v291
    %v350 = vadd.f32 %v249, %v291
    %v351 = vadd.f32 %v250, %v291
    %v352 = vadd.f32 %v251, %v291
    %v353 = vadd.f32 %v252, %v291
    %v354 = vadd.f32 %v253, %v291
    %v355 = vadd.f32 %v254, %v291
    %v356 = vadd.f32 %v255, %v291
    %v357 = vadd.f32 %v256, %v291
    %vm358 = vcmask 261120
    %v359 = vsel %vm358, %v294, 0.0
    %v360 = vsel %vm358, %v295, 0.0
    %v361 = vadd.f32 %v359, %v360
    %v362 = vsel %vm358, %v296, 0.0
    %v363 = vadd.f32 %v361, %v362
    %v364 = vsel %vm358, %v297, 0.0
    %v365 = vadd.f32 %v363, %v364
    %v366 = vsel %vm358, %v298, 0.0
    %v367 = vadd.f32 %v365, %v366
    %v368 = vsel %vm358, %v299, 0.0
    %v369 = vadd.f32 %v367, %v368
    %v370 = vsel %vm358, %v300, 0.0
    %v371 = vadd.f32 %v369, %v370
    %v372 = vsel %vm358, %v301, 0.0
    %v373 = vadd.f32 %v371, %v372
    %v374 = vsel %vm358, %v302, 0.0
    %v375 = vadd.f32 %v373, %v374
    %v376 = vsel %vm358, %v303, 0.0
    %v377 = vadd.f32 %v375, %v376
    %v378 = vsel %vm358, %v304, 0.0
    %v379 = vadd.f32 %v377, %v378
    %v380 = vsel %vm358, %v305, 0.0
    %v381 = vadd.f32 %v379, %v380
    %v382 = vsel %vm358, %v306, 0.0
    %v383 = vadd.f32 %v381, %v382
    %v384 = vsel %vm358, %v307, 0.0
    %v385 = vadd.f32 %v383, %v384
    %v386 = vsel %vm358, %v308, 0.0
    %v387 = vadd.f32 %v385, %v386
    %v388 = vsel %vm358, %v309, 0.0
    %v389 = vadd.f32 %v387, %v388
    %v390 = vsel %vm358, %v310, 0.0
    %v391 = vadd.f32 %v389, %v390
    %v392 = vsel %vm358, %v311, 0.0
    %v393 = vadd.f32 %v391, %v392
    %v394 = vsel %vm358, %v312, 0.0
    %v395 = vadd.f32 %v393, %v394
    %v396 = vsel %vm358, %v313, 0.0
    %v397 = vadd.f32 %v395, %v396
    %v398 = vsel %vm358, %v314, 0.0
    %v399 = vadd.f32 %v397, %v398
    %v400 = vsel %vm358, %v315, 0.0
    %v401 = vadd.f32 %v399, %v400
    %v402 = vsel %vm358, %v316, 0.0
    %v403 = vadd.f32 %v401, %v402
    %v404 = vsel %vm358, %v317, 0.0
    %v405 = vadd.f32 %v403, %v404
    %v406 = vsel %vm358, %v318, 0.0
    %v407 = vadd.f32 %v405, %v406
    %v408 = vsel %vm358, %v319, 0.0
    %v409 = vadd.f32 %v407, %v408
    %v410 = vsel %vm358, %v320, 0.0
    %v411 = vadd.f32 %v409, %v410
    %v412 = vsel %vm358, %v321, 0.0
    %v413 = vadd.f32 %v411, %v412
    %v414 = vsel %vm358, %v322, 0.0
    %v415 = vadd.f32 %v413, %v414
    %v416 = vsel %vm358, %v323, 0.0
    %v417 = vadd.f32 %v415, %v416
    %v418 = vsel %vm358, %v324, 0.0
    %v419 = vadd.f32 %v417, %v418
    %v420 = vsel %vm358, %v325, 0.0
    %v421 = vadd.f32 %v419, %v420
    %v422 = vsel %vm358, %v326, 0.0
    %v423 = vadd.f32 %v421, %v422
    %v424 = vsel %vm358, %v327, 0.0
    %v425 = vadd.f32 %v423, %v424
    %v426 = vsel %vm358, %v328, 0.0
    %v427 = vadd.f32 %v425, %v426
    %v428 = vsel %vm358, %v329, 0.0
    %v429 = vadd.f32 %v427, %v428
    %v430 = vsel %vm358, %v330, 0.0
    %v431 = vadd.f32 %v429, %v430
    %v432 = vsel %vm358, %v331, 0.0
    %v433 = vadd.f32 %v431, %v432
    %v434 = vsel %vm358, %v332, 0.0
    %v435 = vadd.f32 %v433, %v434
    %v436 = vsel %vm358, %v333, 0.0
    %v437 = vadd.f32 %v435, %v436
    %v438 = vsel %vm358, %v334, 0.0
    %v439 = vadd.f32 %v437, %v438
    %v440 = vsel %vm358, %v335, 0.0
    %v441 = vadd.f32 %v439, %v440
    %v442 = vsel %vm358, %v336, 0.0
    %v443 = vadd.f32 %v441, %v442
    %v444 = vsel %vm358, %v337, 0.0
    %v445 = vadd.f32 %v443, %v444
    %v446 = vsel %vm358, %v338, 0.0
    %v447 = vadd.f32 %v445, %v446
    %v448 = vsel %vm358, %v339, 0.0
    %v449 = vadd.f32 %v447, %v448
    %v450 = vsel %vm358, %v340, 0.0
    %v451 = vadd.f32 %v449, %v450
    %v452 = vsel %vm358, %v341, 0.0
    %v453 = vadd.f32 %v451, %v452
    %v454 = vsel %vm358, %v342, 0.0
    %v455 = vadd.f32 %v453, %v454
    %v456 = vsel %vm358, %v343, 0.0
    %v457 = vadd.f32 %v455, %v456
    %v458 = vsel %vm358, %v344, 0.0
    %v459 = vadd.f32 %v457, %v458
    %v460 = vsel %vm358, %v345, 0.0
    %v461 = vadd.f32 %v459, %v460
    %v462 = vsel %vm358, %v346, 0.0
    %v463 = vadd.f32 %v461, %v462
    %v464 = vsel %vm358, %v347, 0.0
    %v465 = vadd.f32 %v463, %v464
    %v466 = vsel %vm358, %v348, 0.0
    %v467 = vadd.f32 %v465, %v466
    %v468 = vsel %vm358, %v349, 0.0
    %v469 = vadd.f32 %v467, %v468
    %v470 = vsel %vm358, %v350, 0.0
    %v471 = vadd.f32 %v469, %v470
    %v472 = vsel %vm358, %v351, 0.0
    %v473 = vadd.f32 %v471, %v472
    %v474 = vsel %vm358, %v352, 0.0
    %v475 = vadd.f32 %v473, %v474
    %v476 = vsel %vm358, %v353, 0.0
    %v477 = vadd.f32 %v475, %v476
    %v478 = vsel %vm358, %v354, 0.0
    %v479 = vadd.f32 %v477, %v478
    %v480 = vsel %vm358, %v355, 0.0
    %v481 = vadd.f32 %v479, %v480
    %v482 = vsel %vm358, %v356, 0.0
    %v483 = vadd.f32 %v481, %v482
    %v484 = vsel %vm358, %v357, 0.0
    %v485 = vadd.f32 %v483, %v484
    %v486 = vrot.slane %v485, 4
    %v487 = vadd.f32 %v485, %v486
    %v488 = vrot.slane %v487, 2
    %v489 = vadd.f32 %v487, %v488
    %v490 = vrot.slane %v489, 1
    %v491 = vadd.f32 %v489, %v490
    %v492 = vmul.f32 %v294, %v294
    %v493 = vmul.f32 %v295, %v295
    %v494 = vmul.f32 %v296, %v296
    %v495 = vmul.f32 %v297, %v297
    %v496 = vmul.f32 %v298, %v298
    %v497 = vmul.f32 %v299, %v299
    %v498 = vmul.f32 %v300, %v300
    %v499 = vmul.f32 %v301, %v301
    %v500 = vmul.f32 %v302, %v302
    %v501 = vmul.f32 %v303, %v303
    %v502 = vmul.f32 %v304, %v304
    %v503 = vmul.f32 %v305, %v305
    %v504 = vmul.f32 %v306, %v306
    %v505 = vmul.f32 %v307, %v307
    %v506 = vmul.f32 %v308, %v308
    %v507 = vmul.f32 %v309, %v309
    %v508 = vmul.f32 %v310, %v310
    %v509 = vmul.f32 %v311, %v311
    %v510 = vmul.f32 %v312, %v312
    %v511 = vmul.f32 %v313, %v313
    %v512 = vmul.f32 %v314, %v314
    %v513 = vmul.f32 %v315, %v315
    %v514 = vmul.f32 %v316, %v316
    %v515 = vmul.f32 %v317, %v317
    %v516 = vmul.f32 %v318, %v318
    %v517 = vmul.f32 %v319, %v319
    %v518 = vmul.f32 %v320, %v320
    %v519 = vmul.f32 %v321, %v321
    %v520 = vmul.f32 %v322, %v322
    %v521 = vmul.f32 %v323, %v323
    %v522 = vmul.f32 %v324, %v324
    %v523 = vmul.f32 %v325, %v325
    %v524 = vmul.f32 %v326, %v326
    %v525 = vmul.f32 %v327, %v327
    %v526 = vmul.f32 %v328, %v328
    %v527 = vmul.f32 %v329, %v329
    %v528 = vmul.f32 %v330, %v330
    %v529 = vmul.f32 %v331, %v331
    %v530 = vmul.f32 %v332, %v332
    %v531 = vmul.f32 %v333, %v333
    %v532 = vmul.f32 %v334, %v334
    %v533 = vmul.f32 %v335, %v335
    %v534 = vmul.f32 %v336, %v336
    %v535 = vmul.f32 %v337, %v337
    %v536 = vmul.f32 %v338, %v338
    %v537 = vmul.f32 %v339, %v339
    %v538 = vmul.f32 %v340, %v340
    %v539 = vmul.f32 %v341, %v341
    %v540 = vmul.f32 %v342, %v342
    %v541 = vmul.f32 %v343, %v343
    %v542 = vmul.f32 %v344, %v344
    %v543 = vmul.f32 %v345, %v345
    %v544 = vmul.f32 %v346, %v346
    %v545 = vmul.f32 %v347, %v347
    %v546 = vmul.f32 %v348, %v348
    %v547 = vmul.f32 %v349, %v349
    %v548 = vmul.f32 %v350, %v350
    %v549 = vmul.f32 %v351, %v351
    %v550 = vmul.f32 %v352, %v352
    %v551 = vmul.f32 %v353, %v353
    %v552 = vmul.f32 %v354, %v354
    %v553 = vmul.f32 %v355, %v355
    %v554 = vmul.f32 %v356, %v356
    %v555 = vmul.f32 %v357, %v357
    %v556 = vsel %vm358, %v492, 0.0
    %v557 = vsel %vm358, %v493, 0.0
    %v558 = vadd.f32 %v556, %v557
    %v559 = vsel %vm358, %v494, 0.0
    %v560 = vadd.f32 %v558, %v559
    %v561 = vsel %vm358, %v495, 0.0
    %v562 = vadd.f32 %v560, %v561
    %v563 = vsel %vm358, %v496, 0.0
    %v564 = vadd.f32 %v562, %v563
    %v565 = vsel %vm358, %v497, 0.0
    %v566 = vadd.f32 %v564, %v565
    %v567 = vsel %vm358, %v498, 0.0
    %v568 = vadd.f32 %v566, %v567
    %v569 = vsel %vm358, %v499, 0.0
    %v570 = vadd.f32 %v568, %v569
    %v571 = vsel %vm358, %v500, 0.0
    %v572 = vadd.f32 %v570, %v571
    %v573 = vsel %vm358, %v501, 0.0
    %v574 = vadd.f32 %v572, %v573
    %v575 = vsel %vm358, %v502, 0.0
    %v576 = vadd.f32 %v574, %v575
    %v577 = vsel %vm358, %v503, 0.0
    %v578 = vadd.f32 %v576, %v577
    %v579 = vsel %vm358, %v504, 0.0
    %v580 = vadd.f32 %v578, %v579
    %v581 = vsel %vm358, %v505, 0.0
    %v582 = vadd.f32 %v580, %v581
    %v583 = vsel %vm358, %v506, 0.0
    %v584 = vadd.f32 %v582, %v583
    %v585 = vsel %vm358, %v507, 0.0
    %v586 = vadd.f32 %v584, %v585
    %v587 = vsel %vm358, %v508, 0.0
    %v588 = vadd.f32 %v586, %v587
    %v589 = vsel %vm358, %v509, 0.0
    %v590 = vadd.f32 %v588, %v589
    %v591 = vsel %vm358, %v510, 0.0
    %v592 = vadd.f32 %v590, %v591
    %v593 = vsel %vm358, %v511, 0.0
    %v594 = vadd.f32 %v592, %v593
    %v595 = vsel %vm358, %v512, 0.0
    %v596 = vadd.f32 %v594, %v595
    %v597 = vsel %vm358, %v513, 0.0
    %v598 = vadd.f32 %v596, %v597
    %v599 = vsel %vm358, %v514, 0.0
    %v600 = vadd.f32 %v598, %v599
    %v601 = vsel %vm358, %v515, 0.0
    %v602 = vadd.f32 %v600, %v601
    %v603 = vsel %vm358, %v516, 0.0
    %v604 = vadd.f32 %v602, %v603
    %v605 = vsel %vm358, %v517, 0.0
    %v606 = vadd.f32 %v604, %v605
    %v607 = vsel %vm358, %v518, 0.0
    %v608 = vadd.f32 %v606, %v607
    %v609 = vsel %vm358, %v519, 0.0
    %v610 = vadd.f32 %v608, %v609
    %v611 = vsel %vm358, %v520, 0.0
    %v612 = vadd.f32 %v610, %v611
    %v613 = vsel %vm358, %v521, 0.0
    %v614 = vadd.f32 %v612, %v613
    %v615 = vsel %vm358, %v522, 0.0
    %v616 = vadd.f32 %v614, %v615
    %v617 = vsel %vm358, %v523, 0.0
    %v618 = vadd.f32 %v616, %v617
    %v619 = vsel %vm358, %v524, 0.0
    %v620 = vadd.f32 %v618, %v619
    %v621 = vsel %vm358, %v525, 0.0
    %v622 = vadd.f32 %v620, %v621
    %v623 = vsel %vm358, %v526, 0.0
    %v624 = vadd.f32 %v622, %v623
    %v625 = vsel %vm358, %v527, 0.0
    %v626 = vadd.f32 %v624, %v625
    %v627 = vsel %vm358, %v528, 0.0
    %v628 = vadd.f32 %v626, %v627
    %v629 = vsel %vm358, %v529, 0.0
    %v630 = vadd.f32 %v628, %v629
    %v631 = vsel %vm358, %v530, 0.0
    %v632 = vadd.f32 %v630, %v631
    %v633 = vsel %vm358, %v531, 0.0
    %v634 = vadd.f32 %v632, %v633
    %v635 = vsel %vm358, %v532, 0.0
    %v636 = vadd.f32 %v634, %v635
    %v637 = vsel %vm358, %v533, 0.0
    %v638 = vadd.f32 %v636, %v637
    %v639 = vsel %vm358, %v534, 0.0
    %v640 = vadd.f32 %v638, %v639
    %v641 = vsel %vm358, %v535, 0.0
    %v642 = vadd.f32 %v640, %v641
    %v643 = vsel %vm358, %v536, 0.0
    %v644 = vadd.f32 %v642, %v643
    %v645 = vsel %vm358, %v537, 0.0
    %v646 = vadd.f32 %v644, %v645
    %v647 = vsel %vm358, %v538, 0.0
    %v648 = vadd.f32 %v646, %v647
    %v649 = vsel %vm358, %v539, 0.0
    %v650 = vadd.f32 %v648, %v649
    %v651 = vsel %vm358, %v540, 0.0
    %v652 = vadd.f32 %v650, %v651
    %v653 = vsel %vm358, %v541, 0.0
    %v654 = vadd.f32 %v652, %v653
    %v655 = vsel %vm358, %v542, 0.0
    %v656 = vadd.f32 %v654, %v655
    %v657 = vsel %vm358, %v543, 0.0
    %v658 = vadd.f32 %v656, %v657
    %v659 = vsel %vm358, %v544, 0.0
    %v660 = vadd.f32 %v658, %v659
    %v661 = vsel %vm358, %v545, 0.0
    %v662 = vadd.f32 %v660, %v661
    %v663 = vsel %vm358, %v546, 0.0
    %v664 = vadd.f32 %v662, %v663
    %v665 = vsel %vm358, %v547, 0.0
    %v666 = vadd.f32 %v664, %v665
    %v667 = vsel %vm358, %v548, 0.0
    %v668 = vadd.f32 %v666, %v667
    %v669 = vsel %vm358, %v549, 0.0
    %v670 = vadd.f32 %v668, %v669
    %v671 = vsel %vm358, %v550, 0.0
    %v672 = vadd.f32 %v670, %v671
    %v673 = vsel %vm358, %v551, 0.0
    %v674 = vadd.f32 %v672, %v673
    %v675 = vsel %vm358, %v552, 0.0
    %v676 = vadd.f32 %v674, %v675
    %v677 = vsel %vm358, %v553, 0.0
    %v678 = vadd.f32 %v676, %v677
    %v679 = vsel %vm358, %v554, 0.0
    %v680 = vadd.f32 %v678, %v679
    %v681 = vsel %vm358, %v555, 0.0
    %v682 = vadd.f32 %v680, %v681
    %v683 = vrot.slane %v682, 4
    %v684 = vadd.f32 %v682, %v683
    %v685 = vrot.slane %v684, 2
    %v686 = vadd.f32 %v684, %v685
    %v687 = vrot.slane %v686, 1
    %v688 = vadd.f32 %v686, %v687
    %v689 = vmul.f32 %v491, 0.001953125
    %v690 = vmul.f32 %v688, 0.001953125
    %v691 = vmul.f32 %v689, %v689
    %v692 = vsub.f32 %v690, %v691
    %v693 = vld [vmem:[%s5] sm:$0x1]
    %v694 = vsub.f32 %v294, %v689
    %v695 = vsub.f32 %v295, %v689
    %v696 = vsub.f32 %v296, %v689
    %v697 = vsub.f32 %v297, %v689
    %v698 = vsub.f32 %v298, %v689
    %v699 = vsub.f32 %v299, %v689
    %v700 = vsub.f32 %v300, %v689
    %v701 = vsub.f32 %v301, %v689
    %v702 = vsub.f32 %v302, %v689
    %v703 = vsub.f32 %v303, %v689
    %v704 = vsub.f32 %v304, %v689
    %v705 = vsub.f32 %v305, %v689
    %v706 = vsub.f32 %v306, %v689
    %v707 = vsub.f32 %v307, %v689
    %v708 = vsub.f32 %v308, %v689
    %v709 = vsub.f32 %v309, %v689
    %v710 = vsub.f32 %v310, %v689
    %v711 = vsub.f32 %v311, %v689
    %v712 = vsub.f32 %v312, %v689
    %v713 = vsub.f32 %v313, %v689
    %v714 = vsub.f32 %v314, %v689
    %v715 = vsub.f32 %v315, %v689
    %v716 = vsub.f32 %v316, %v689
    %v717 = vsub.f32 %v317, %v689
    %v718 = vsub.f32 %v318, %v689
    %v719 = vsub.f32 %v319, %v689
    %v720 = vsub.f32 %v320, %v689
    %v721 = vsub.f32 %v321, %v689
    %v722 = vsub.f32 %v322, %v689
    %v723 = vsub.f32 %v323, %v689
    %v724 = vsub.f32 %v324, %v689
    %v725 = vsub.f32 %v325, %v689
    %v726 = vsub.f32 %v326, %v689
    %v727 = vsub.f32 %v327, %v689
    %v728 = vsub.f32 %v328, %v689
    %v729 = vsub.f32 %v329, %v689
    %v730 = vsub.f32 %v330, %v689
    %v731 = vsub.f32 %v331, %v689
    %v732 = vsub.f32 %v332, %v689
    %v733 = vsub.f32 %v333, %v689
    %v734 = vsub.f32 %v334, %v689
    %v735 = vsub.f32 %v335, %v689
    %v736 = vsub.f32 %v336, %v689
    %v737 = vsub.f32 %v337, %v689
    %v738 = vsub.f32 %v338, %v689
    %v739 = vsub.f32 %v339, %v689
    %v740 = vsub.f32 %v340, %v689
    %v741 = vsub.f32 %v341, %v689
    %v742 = vsub.f32 %v342, %v689
    %v743 = vsub.f32 %v343, %v689
    %v744 = vsub.f32 %v344, %v689
    %v745 = vsub.f32 %v345, %v689
    %v746 = vsub.f32 %v346, %v689
    %v747 = vsub.f32 %v347, %v689
    %v748 = vsub.f32 %v348, %v689
    %v749 = vsub.f32 %v349, %v689
    %v750 = vsub.f32 %v350, %v689
    %v751 = vsub.f32 %v351, %v689
    %v752 = vsub.f32 %v352, %v689
    %v753 = vsub.f32 %v353, %v689
    %v754 = vsub.f32 %v354, %v689
    %v755 = vsub.f32 %v355, %v689
    %v756 = vsub.f32 %v356, %v689
    %v757 = vsub.f32 %v357, %v689
    %v758 = vadd.f32 %v692, 1e-05
    %v759 = vrsqrt.pop %v758
    %v760 = vmul.f32 %v759, %v758
    %v761 = vmul.f32 %v760, %v759
    %v762 = vmul.f32 0.5, %v761
    %v763 = vsub.f32 1.5, %v762
    %v764 = vmul.f32 %v759, %v763
    %vm765 = vweird.f32 %v758
    %vm766 = vweird.f32 %v759
    %vm767 = vmor %vm765, %vm766
    %v768 = vsel %vm767, %v759, %v764
    %v769 = vmul.f32 %v694, %v768
    %v770 = vmul.f32 %v695, %v768
    %v771 = vmul.f32 %v696, %v768
    %v772 = vmul.f32 %v697, %v768
    %v773 = vmul.f32 %v698, %v768
    %v774 = vmul.f32 %v699, %v768
    %v775 = vmul.f32 %v700, %v768
    %v776 = vmul.f32 %v701, %v768
    %v777 = vmul.f32 %v702, %v768
    %v778 = vmul.f32 %v703, %v768
    %v779 = vmul.f32 %v704, %v768
    %v780 = vmul.f32 %v705, %v768
    %v781 = vmul.f32 %v706, %v768
    %v782 = vmul.f32 %v707, %v768
    %v783 = vmul.f32 %v708, %v768
    %v784 = vmul.f32 %v709, %v768
    %v785 = vmul.f32 %v710, %v768
    %v786 = vmul.f32 %v711, %v768
    %v787 = vmul.f32 %v712, %v768
    %v788 = vmul.f32 %v713, %v768
    %v789 = vmul.f32 %v714, %v768
    %v790 = vmul.f32 %v715, %v768
    %v791 = vmul.f32 %v716, %v768
    %v792 = vmul.f32 %v717, %v768
    %v793 = vmul.f32 %v718, %v768
    %v794 = vmul.f32 %v719, %v768
    %v795 = vmul.f32 %v720, %v768
    %v796 = vmul.f32 %v721, %v768
    %v797 = vmul.f32 %v722, %v768
    %v798 = vmul.f32 %v723, %v768
    %v799 = vmul.f32 %v724, %v768
    %v800 = vmul.f32 %v725, %v768
    %v801 = vmul.f32 %v726, %v768
    %v802 = vmul.f32 %v727, %v768
    %v803 = vmul.f32 %v728, %v768
    %v804 = vmul.f32 %v729, %v768
    %v805 = vmul.f32 %v730, %v768
    %v806 = vmul.f32 %v731, %v768
    %v807 = vmul.f32 %v732, %v768
    %v808 = vmul.f32 %v733, %v768
    %v809 = vmul.f32 %v734, %v768
    %v810 = vmul.f32 %v735, %v768
    %v811 = vmul.f32 %v736, %v768
    %v812 = vmul.f32 %v737, %v768
    %v813 = vmul.f32 %v738, %v768
    %v814 = vmul.f32 %v739, %v768
    %v815 = vmul.f32 %v740, %v768
    %v816 = vmul.f32 %v741, %v768
    %v817 = vmul.f32 %v742, %v768
    %v818 = vmul.f32 %v743, %v768
    %v819 = vmul.f32 %v744, %v768
    %v820 = vmul.f32 %v745, %v768
    %v821 = vmul.f32 %v746, %v768
    %v822 = vmul.f32 %v747, %v768
    %v823 = vmul.f32 %v748, %v768
    %v824 = vmul.f32 %v749, %v768
    %v825 = vmul.f32 %v750, %v768
    %v826 = vmul.f32 %v751, %v768
    %v827 = vmul.f32 %v752, %v768
    %v828 = vmul.f32 %v753, %v768
    %v829 = vmul.f32 %v754, %v768
    %v830 = vmul.f32 %v755, %v768
    %v831 = vmul.f32 %v756, %v768
    %v832 = vmul.f32 %v757, %v768
    %v834 = vperm.slane %v693, 0
    %v836 = vmul.f32 %v834, %v769
    %v837 = vmul.f32 %v834, %v770
    %v838 = vmul.f32 %v834, %v771
    %v839 = vmul.f32 %v834, %v772
    %v840 = vmul.f32 %v834, %v773
    %v841 = vmul.f32 %v834, %v774
    %v842 = vmul.f32 %v834, %v775
    %v843 = vmul.f32 %v834, %v776
    %v844 = vmul.f32 %v834, %v777
    %v845 = vmul.f32 %v834, %v778
    %v846 = vmul.f32 %v834, %v779
    %v847 = vmul.f32 %v834, %v780
    %v848 = vmul.f32 %v834, %v781
    %v849 = vmul.f32 %v834, %v782
    %v850 = vmul.f32 %v834, %v783
    %v851 = vmul.f32 %v834, %v784
    %v852 = vmul.f32 %v834, %v785
    %v853 = vmul.f32 %v834, %v786
    %v854 = vmul.f32 %v834, %v787
    %v855 = vmul.f32 %v834, %v788
    %v856 = vmul.f32 %v834, %v789
    %v857 = vmul.f32 %v834, %v790
    %v858 = vmul.f32 %v834, %v791
    %v859 = vmul.f32 %v834, %v792
    %v860 = vmul.f32 %v834, %v793
    %v861 = vmul.f32 %v834, %v794
    %v862 = vmul.f32 %v834, %v795
    %v863 = vmul.f32 %v834, %v796
    %v864 = vmul.f32 %v834, %v797
    %v865 = vmul.f32 %v834, %v798
    %v866 = vmul.f32 %v834, %v799
    %v867 = vmul.f32 %v834, %v800
    %v868 = vmul.f32 %v834, %v801
    %v869 = vmul.f32 %v834, %v802
    %v870 = vmul.f32 %v834, %v803
    %v871 = vmul.f32 %v834, %v804
    %v872 = vmul.f32 %v834, %v805
    %v873 = vmul.f32 %v834, %v806
    %v874 = vmul.f32 %v834, %v807
    %v875 = vmul.f32 %v834, %v808
    %v876 = vmul.f32 %v834, %v809
    %v877 = vmul.f32 %v834, %v810
    %v878 = vmul.f32 %v834, %v811
    %v879 = vmul.f32 %v834, %v812
    %v880 = vmul.f32 %v834, %v813
    %v881 = vmul.f32 %v834, %v814
    %v882 = vmul.f32 %v834, %v815
    %v883 = vmul.f32 %v834, %v816
    %v884 = vmul.f32 %v834, %v817
    %v885 = vmul.f32 %v834, %v818
    %v886 = vmul.f32 %v834, %v819
    %v887 = vmul.f32 %v834, %v820
    %v888 = vmul.f32 %v834, %v821
    %v889 = vmul.f32 %v834, %v822
    %v890 = vmul.f32 %v834, %v823
    %v891 = vmul.f32 %v834, %v824
    %v892 = vmul.f32 %v834, %v825
    %v893 = vmul.f32 %v834, %v826
    %v894 = vmul.f32 %v834, %v827
    %v895 = vmul.f32 %v834, %v828
    %v896 = vmul.f32 %v834, %v829
    %v897 = vmul.f32 %v834, %v830
    %v898 = vmul.f32 %v834, %v831
    %v899 = vmul.f32 %v834, %v832
    %v900 = vld [vmem:[%s6] sm:$0x1]
    %v902 = vperm.slane %v900, 0
    %v904 = vadd.f32 %v836, %v902
    %v905 = vadd.f32 %v837, %v902
    %v906 = vadd.f32 %v838, %v902
    %v907 = vadd.f32 %v839, %v902
    %v908 = vadd.f32 %v840, %v902
    %v909 = vadd.f32 %v841, %v902
    %v910 = vadd.f32 %v842, %v902
    %v911 = vadd.f32 %v843, %v902
    %v912 = vadd.f32 %v844, %v902
    %v913 = vadd.f32 %v845, %v902
    %v914 = vadd.f32 %v846, %v902
    %v915 = vadd.f32 %v847, %v902
    %v916 = vadd.f32 %v848, %v902
    %v917 = vadd.f32 %v849, %v902
    %v918 = vadd.f32 %v850, %v902
    %v919 = vadd.f32 %v851, %v902
    %v920 = vadd.f32 %v852, %v902
    %v921 = vadd.f32 %v853, %v902
    %v922 = vadd.f32 %v854, %v902
    %v923 = vadd.f32 %v855, %v902
    %v924 = vadd.f32 %v856, %v902
    %v925 = vadd.f32 %v857, %v902
    %v926 = vadd.f32 %v858, %v902
    %v927 = vadd.f32 %v859, %v902
    %v928 = vadd.f32 %v860, %v902
    %v929 = vadd.f32 %v861, %v902
    %v930 = vadd.f32 %v862, %v902
    %v931 = vadd.f32 %v863, %v902
    %v932 = vadd.f32 %v864, %v902
    %v933 = vadd.f32 %v865, %v902
    %v934 = vadd.f32 %v866, %v902
    %v935 = vadd.f32 %v867, %v902
    %v936 = vadd.f32 %v868, %v902
    %v937 = vadd.f32 %v869, %v902
    %v938 = vadd.f32 %v870, %v902
    %v939 = vadd.f32 %v871, %v902
    %v940 = vadd.f32 %v872, %v902
    %v941 = vadd.f32 %v873, %v902
    %v942 = vadd.f32 %v874, %v902
    %v943 = vadd.f32 %v875, %v902
    %v944 = vadd.f32 %v876, %v902
    %v945 = vadd.f32 %v877, %v902
    %v946 = vadd.f32 %v878, %v902
    %v947 = vadd.f32 %v879, %v902
    %v948 = vadd.f32 %v880, %v902
    %v949 = vadd.f32 %v881, %v902
    %v950 = vadd.f32 %v882, %v902
    %v951 = vadd.f32 %v883, %v902
    %v952 = vadd.f32 %v884, %v902
    %v953 = vadd.f32 %v885, %v902
    %v954 = vadd.f32 %v886, %v902
    %v955 = vadd.f32 %v887, %v902
    %v956 = vadd.f32 %v888, %v902
    %v957 = vadd.f32 %v889, %v902
    %v958 = vadd.f32 %v890, %v902
    %v959 = vadd.f32 %v891, %v902
    %v960 = vadd.f32 %v892, %v902
    %v961 = vadd.f32 %v893, %v902
    %v962 = vadd.f32 %v894, %v902
    %v963 = vadd.f32 %v895, %v902
    %v964 = vadd.f32 %v896, %v902
    %v965 = vadd.f32 %v897, %v902
    %v966 = vadd.f32 %v898, %v902
    %v967 = vadd.f32 %v899, %v902
    %v968 = vmax.f32 %v904, 0.0
    %v969 = vmax.f32 %v905, 0.0
    %v970 = vmax.f32 %v906, 0.0
    %v971 = vmax.f32 %v907, 0.0
    %v972 = vmax.f32 %v908, 0.0
    %v973 = vmax.f32 %v909, 0.0
    %v974 = vmax.f32 %v910, 0.0
    %v975 = vmax.f32 %v911, 0.0
    %v976 = vmax.f32 %v912, 0.0
    %v977 = vmax.f32 %v913, 0.0
    %v978 = vmax.f32 %v914, 0.0
    %v979 = vmax.f32 %v915, 0.0
    %v980 = vmax.f32 %v916, 0.0
    %v981 = vmax.f32 %v917, 0.0
    %v982 = vmax.f32 %v918, 0.0
    %v983 = vmax.f32 %v919, 0.0
    %v984 = vmax.f32 %v920, 0.0
    %v985 = vmax.f32 %v921, 0.0
    %v986 = vmax.f32 %v922, 0.0
    %v987 = vmax.f32 %v923, 0.0
    %v988 = vmax.f32 %v924, 0.0
    %v989 = vmax.f32 %v925, 0.0
    %v990 = vmax.f32 %v926, 0.0
    %v991 = vmax.f32 %v927, 0.0
    %v992 = vmax.f32 %v928, 0.0
    %v993 = vmax.f32 %v929, 0.0
    %v994 = vmax.f32 %v930, 0.0
    %v995 = vmax.f32 %v931, 0.0
    %v996 = vmax.f32 %v932, 0.0
    %v997 = vmax.f32 %v933, 0.0
    %v998 = vmax.f32 %v934, 0.0
    %v999 = vmax.f32 %v935, 0.0
    %v1000 = vmax.f32 %v936, 0.0
    %v1001 = vmax.f32 %v937, 0.0
    %v1002 = vmax.f32 %v938, 0.0
    %v1003 = vmax.f32 %v939, 0.0
    %v1004 = vmax.f32 %v940, 0.0
    %v1005 = vmax.f32 %v941, 0.0
    %v1006 = vmax.f32 %v942, 0.0
    %v1007 = vmax.f32 %v943, 0.0
    %v1008 = vmax.f32 %v944, 0.0
    %v1009 = vmax.f32 %v945, 0.0
    %v1010 = vmax.f32 %v946, 0.0
    %v1011 = vmax.f32 %v947, 0.0
    %v1012 = vmax.f32 %v948, 0.0
    %v1013 = vmax.f32 %v949, 0.0
    %v1014 = vmax.f32 %v950, 0.0
    %v1015 = vmax.f32 %v951, 0.0
    %v1016 = vmax.f32 %v952, 0.0
    %v1017 = vmax.f32 %v953, 0.0
    %v1018 = vmax.f32 %v954, 0.0
    %v1019 = vmax.f32 %v955, 0.0
    %v1020 = vmax.f32 %v956, 0.0
    %v1021 = vmax.f32 %v957, 0.0
    %v1022 = vmax.f32 %v958, 0.0
    %v1023 = vmax.f32 %v959, 0.0
    %v1024 = vmax.f32 %v960, 0.0
    %v1025 = vmax.f32 %v961, 0.0
    %v1026 = vmax.f32 %v962, 0.0
    %v1027 = vmax.f32 %v963, 0.0
    %v1028 = vmax.f32 %v964, 0.0
    %v1029 = vmax.f32 %v965, 0.0
    %v1030 = vmax.f32 %v966, 0.0
    %v1031 = vmax.f32 %v967, 0.0
    %1032 = vst.msk [vmem:[#allocation2] sm:$0xff] %vm358, 0.0
    %1033 = vst.msk [vmem:[#allocation2 + $0x8] sm:$0xff] %vm358, 0.0
    %vm1034 = vcmask 254976
    %1035 = vst.msk [vmem:[#allocation2 + $0x10] sm:$0x3] %vm1034, 0.0
    %1036 = vst.msk [vmem:[#allocation2 + $0x1b0] sm:$0xff] %vm358, 0.0
    %1037 = vst.msk [vmem:[#allocation2 + $0x1b8] sm:$0xff] %vm358, 0.0
    %1038 = vst.msk [vmem:[#allocation2 + $0x1c0] sm:$0x3] %vm1034, 0.0
    %s1039 = scalar_lea.vmem [#allocation2], 408
    %1040 = vst.msk [vmem:[%s1039] sm:$0xff] %vm358, 0.0
    %1041 = vst.msk [vmem:[%s1039 + $0x8] sm:$0xff] %vm358, 0.0
    %1042 = vst.msk [vmem:[%s1039 + $0x10] sm:$0x3] %vm1034, 0.0
    %1043 = vst.msk [vmem:[%s1039 + $0x1b0] sm:$0xff] %vm358, 0.0
    %1044 = vst.msk [vmem:[%s1039 + $0x1b8] sm:$0xff] %vm358, 0.0
    %1045 = vst.msk [vmem:[%s1039 + $0x1c0] sm:$0x3] %vm1034, 0.0
    %s1046 = scalar_lea.vmem [#allocation2], 24
    %vm1047 = vcmask 253952
    %1048 = vst.msk [vmem:[%s1046] sm:$0x1] %vm1047, 0.0
    %1049 = vst.msk [vmem:[%s1046 + $0x18] sm:$0x1] %vm1047, 0.0
    %1050 = vst.msk [vmem:[%s1046 + $0x30] sm:$0x1] %vm1047, 0.0
    %1051 = vst.msk [vmem:[%s1046 + $0x48] sm:$0x1] %vm1047, 0.0
    %1052 = vst.msk [vmem:[%s1046 + $0x60] sm:$0x1] %vm1047, 0.0
    %1053 = vst.msk [vmem:[%s1046 + $0x78] sm:$0x1] %vm1047, 0.0
    %1054 = vst.msk [vmem:[%s1046 + $0x90] sm:$0x1] %vm1047, 0.0
    %1055 = vst.msk [vmem:[%s1046 + $0xa8] sm:$0x1] %vm1047, 0.0
    %1056 = vst.msk [vmem:[%s1046 + $0xc0] sm:$0x1] %vm1047, 0.0
    %1057 = vst.msk [vmem:[%s1046 + $0xd8] sm:$0x1] %vm1047, 0.0
    %1058 = vst.msk [vmem:[%s1046 + $0xf0] sm:$0x1] %vm1047, 0.0
    %1059 = vst.msk [vmem:[%s1046 + $0x108] sm:$0x1] %vm1047, 0.0
    %1060 = vst.msk [vmem:[%s1046 + $0x120] sm:$0x1] %vm1047, 0.0
    %1061 = vst.msk [vmem:[%s1046 + $0x138] sm:$0x1] %vm1047, 0.0
    %1062 = vst.msk [vmem:[%s1046 + $0x150] sm:$0x1] %vm1047, 0.0
    %1063 = vst.msk [vmem:[%s1046 + $0x168] sm:$0x1] %vm1047, 0.0
    %1064 = vst.msk [vmem:[%s1046 + $0x1b0] sm:$0x1] %vm1047, 0.0
    %1065 = vst.msk [vmem:[%s1046 + $0x1c8] sm:$0x1] %vm1047, 0.0
    %1066 = vst.msk [vmem:[%s1046 + $0x1e0] sm:$0x1] %vm1047, 0.0
    %1067 = vst.msk [vmem:[%s1046 + $0x1f8] sm:$0x1] %vm1047, 0.0
    %1068 = vst.msk [vmem:[%s1046 + $0x210] sm:$0x1] %vm1047, 0.0
    %1069 = vst.msk [vmem:[%s1046 + $0x228] sm:$0x1] %vm1047, 0.0
    %1070 = vst.msk [vmem:[%s1046 + $0x240] sm:$0x1] %vm1047, 0.0
    %1071 = vst.msk [vmem:[%s1046 + $0x258] sm:$0x1] %vm1047, 0.0
    %1072 = vst.msk [vmem:[%s1046 + $0x270] sm:$0x1] %vm1047, 0.0
    %1073 = vst.msk [vmem:[%s1046 + $0x288] sm:$0x1] %vm1047, 0.0
    %1074 = vst.msk [vmem:[%s1046 + $0x2a0] sm:$0x1] %vm1047, 0.0
    %1075 = vst.msk [vmem:[%s1046 + $0x2b8] sm:$0x1] %vm1047, 0.0
    %1076 = vst.msk [vmem:[%s1046 + $0x2d0] sm:$0x1] %vm1047, 0.0
    %1077 = vst.msk [vmem:[%s1046 + $0x2e8] sm:$0x1] %vm1047, 0.0
    %1078 = vst.msk [vmem:[%s1046 + $0x300] sm:$0x1] %vm1047, 0.0
    %1079 = vst.msk [vmem:[%s1046 + $0x318] sm:$0x1] %vm1047, 0.0
    %1080 = vst.msk [vmem:[%s1046 + $0x11] sm:$0x1] %vm1047, 0.0
    %1081 = vst.msk [vmem:[%s1046 + $0x29] sm:$0x1] %vm1047, 0.0
    %1082 = vst.msk [vmem:[%s1046 + $0x41] sm:$0x1] %vm1047, 0.0
    %1083 = vst.msk [vmem:[%s1046 + $0x59] sm:$0x1] %vm1047, 0.0
    %1084 = vst.msk [vmem:[%s1046 + $0x71] sm:$0x1] %vm1047, 0.0
    %1085 = vst.msk [vmem:[%s1046 + $0x89] sm:$0x1] %vm1047, 0.0
    %1086 = vst.msk [vmem:[%s1046 + $0xa1] sm:$0x1] %vm1047, 0.0
    %1087 = vst.msk [vmem:[%s1046 + $0xb9] sm:$0x1] %vm1047, 0.0
    %1088 = vst.msk [vmem:[%s1046 + $0xd1] sm:$0x1] %vm1047, 0.0
    %1089 = vst.msk [vmem:[%s1046 + $0xe9] sm:$0x1] %vm1047, 0.0
    %1090 = vst.msk [vmem:[%s1046 + $0x101] sm:$0x1] %vm1047, 0.0
    %1091 = vst.msk [vmem:[%s1046 + $0x119] sm:$0x1] %vm1047, 0.0
    %1092 = vst.msk [vmem:[%s1046 + $0x131] sm:$0x1] %vm1047, 0.0
    %1093 = vst.msk [vmem:[%s1046 + $0x149] sm:$0x1] %vm1047, 0.0
    %1094 = vst.msk [vmem:[%s1046 + $0x161] sm:$0x1] %vm1047, 0.0
    %1095 = vst.msk [vmem:[%s1046 + $0x179] sm:$0x1] %vm1047, 0.0
    %1096 = vst.msk [vmem:[%s1046 + $0x1c1] sm:$0x1] %vm1047, 0.0
    %1097 = vst.msk [vmem:[%s1046 + $0x1d9] sm:$0x1] %vm1047, 0.0
    %1098 = vst.msk [vmem:[%s1046 + $0x1f1] sm:$0x1] %vm1047, 0.0
    %1099 = vst.msk [vmem:[%s1046 + $0x209] sm:$0x1] %vm1047, 0.0
    %1100 = vst.msk [vmem:[%s1046 + $0x221] sm:$0x1] %vm1047, 0.0
    %1101 = vst.msk [vmem:[%s1046 + $0x239] sm:$0x1] %vm1047, 0.0
    %1102 = vst.msk [vmem:[%s1046 + $0x251] sm:$0x1] %vm1047, 0.0
    %1103 = vst.msk [vmem:[%s1046 + $0x269] sm:$0x1] %vm1047, 0.0
    %1104 = vst.msk [vmem:[%s1046 + $0x281] sm:$0x1] %vm1047, 0.0
    %1105 = vst.msk [vmem:[%s1046 + $0x299] sm:$0x1] %vm1047, 0.0
    %1106 = vst.msk [vmem:[%s1046 + $0x2b1] sm:$0x1] %vm1047, 0.0
    %1107 = vst.msk [vmem:[%s1046 + $0x2c9] sm:$0x1] %vm1047, 0.0
    %1108 = vst.msk [vmem:[%s1046 + $0x2e1] sm:$0x1] %vm1047, 0.0
    %1109 = vst.msk [vmem:[%s1046 + $0x2f9] sm:$0x1] %vm1047, 0.0
    %1110 = vst.msk [vmem:[%s1046 + $0x311] sm:$0x1] %vm1047, 0.0
    %1111 = vst.msk [vmem:[%s1046 + $0x329] sm:$0x1] %vm1047, 0.0
    %1112 = vst.msk [vmem:[%s1046 + $0x1] sm:$0xff] %vm358, %v968
    %1113 = vst.msk [vmem:[%s1046 + $0x9] sm:$0xff] %vm358, %v969
    %1114 = vst.msk [vmem:[%s1046 + $0x19] sm:$0xff] %vm358, %v970
    %1115 = vst.msk [vmem:[%s1046 + $0x21] sm:$0xff] %vm358, %v971
    %1116 = vst.msk [vmem:[%s1046 + $0x31] sm:$0xff] %vm358, %v972
    %1117 = vst.msk [vmem:[%s1046 + $0x39] sm:$0xff] %vm358, %v973
    %1118 = vst.msk [vmem:[%s1046 + $0x49] sm:$0xff] %vm358, %v974
    %1119 = vst.msk [vmem:[%s1046 + $0x51] sm:$0xff] %vm358, %v975
    %1120 = vst.msk [vmem:[%s1046 + $0x61] sm:$0xff] %vm358, %v976
    %1121 = vst.msk [vmem:[%s1046 + $0x69] sm:$0xff] %vm358, %v977
    %1122 = vst.msk [vmem:[%s1046 + $0x79] sm:$0xff] %vm358, %v978
    %1123 = vst.msk [vmem:[%s1046 + $0x81] sm:$0xff] %vm358, %v979
    %1124 = vst.msk [vmem:[%s1046 + $0x91] sm:$0xff] %vm358, %v980
    %1125 = vst.msk [vmem:[%s1046 + $0x99] sm:$0xff] %vm358, %v981
    %1126 = vst.msk [vmem:[%s1046 + $0xa9] sm:$0xff] %vm358, %v982
    %1127 = vst.msk [vmem:[%s1046 + $0xb1] sm:$0xff] %vm358, %v983
    %1128 = vst.msk [vmem:[%s1046 + $0xc1] sm:$0xff] %vm358, %v984
    %1129 = vst.msk [vmem:[%s1046 + $0xc9] sm:$0xff] %vm358, %v985
    %1130 = vst.msk [vmem:[%s1046 + $0xd9] sm:$0xff] %vm358, %v986
    %1131 = vst.msk [vmem:[%s1046 + $0xe1] sm:$0xff] %vm358, %v987
    %1132 = vst.msk [vmem:[%s1046 + $0xf1] sm:$0xff] %vm358, %v988
    %1133 = vst.msk [vmem:[%s1046 + $0xf9] sm:$0xff] %vm358, %v989
    %1134 = vst.msk [vmem:[%s1046 + $0x109] sm:$0xff] %vm358, %v990
    %1135 = vst.msk [vmem:[%s1046 + $0x111] sm:$0xff] %vm358, %v991
    %1136 = vst.msk [vmem:[%s1046 + $0x121] sm:$0xff] %vm358, %v992
    %1137 = vst.msk [vmem:[%s1046 + $0x129] sm:$0xff] %vm358, %v993
    %1138 = vst.msk [vmem:[%s1046 + $0x139] sm:$0xff] %vm358, %v994
    %1139 = vst.msk [vmem:[%s1046 + $0x141] sm:$0xff] %vm358, %v995
    %1140 = vst.msk [vmem:[%s1046 + $0x151] sm:$0xff] %vm358, %v996
    %1141 = vst.msk [vmem:[%s1046 + $0x159] sm:$0xff] %vm358, %v997
    %1142 = vst.msk [vmem:[%s1046 + $0x169] sm:$0xff] %vm358, %v998
    %1143 = vst.msk [vmem:[%s1046 + $0x171] sm:$0xff] %vm358, %v999
    %1144 = vst.msk [vmem:[%s1046 + $0x1b1] sm:$0xff] %vm358, %v1000
    %1145 = vst.msk [vmem:[%s1046 + $0x1b9] sm:$0xff] %vm358, %v1001
    %1146 = vst.msk [vmem:[%s1046 + $0x1c9] sm:$0xff] %vm358, %v1002
    %1147 = vst.msk [vmem:[%s1046 + $0x1d1] sm:$0xff] %vm358, %v1003
    %1148 = vst.msk [vmem:[%s1046 + $0x1e1] sm:$0xff] %vm358, %v1004
    %1149 = vst.msk [vmem:[%s1046 + $0x1e9] sm:$0xff] %vm358, %v1005
    %1150 = vst.msk [vmem:[%s1046 + $0x1f9] sm:$0xff] %vm358, %v1006
    %1151 = vst.msk [vmem:[%s1046 + $0x201] sm:$0xff] %vm358, %v1007
    %1152 = vst.msk [vmem:[%s1046 + $0x211] sm:$0xff] %vm358, %v1008
    %1153 = vst.msk [vmem:[%s1046 + $0x219] sm:$0xff] %vm358, %v1009
    %1154 = vst.msk [vmem:[%s1046 + $0x229] sm:$0xff] %vm358, %v1010
    %1155 = vst.msk [vmem:[%s1046 + $0x231] sm:$0xff] %vm358, %v1011
    %1156 = vst.msk [vmem:[%s1046 + $0x241] sm:$0xff] %vm358, %v1012
    %1157 = vst.msk [vmem:[%s1046 + $0x249] sm:$0xff] %vm358, %v1013
    %1158 = vst.msk [vmem:[%s1046 + $0x259] sm:$0xff] %vm358, %v1014
    %1159 = vst.msk [vmem:[%s1046 + $0x261] sm:$0xff] %vm358, %v1015
    %1160 = vst.msk [vmem:[%s1046 + $0x271] sm:$0xff] %vm358, %v1016
    %1161 = vst.msk [vmem:[%s1046 + $0x279] sm:$0xff] %vm358, %v1017
    %1162 = vst.msk [vmem:[%s1046 + $0x289] sm:$0xff] %vm358, %v1018
    %1163 = vst.msk [vmem:[%s1046 + $0x291] sm:$0xff] %vm358, %v1019
    %1164 = vst.msk [vmem:[%s1046 + $0x2a1] sm:$0xff] %vm358, %v1020
    %1165 = vst.msk [vmem:[%s1046 + $0x2a9] sm:$0xff] %vm358, %v1021
    %1166 = vst.msk [vmem:[%s1046 + $0x2b9] sm:$0xff] %vm358, %v1022
    %1167 = vst.msk [vmem:[%s1046 + $0x2c1] sm:$0xff] %vm358, %v1023
    %1168 = vst.msk [vmem:[%s1046 + $0x2d1] sm:$0xff] %vm358, %v1024
    %1169 = vst.msk [vmem:[%s1046 + $0x2d9] sm:$0xff] %vm358, %v1025
    %1170 = vst.msk [vmem:[%s1046 + $0x2e9] sm:$0xff] %vm358, %v1026
    %1171 = vst.msk [vmem:[%s1046 + $0x2f1] sm:$0xff] %vm358, %v1027
    %1172 = vst.msk [vmem:[%s1046 + $0x301] sm:$0xff] %vm358, %v1028
    %1173 = vst.msk [vmem:[%s1046 + $0x309] sm:$0xff] %vm358, %v1029
    %1174 = vst.msk [vmem:[%s1046 + $0x319] sm:$0xff] %vm358, %v1030
    %1175 = vst.msk [vmem:[%s1046 + $0x321] sm:$0xff] %vm358, %v1031
    %v1176 = vld [vmem:[#allocation2] sm:$0xff]
    %v1177 = vld [vmem:[#allocation2 + $0x8] sm:$0xff]
    %v1178 = vld [vmem:[#allocation2 + $0x18] sm:$0xff]
    %v1179 = vld [vmem:[#allocation2 + $0x20] sm:$0xff]
    %v1180 = vld [vmem:[#allocation2 + $0x30] sm:$0xff]
    %v1181 = vld [vmem:[#allocation2 + $0x38] sm:$0xff]
    %v1182 = vld [vmem:[#allocation2 + $0x48] sm:$0xff]
    %v1183 = vld [vmem:[#allocation2 + $0x50] sm:$0xff]
    %v1184 = vld [vmem:[#allocation2 + $0x60] sm:$0xff]
    %v1185 = vld [vmem:[#allocation2 + $0x68] sm:$0xff]
    %v1186 = vld [vmem:[#allocation2 + $0x78] sm:$0xff]
    %v1187 = vld [vmem:[#allocation2 + $0x80] sm:$0xff]
    %v1188 = vld [vmem:[#allocation2 + $0x90] sm:$0xff]
    %v1189 = vld [vmem:[#allocation2 + $0x98] sm:$0xff]
    %v1190 = vld [vmem:[#allocation2 + $0xa8] sm:$0xff]
    %v1191 = vld [vmem:[#allocation2 + $0xb0] sm:$0xff]
    %v1192 = vld [vmem:[#allocation2 + $0xc0] sm:$0xff]
    %v1193 = vld [vmem:[#allocation2 + $0xc8] sm:$0xff]
    %v1194 = vld [vmem:[#allocation2 + $0xd8] sm:$0xff]
    %v1195 = vld [vmem:[#allocation2 + $0xe0] sm:$0xff]
    %v1196 = vld [vmem:[#allocation2 + $0xf0] sm:$0xff]
    %v1197 = vld [vmem:[#allocation2 + $0xf8] sm:$0xff]
    %v1198 = vld [vmem:[#allocation2 + $0x108] sm:$0xff]
    %v1199 = vld [vmem:[#allocation2 + $0x110] sm:$0xff]
    %v1200 = vld [vmem:[#allocation2 + $0x120] sm:$0xff]
    %v1201 = vld [vmem:[#allocation2 + $0x128] sm:$0xff]
    %v1202 = vld [vmem:[#allocation2 + $0x138] sm:$0xff]
    %v1203 = vld [vmem:[#allocation2 + $0x140] sm:$0xff]
    %v1204 = vld [vmem:[#allocation2 + $0x150] sm:$0xff]
    %v1205 = vld [vmem:[#allocation2 + $0x158] sm:$0xff]
    %v1206 = vld [vmem:[#allocation2 + $0x168] sm:$0xff]
    %v1207 = vld [vmem:[#allocation2 + $0x170] sm:$0xff]
    %v1208 = vld [vmem:[#allocation2 + $0x1b0] sm:$0xff]
    %v1209 = vld [vmem:[#allocation2 + $0x1b8] sm:$0xff]
    %v1210 = vld [vmem:[#allocation2 + $0x1c8] sm:$0xff]
    %v1211 = vld [vmem:[#allocation2 + $0x1d0] sm:$0xff]
    %v1212 = vld [vmem:[#allocation2 + $0x1e0] sm:$0xff]
    %v1213 = vld [vmem:[#allocation2 + $0x1e8] sm:$0xff]
    %v1214 = vld [vmem:[#allocation2 + $0x1f8] sm:$0xff]
    %v1215 = vld [vmem:[#allocation2 + $0x200] sm:$0xff]
    %v1216 = vld [vmem:[#allocation2 + $0x210] sm:$0xff]
    %v1217 = vld [vmem:[#allocation2 + $0x218] sm:$0xff]
    %v1218 = vld [vmem:[#allocation2 + $0x228] sm:$0xff]
    %v1219 = vld [vmem:[#allocation2 + $0x230] sm:$0xff]
    %v1220 = vld [vmem:[#allocation2 + $0x240] sm:$0xff]
    %v1221 = vld [vmem:[#allocation2 + $0x248] sm:$0xff]
    %v1222 = vld [vmem:[#allocation2 + $0x258] sm:$0xff]
    %v1223 = vld [vmem:[#allocation2 + $0x260] sm:$0xff]
    %v1224 = vld [vmem:[#allocation2 + $0x270] sm:$0xff]
    %v1225 = vld [vmem:[#allocation2 + $0x278] sm:$0xff]
    %v1226 = vld [vmem:[#allocation2 + $0x288] sm:$0xff]
    %v1227 = vld [vmem:[#allocation2 + $0x290] sm:$0xff]
    %v1228 = vld [vmem:[#allocation2 + $0x2a0] sm:$0xff]
    %v1229 = vld [vmem:[#allocation2 + $0x2a8] sm:$0xff]
    %v1230 = vld [vmem:[#allocation2 + $0x2b8] sm:$0xff]
    %v1231 = vld [vmem:[#allocation2 + $0x2c0] sm:$0xff]
    %v1232 = vld [vmem:[#allocation2 + $0x2d0] sm:$0xff]
    %v1233 = vld [vmem:[#allocation2 + $0x2d8] sm:$0xff]
    %v1234 = vld [vmem:[#allocation2 + $0x2e8] sm:$0xff]
    %v1235 = vld [vmem:[#allocation2 + $0x2f0] sm:$0xff]
    %v1236 = vld [vmem:[#allocation2 + $0x300] sm:$0xff]
    %v1237 = vld [vmem:[#allocation2 + $0x308] sm:$0xff]
    %v1238 = vld [vmem:[#allocation2 + $0x318] sm:$0xff]
    %v1239 = vld [vmem:[#allocation2 + $0x320] sm:$0xff]
    %v1240 = vld [vmem:[#allocation2 + $0x1] sm:$0xff]
    %v1241 = vld [vmem:[#allocation2 + $0x9] sm:$0xff]
    %v1242 = vld [vmem:[#allocation2 + $0x19] sm:$0xff]
    %v1243 = vld [vmem:[#allocation2 + $0x21] sm:$0xff]
    %v1244 = vld [vmem:[#allocation2 + $0x31] sm:$0xff]
    %v1245 = vld [vmem:[#allocation2 + $0x39] sm:$0xff]
    %v1246 = vld [vmem:[#allocation2 + $0x49] sm:$0xff]
    %v1247 = vld [vmem:[#allocation2 + $0x51] sm:$0xff]
    %v1248 = vld [vmem:[#allocation2 + $0x61] sm:$0xff]
    %v1249 = vld [vmem:[#allocation2 + $0x69] sm:$0xff]
    %v1250 = vld [vmem:[#allocation2 + $0x79] sm:$0xff]
    %v1251 = vld [vmem:[#allocation2 + $0x81] sm:$0xff]
    %v1252 = vld [vmem:[#allocation2 + $0x91] sm:$0xff]
    %v1253 = vld [vmem:[#allocation2 + $0x99] sm:$0xff]
    %v1254 = vld [vmem:[#allocation2 + $0xa9] sm:$0xff]
    %v1255 = vld [vmem:[#allocation2 + $0xb1] sm:$0xff]
    %v1256 = vld [vmem:[#allocation2 + $0xc1] sm:$0xff]
    %v1257 = vld [vmem:[#allocation2 + $0xc9] sm:$0xff]
    %v1258 = vld [vmem:[#allocation2 + $0xd9] sm:$0xff]
    %v1259 = vld [vmem:[#allocation2 + $0xe1] sm:$0xff]
    %v1260 = vld [vmem:[#allocation2 + $0xf1] sm:$0xff]
    %v1261 = vld [vmem:[#allocation2 + $0xf9] sm:$0xff]
    %v1262 = vld [vmem:[#allocation2 + $0x109] sm:$0xff]
    %v1263 = vld [vmem:[#allocation2 + $0x111] sm:$0xff]
    %v1264 = vld [vmem:[#allocation2 + $0x121] sm:$0xff]
    %v1265 = vld [vmem:[#allocation2 + $0x129] sm:$0xff]
    %v1266 = vld [vmem:[#allocation2 + $0x139] sm:$0xff]
    %v1267 = vld [vmem:[#allocation2 + $0x141] sm:$0xff]
    %v1268 = vld [vmem:[#allocation2 + $0x151] sm:$0xff]
    %v1269 = vld [vmem:[#allocation2 + $0x159] sm:$0xff]
    %v1270 = vld [vmem:[#allocation2 + $0x169] sm:$0xff]
    %v1271 = vld [vmem:[#allocation2 + $0x171] sm:$0xff]
    %v1272 = vld [vmem:[#allocation2 + $0x1b1] sm:$0xff]
    %v1273 = vld [vmem:[#allocation2 + $0x1b9] sm:$0xff]
    %v1274 = vld [vmem:[#allocation2 + $0x1c9] sm:$0xff]
    %v1275 = vld [vmem:[#allocation2 + $0x1d1] sm:$0xff]
    %v1276 = vld [vmem:[#allocation2 + $0x1e1] sm:$0xff]
    %v1277 = vld [vmem:[#allocation2 + $0x1e9] sm:$0xff]
    %v1278 = vld [vmem:[#allocation2 + $0x1f9] sm:$0xff]
    %v1279 = vld [vmem:[#allocation2 + $0x201] sm:$0xff]
    %v1280 = vld [vmem:[#allocation2 + $0x211] sm:$0xff]
    %v1281 = vld [vmem:[#allocation2 + $0x219] sm:$0xff]
    %v1282 = vld [vmem:[#allocation2 + $0x229] sm:$0xff]
    %v1283 = vld [vmem:[#allocation2 + $0x231] sm:$0xff]
    %v1284 = vld [vmem:[#allocation2 + $0x241] sm:$0xff]
    %v1285 = vld [vmem:[#allocation2 + $0x249] sm:$0xff]
    %v1286 = vld [vmem:[#allocation2 + $0x259] sm:$0xff]
    %v1287 = vld [vmem:[#allocation2 + $0x261] sm:$0xff]
    %v1288 = vld [vmem:[#allocation2 + $0x271] sm:$0xff]
    %v1289 = vld [vmem:[#allocation2 + $0x279] sm:$0xff]
    %v1290 = vld [vmem:[#allocation2 + $0x289] sm:$0xff]
    %v1291 = vld [vmem:[#allocation2 + $0x291] sm:$0xff]
    %v1292 = vld [vmem:[#allocation2 + $0x2a1] sm:$0xff]
    %v1293 = vld [vmem:[#allocation2 + $0x2a9] sm:$0xff]
    %v1294 = vld [vmem:[#allocation2 + $0x2b9] sm:$0xff]
    %v1295 = vld [vmem:[#allocation2 + $0x2c1] sm:$0xff]
    %v1296 = vld [vmem:[#allocation2 + $0x2d1] sm:$0xff]
    %v1297 = vld [vmem:[#allocation2 + $0x2d9] sm:$0xff]
    %v1298 = vld [vmem:[#allocation2 + $0x2e9] sm:$0xff]
    %v1299 = vld [vmem:[#allocation2 + $0x2f1] sm:$0xff]
    %v1300 = vld [vmem:[#allocation2 + $0x301] sm:$0xff]
    %v1301 = vld [vmem:[#allocation2 + $0x309] sm:$0xff]
    %v1302 = vld [vmem:[#allocation2 + $0x319] sm:$0xff]
    %v1303 = vld [vmem:[#allocation2 + $0x321] sm:$0xff]
    %v1304 = vld [vmem:[#allocation2 + $0x2] sm:$0xff]
    %v1305 = vld [vmem:[#allocation2 + $0xa] sm:$0xff]
    %v1306 = vld [vmem:[#allocation2 + $0x1a] sm:$0xff]
    %v1307 = vld [vmem:[#allocation2 + $0x22] sm:$0xff]
    %v1308 = vld [vmem:[#allocation2 + $0x32] sm:$0xff]
    %v1309 = vld [vmem:[#allocation2 + $0x3a] sm:$0xff]
    %v1310 = vld [vmem:[#allocation2 + $0x4a] sm:$0xff]
    %v1311 = vld [vmem:[#allocation2 + $0x52] sm:$0xff]
    %v1312 = vld [vmem:[#allocation2 + $0x62] sm:$0xff]
    %v1313 = vld [vmem:[#allocation2 + $0x6a] sm:$0xff]
    %v1314 = vld [vmem:[#allocation2 + $0x7a] sm:$0xff]
    %v1315 = vld [vmem:[#allocation2 + $0x82] sm:$0xff]
    %v1316 = vld [vmem:[#allocation2 + $0x92] sm:$0xff]
    %v1317 = vld [vmem:[#allocation2 + $0x9a] sm:$0xff]
    %v1318 = vld [vmem:[#allocation2 + $0xaa] sm:$0xff]
    %v1319 = vld [vmem:[#allocation2 + $0xb2] sm:$0xff]
    %v1320 = vld [vmem:[#allocation2 + $0xc2] sm:$0xff]
    %v1321 = vld [vmem:[#allocation2 + $0xca] sm:$0xff]
    %v1322 = vld [vmem:[#allocation2 + $0xda] sm:$0xff]
    %v1323 = vld [vmem:[#allocation2 + $0xe2] sm:$0xff]
    %v1324 = vld [vmem:[#allocation2 + $0xf2] sm:$0xff]
    %v1325 = vld [vmem:[#allocation2 + $0xfa] sm:$0xff]
    %v1326 = vld [vmem:[#allocation2 + $0x10a] sm:$0xff]
    %v1327 = vld [vmem:[#allocation2 + $0x112] sm:$0xff]
    %v1328 = vld [vmem:[#allocation2 + $0x122] sm:$0xff]
    %v1329 = vld [vmem:[#allocation2 + $0x12a] sm:$0xff]
    %v1330 = vld [vmem:[#allocation2 + $0x13a] sm:$0xff]
    %v1331 = vld [vmem:[#allocation2 + $0x142] sm:$0xff]
    %v1332 = vld [vmem:[#allocation2 + $0x152] sm:$0xff]
    %v1333 = vld [vmem:[#allocation2 + $0x15a] sm:$0xff]
    %v1334 = vld [vmem:[#allocation2 + $0x16a] sm:$0xff]
    %v1335 = vld [vmem:[#allocation2 + $0x172] sm:$0xff]
    %v1336 = vld [vmem:[#allocation2 + $0x1b2] sm:$0xff]
    %v1337 = vld [vmem:[#allocation2 + $0x1ba] sm:$0xff]
    %v1338 = vld [vmem:[#allocation2 + $0x1ca] sm:$0xff]
    %v1339 = vld [vmem:[#allocation2 + $0x1d2] sm:$0xff]
    %v1340 = vld [vmem:[#allocation2 + $0x1e2] sm:$0xff]
    %v1341 = vld [vmem:[#allocation2 + $0x1ea] sm:$0xff]
    %v1342 = vld [vmem:[#allocation2 + $0x1fa] sm:$0xff]
    %v1343 = vld [vmem:[#allocation2 + $0x202] sm:$0xff]
    %v1344 = vld [vmem:[#allocation2 + $0x212] sm:$0xff]
    %v1345 = vld [vmem:[#allocation2 + $0x21a] sm:$0xff]
    %v1346 = vld [vmem:[#allocation2 + $0x22a] sm:$0xff]
    %v1347 = vld [vmem:[#allocation2 + $0x232] sm:$0xff]
    %v1348 = vld [vmem:[#allocation2 + $0x242] sm:$0xff]
    %v1349 = vld [vmem:[#allocation2 + $0x24a] sm:$0xff]
    %v1350 = vld [vmem:[#allocation2 + $0x25a] sm:$0xff]
    %v1351 = vld [vmem:[#allocation2 + $0x262] sm:$0xff]
    %v1352 = vld [vmem:[#allocation2 + $0x272] sm:$0xff]
    %v1353 = vld [vmem:[#allocation2 + $0x27a] sm:$0xff]
    %v1354 = vld [vmem:[#allocation2 + $0x28a] sm:$0xff]
    %v1355 = vld [vmem:[#allocation2 + $0x292] sm:$0xff]
    %v1356 = vld [vmem:[#allocation2 + $0x2a2] sm:$0xff]
    %v1357 = vld [vmem:[#allocation2 + $0x2aa] sm:$0xff]
    %v1358 = vld [vmem:[#allocation2 + $0x2ba] sm:$0xff]
    %v1359 = vld [vmem:[#allocation2 + $0x2c2] sm:$0xff]
    %v1360 = vld [vmem:[#allocation2 + $0x2d2] sm:$0xff]
    %v1361 = vld [vmem:[#allocation2 + $0x2da] sm:$0xff]
    %v1362 = vld [vmem:[#allocation2 + $0x2ea] sm:$0xff]
    %v1363 = vld [vmem:[#allocation2 + $0x2f2] sm:$0xff]
    %v1364 = vld [vmem:[#allocation2 + $0x302] sm:$0xff]
    %v1365 = vld [vmem:[#allocation2 + $0x30a] sm:$0xff]
    %v1366 = vld [vmem:[#allocation2 + $0x31a] sm:$0xff]
    %v1367 = vld [vmem:[#allocation2 + $0x322] sm:$0xff]
    %v1368 = vld [vmem:[%s1046] sm:$0xff]
    %v1369 = vld [vmem:[%s1046 + $0x8] sm:$0xff]
    %v1370 = vld [vmem:[%s1046 + $0x18] sm:$0xff]
    %v1371 = vld [vmem:[%s1046 + $0x20] sm:$0xff]
    %v1372 = vld [vmem:[%s1046 + $0x30] sm:$0xff]
    %v1373 = vld [vmem:[%s1046 + $0x38] sm:$0xff]
    %v1374 = vld [vmem:[%s1046 + $0x48] sm:$0xff]
    %v1375 = vld [vmem:[%s1046 + $0x50] sm:$0xff]
    %v1376 = vld [vmem:[%s1046 + $0x60] sm:$0xff]
    %v1377 = vld [vmem:[%s1046 + $0x68] sm:$0xff]
    %v1378 = vld [vmem:[%s1046 + $0x78] sm:$0xff]
    %v1379 = vld [vmem:[%s1046 + $0x80] sm:$0xff]
    %v1380 = vld [vmem:[%s1046 + $0x90] sm:$0xff]
    %v1381 = vld [vmem:[%s1046 + $0x98] sm:$0xff]
    %v1382 = vld [vmem:[%s1046 + $0xa8] sm:$0xff]
    %v1383 = vld [vmem:[%s1046 + $0xb0] sm:$0xff]
    %v1384 = vld [vmem:[%s1046 + $0xc0] sm:$0xff]
    %v1385 = vld [vmem:[%s1046 + $0xc8] sm:$0xff]
    %v1386 = vld [vmem:[%s1046 + $0xd8] sm:$0xff]
    %v1387 = vld [vmem:[%s1046 + $0xe0] sm:$0xff]
    %v1388 = vld [vmem:[%s1046 + $0xf0] sm:$0xff]
    %v1389 = vld [vmem:[%s1046 + $0xf8] sm:$0xff]
    %v1390 = vld [vmem:[%s1046 + $0x108] sm:$0xff]
    %v1391 = vld [vmem:[%s1046 + $0x110] sm:$0xff]
    %v1392 = vld [vmem:[%s1046 + $0x120] sm:$0xff]
    %v1393 = vld [vmem:[%s1046 + $0x128] sm:$0xff]
    %v1394 = vld [vmem:[%s1046 + $0x138] sm:$0xff]
    %v1395 = vld [vmem:[%s1046 + $0x140] sm:$0xff]
    %v1396 = vld [vmem:[%s1046 + $0x150] sm:$0xff]
    %v1397 = vld [vmem:[%s1046 + $0x158] sm:$0xff]
    %v1398 = vld [vmem:[%s1046 + $0x168] sm:$0xff]
    %v1399 = vld [vmem:[%s1046 + $0x170] sm:$0xff]
    %v1400 = vld [vmem:[%s1046 + $0x1b0] sm:$0xff]
    %v1401 = vld [vmem:[%s1046 + $0x1b8] sm:$0xff]
    %v1402 = vld [vmem:[%s1046 + $0x1c8] sm:$0xff]
    %v1403 = vld [vmem:[%s1046 + $0x1d0] sm:$0xff]
    %v1404 = vld [vmem:[%s1046 + $0x1e0] sm:$0xff]
    %v1405 = vld [vmem:[%s1046 + $0x1e8] sm:$0xff]
    %v1406 = vld [vmem:[%s1046 + $0x1f8] sm:$0xff]
    %v1407 = vld [vmem:[%s1046 + $0x200] sm:$0xff]
    %v1408 = vld [vmem:[%s1046 + $0x210] sm:$0xff]
    %v1409 = vld [vmem:[%s1046 + $0x218] sm:$0xff]
    %v1410 = vld [vmem:[%s1046 + $0x228] sm:$0xff]
    %v1411 = vld [vmem:[%s1046 + $0x230] sm:$0xff]
    %v1412 = vld [vmem:[%s1046 + $0x240] sm:$0xff]
    %v1413 = vld [vmem:[%s1046 + $0x248] sm:$0xff]
    %v1414 = vld [vmem:[%s1046 + $0x258] sm:$0xff]
    %v1415 = vld [vmem:[%s1046 + $0x260] sm:$0xff]
    %v1416 = vld [vmem:[%s1046 + $0x270] sm:$0xff]
    %v1417 = vld [vmem:[%s1046 + $0x278] sm:$0xff]
    %v1418 = vld [vmem:[%s1046 + $0x288] sm:$0xff]
    %v1419 = vld [vmem:[%s1046 + $0x290] sm:$0xff]
    %v1420 = vld [vmem:[%s1046 + $0x2a0] sm:$0xff]
    %v1421 = vld [vmem:[%s1046 + $0x2a8] sm:$0xff]
    %v1422 = vld [vmem:[%s1046 + $0x2b8] sm:$0xff]
    %v1423 = vld [vmem:[%s1046 + $0x2c0] sm:$0xff]
    %v1424 = vld [vmem:[%s1046 + $0x2d0] sm:$0xff]
    %v1425 = vld [vmem:[%s1046 + $0x2d8] sm:$0xff]
    %v1426 = vld [vmem:[%s1046 + $0x2e8] sm:$0xff]
    %v1427 = vld [vmem:[%s1046 + $0x2f0] sm:$0xff]
    %v1428 = vld [vmem:[%s1046 + $0x300] sm:$0xff]
    %v1429 = vld [vmem:[%s1046 + $0x308] sm:$0xff]
    %v1430 = vld [vmem:[%s1046 + $0x318] sm:$0xff]
    %v1431 = vld [vmem:[%s1046 + $0x320] sm:$0xff]
    %v1432 = vld [vmem:[%s1046 + $0x1] sm:$0xff]
    %v1433 = vld [vmem:[%s1046 + $0x9] sm:$0xff]
    %v1434 = vld [vmem:[%s1046 + $0x19] sm:$0xff]
    %v1435 = vld [vmem:[%s1046 + $0x21] sm:$0xff]
    %v1436 = vld [vmem:[%s1046 + $0x31] sm:$0xff]
    %v1437 = vld [vmem:[%s1046 + $0x39] sm:$0xff]
    %v1438 = vld [vmem:[%s1046 + $0x49] sm:$0xff]
    %v1439 = vld [vmem:[%s1046 + $0x51] sm:$0xff]
    %v1440 = vld [vmem:[%s1046 + $0x61] sm:$0xff]
    %v1441 = vld [vmem:[%s1046 + $0x69] sm:$0xff]
    %v1442 = vld [vmem:[%s1046 + $0x79] sm:$0xff]
    %v1443 = vld [vmem:[%s1046 + $0x81] sm:$0xff]
    %v1444 = vld [vmem:[%s1046 + $0x91] sm:$0xff]
    %v1445 = vld [vmem:[%s1046 + $0x99] sm:$0xff]
    %v1446 = vld [vmem:[%s1046 + $0xa9] sm:$0xff]
    %v1447 = vld [vmem:[%s1046 + $0xb1] sm:$0xff]
    %v1448 = vld [vmem:[%s1046 + $0xc1] sm:$0xff]
    %v1449 = vld [vmem:[%s1046 + $0xc9] sm:$0xff]
    %v1450 = vld [vmem:[%s1046 + $0xd9] sm:$0xff]
    %v1451 = vld [vmem:[%s1046 + $0xe1] sm:$0xff]
    %v1452 = vld [vmem:[%s1046 + $0xf1] sm:$0xff]
    %v1453 = vld [vmem:[%s1046 + $0xf9] sm:$0xff]
    %v1454 = vld [vmem:[%s1046 + $0x109] sm:$0xff]
    %v1455 = vld [vmem:[%s1046 + $0x111] sm:$0xff]
    %v1456 = vld [vmem:[%s1046 + $0x121] sm:$0xff]
    %v1457 = vld [vmem:[%s1046 + $0x129] sm:$0xff]
    %v1458 = vld [vmem:[%s1046 + $0x139] sm:$0xff]
    %v1459 = vld [vmem:[%s1046 + $0x141] sm:$0xff]
    %v1460 = vld [vmem:[%s1046 + $0x151] sm:$0xff]
    %v1461 = vld [vmem:[%s1046 + $0x159] sm:$0xff]
    %v1462 = vld [vmem:[%s1046 + $0x169] sm:$0xff]
    %v1463 = vld [vmem:[%s1046 + $0x171] sm:$0xff]
    %v1464 = vld [vmem:[%s1046 + $0x1b1] sm:$0xff]
    %v1465 = vld [vmem:[%s1046 + $0x1b9] sm:$0xff]
    %v1466 = vld [vmem:[%s1046 + $0x1c9] sm:$0xff]
    %v1467 = vld [vmem:[%s1046 + $0x1d1] sm:$0xff]
    %v1468 = vld [vmem:[%s1046 + $0x1e1] sm:$0xff]
    %v1469 = vld [vmem:[%s1046 + $0x1e9] sm:$0xff]
    %v1470 = vld [vmem:[%s1046 + $0x1f9] sm:$0xff]
    %v1471 = vld [vmem:[%s1046 + $0x201] sm:$0xff]
    %v1472 = vld [vmem:[%s1046 + $0x211] sm:$0xff]
    %v1473 = vld [vmem:[%s1046 + $0x219] sm:$0xff]
    %v1474 = vld [vmem:[%s1046 + $0x229] sm:$0xff]
    %v1475 = vld [vmem:[%s1046 + $0x231] sm:$0xff]
    %v1476 = vld [vmem:[%s1046 + $0x241] sm:$0xff]
    %v1477 = vld [vmem:[%s1046 + $0x249] sm:$0xff]
    %v1478 = vld [vmem:[%s1046 + $0x259] sm:$0xff]
    %v1479 = vld [vmem:[%s1046 + $0x261] sm:$0xff]
    %v1480 = vld [vmem:[%s1046 + $0x271] sm:$0xff]
    %v1481 = vld [vmem:[%s1046 + $0x279] sm:$0xff]
    %v1482 = vld [vmem:[%s1046 + $0x289] sm:$0xff]
    %v1483 = vld [vmem:[%s1046 + $0x291] sm:$0xff]
    %v1484 = vld [vmem:[%s1046 + $0x2a1] sm:$0xff]
    %v1485 = vld [vmem:[%s1046 + $0x2a9] sm:$0xff]
    %v1486 = vld [vmem:[%s1046 + $0x2b9] sm:$0xff]
    %v1487 = vld [vmem:[%s1046 + $0x2c1] sm:$0xff]
    %v1488 = vld [vmem:[%s1046 + $0x2d1] sm:$0xff]
    %v1489 = vld [vmem:[%s1046 + $0x2d9] sm:$0xff]
    %v1490 = vld [vmem:[%s1046 + $0x2e9] sm:$0xff]
    %v1491 = vld [vmem:[%s1046 + $0x2f1] sm:$0xff]
    %v1492 = vld [vmem:[%s1046 + $0x301] sm:$0xff]
    %v1493 = vld [vmem:[%s1046 + $0x309] sm:$0xff]
    %v1494 = vld [vmem:[%s1046 + $0x319] sm:$0xff]
    %v1495 = vld [vmem:[%s1046 + $0x321] sm:$0xff]
    %v1496 = vld [vmem:[%s1046 + $0x2] sm:$0xff]
    %v1497 = vld [vmem:[%s1046 + $0xa] sm:$0xff]
    %v1498 = vld [vmem:[%s1046 + $0x1a] sm:$0xff]
    %v1499 = vld [vmem:[%s1046 + $0x22] sm:$0xff]
    %v1500 = vld [vmem:[%s1046 + $0x32] sm:$0xff]
    %v1501 = vld [vmem:[%s1046 + $0x3a] sm:$0xff]
    %v1502 = vld [vmem:[%s1046 + $0x4a] sm:$0xff]
    %v1503 = vld [vmem:[%s1046 + $0x52] sm:$0xff]
    %v1504 = vld [vmem:[%s1046 + $0x62] sm:$0xff]
    %v1505 = vld [vmem:[%s1046 + $0x6a] sm:$0xff]
    %v1506 = vld [vmem:[%s1046 + $0x7a] sm:$0xff]
    %v1507 = vld [vmem:[%s1046 + $0x82] sm:$0xff]
    %v1508 = vld [vmem:[%s1046 + $0x92] sm:$0xff]
    %v1509 = vld [vmem:[%s1046 + $0x9a] sm:$0xff]
    %v1510 = vld [vmem:[%s1046 + $0xaa] sm:$0xff]
    %v1511 = vld [vmem:[%s1046 + $0xb2] sm:$0xff]
    %v1512 = vld [vmem:[%s1046 + $0xc2] sm:$0xff]
    %v1513 = vld [vmem:[%s1046 + $0xca] sm:$0xff]
    %v1514 = vld [vmem:[%s1046 + $0xda] sm:$0xff]
    %v1515 = vld [vmem:[%s1046 + $0xe2] sm:$0xff]
    %v1516 = vld [vmem:[%s1046 + $0xf2] sm:$0xff]
    %v1517 = vld [vmem:[%s1046 + $0xfa] sm:$0xff]
    %v1518 = vld [vmem:[%s1046 + $0x10a] sm:$0xff]
    %v1519 = vld [vmem:[%s1046 + $0x112] sm:$0xff]
    %v1520 = vld [vmem:[%s1046 + $0x122] sm:$0xff]
    %v1521 = vld [vmem:[%s1046 + $0x12a] sm:$0xff]
    %v1522 = vld [vmem:[%s1046 + $0x13a] sm:$0xff]
    %v1523 = vld [vmem:[%s1046 + $0x142] sm:$0xff]
    %v1524 = vld [vmem:[%s1046 + $0x152] sm:$0xff]
    %v1525 = vld [vmem:[%s1046 + $0x15a] sm:$0xff]
    %v1526 = vld [vmem:[%s1046 + $0x16a] sm:$0xff]
    %v1527 = vld [vmem:[%s1046 + $0x172] sm:$0xff]
    %v1528 = vld [vmem:[%s1046 + $0x1b2] sm:$0xff]
    %v1529 = vld [vmem:[%s1046 + $0x1ba] sm:$0xff]
    %v1530 = vld [vmem:[%s1046 + $0x1ca] sm:$0xff]
    %v1531 = vld [vmem:[%s1046 + $0x1d2] sm:$0xff]
    %v1532 = vld [vmem:[%s1046 + $0x1e2] sm:$0xff]
    %v1533 = vld [vmem:[%s1046 + $0x1ea] sm:$0xff]
    %v1534 = vld [vmem:[%s1046 + $0x1fa] sm:$0xff]
    %v1535 = vld [vmem:[%s1046 + $0x202] sm:$0xff]
    %v1536 = vld [vmem:[%s1046 + $0x212] sm:$0xff]
    %v1537 = vld [vmem:[%s1046 + $0x21a] sm:$0xff]
    %v1538 = vld [vmem:[%s1046 + $0x22a] sm:$0xff]
    %v1539 = vld [vmem:[%s1046 + $0x232] sm:$0xff]
    %v1540 = vld [vmem:[%s1046 + $0x242] sm:$0xff]
    %v1541 = vld [vmem:[%s1046 + $0x24a] sm:$0xff]
    %v1542 = vld [vmem:[%s1046 + $0x25a] sm:$0xff]
    %v1543 = vld [vmem:[%s1046 + $0x262] sm:$0xff]
    %v1544 = vld [vmem:[%s1046 + $0x272] sm:$0xff]
    %v1545 = vld [vmem:[%s1046 + $0x27a] sm:$0xff]
    %v1546 = vld [vmem:[%s1046 + $0x28a] sm:$0xff]
    %v1547 = vld [vmem:[%s1046 + $0x292] sm:$0xff]
    %v1548 = vld [vmem:[%s1046 + $0x2a2] sm:$0xff]
    %v1549 = vld [vmem:[%s1046 + $0x2aa] sm:$0xff]
    %v1550 = vld [vmem:[%s1046 + $0x2ba] sm:$0xff]
    %v1551 = vld [vmem:[%s1046 + $0x2c2] sm:$0xff]
    %v1552 = vld [vmem:[%s1046 + $0x2d2] sm:$0xff]
    %v1553 = vld [vmem:[%s1046 + $0x2da] sm:$0xff]
    %v1554 = vld [vmem:[%s1046 + $0x2ea] sm:$0xff]
    %v1555 = vld [vmem:[%s1046 + $0x2f2] sm:$0xff]
    %v1556 = vld [vmem:[%s1046 + $0x302] sm:$0xff]
    %v1557 = vld [vmem:[%s1046 + $0x30a] sm:$0xff]
    %v1558 = vld [vmem:[%s1046 + $0x31a] sm:$0xff]
    %v1559 = vld [vmem:[%s1046 + $0x322] sm:$0xff]
    %s1560 = scalar_lea.vmem [#allocation2], 48
    %v1561 = vld [vmem:[%s1560] sm:$0xff]
    %v1562 = vld [vmem:[%s1560 + $0x8] sm:$0xff]
    %v1563 = vld [vmem:[%s1560 + $0x18] sm:$0xff]
    %v1564 = vld [vmem:[%s1560 + $0x20] sm:$0xff]
    %v1565 = vld [vmem:[%s1560 + $0x30] sm:$0xff]
    %v1566 = vld [vmem:[%s1560 + $0x38] sm:$0xff]
    %v1567 = vld [vmem:[%s1560 + $0x48] sm:$0xff]
    %v1568 = vld [vmem:[%s1560 + $0x50] sm:$0xff]
    %v1569 = vld [vmem:[%s1560 + $0x60] sm:$0xff]
    %v1570 = vld [vmem:[%s1560 + $0x68] sm:$0xff]
    %v1571 = vld [vmem:[%s1560 + $0x78] sm:$0xff]
    %v1572 = vld [vmem:[%s1560 + $0x80] sm:$0xff]
    %v1573 = vld [vmem:[%s1560 + $0x90] sm:$0xff]
    %v1574 = vld [vmem:[%s1560 + $0x98] sm:$0xff]
    %v1575 = vld [vmem:[%s1560 + $0xa8] sm:$0xff]
    %v1576 = vld [vmem:[%s1560 + $0xb0] sm:$0xff]
    %v1577 = vld [vmem:[%s1560 + $0xc0] sm:$0xff]
    %v1578 = vld [vmem:[%s1560 + $0xc8] sm:$0xff]
    %v1579 = vld [vmem:[%s1560 + $0xd8] sm:$0xff]
    %v1580 = vld [vmem:[%s1560 + $0xe0] sm:$0xff]
    %v1581 = vld [vmem:[%s1560 + $0xf0] sm:$0xff]
    %v1582 = vld [vmem:[%s1560 + $0xf8] sm:$0xff]
    %v1583 = vld [vmem:[%s1560 + $0x108] sm:$0xff]
    %v1584 = vld [vmem:[%s1560 + $0x110] sm:$0xff]
    %v1585 = vld [vmem:[%s1560 + $0x120] sm:$0xff]
    %v1586 = vld [vmem:[%s1560 + $0x128] sm:$0xff]
    %v1587 = vld [vmem:[%s1560 + $0x138] sm:$0xff]
    %v1588 = vld [vmem:[%s1560 + $0x140] sm:$0xff]
    %v1589 = vld [vmem:[%s1560 + $0x150] sm:$0xff]
    %v1590 = vld [vmem:[%s1560 + $0x158] sm:$0xff]
    %v1591 = vld [vmem:[%s1560 + $0x168] sm:$0xff]
    %v1592 = vld [vmem:[%s1560 + $0x170] sm:$0xff]
    %v1593 = vld [vmem:[%s1560 + $0x1b0] sm:$0xff]
    %v1594 = vld [vmem:[%s1560 + $0x1b8] sm:$0xff]
    %v1595 = vld [vmem:[%s1560 + $0x1c8] sm:$0xff]
    %v1596 = vld [vmem:[%s1560 + $0x1d0] sm:$0xff]
    %v1597 = vld [vmem:[%s1560 + $0x1e0] sm:$0xff]
    %v1598 = vld [vmem:[%s1560 + $0x1e8] sm:$0xff]
    %v1599 = vld [vmem:[%s1560 + $0x1f8] sm:$0xff]
    %v1600 = vld [vmem:[%s1560 + $0x200] sm:$0xff]
    %v1601 = vld [vmem:[%s1560 + $0x210] sm:$0xff]
    %v1602 = vld [vmem:[%s1560 + $0x218] sm:$0xff]
    %v1603 = vld [vmem:[%s1560 + $0x228] sm:$0xff]
    %v1604 = vld [vmem:[%s1560 + $0x230] sm:$0xff]
    %v1605 = vld [vmem:[%s1560 + $0x240] sm:$0xff]
    %v1606 = vld [vmem:[%s1560 + $0x248] sm:$0xff]
    %v1607 = vld [vmem:[%s1560 + $0x258] sm:$0xff]
    %v1608 = vld [vmem:[%s1560 + $0x260] sm:$0xff]
    %v1609 = vld [vmem:[%s1560 + $0x270] sm:$0xff]
    %v1610 = vld [vmem:[%s1560 + $0x278] sm:$0xff]
    %v1611 = vld [vmem:[%s1560 + $0x288] sm:$0xff]
    %v1612 = vld [vmem:[%s1560 + $0x290] sm:$0xff]
    %v1613 = vld [vmem:[%s1560 + $0x2a0] sm:$0xff]
    %v1614 = vld [vmem:[%s1560 + $0x2a8] sm:$0xff]
    %v1615 = vld [vmem:[%s1560 + $0x2b8] sm:$0xff]
    %v1616 = vld [vmem:[%s1560 + $0x2c0] sm:$0xff]
    %v1617 = vld [vmem:[%s1560 + $0x2d0] sm:$0xff]
    %v1618 = vld [vmem:[%s1560 + $0x2d8] sm:$0xff]
    %v1619 = vld [vmem:[%s1560 + $0x2e8] sm:$0xff]
    %v1620 = vld [vmem:[%s1560 + $0x2f0] sm:$0xff]
    %v1621 = vld [vmem:[%s1560 + $0x300] sm:$0xff]
    %v1622 = vld [vmem:[%s1560 + $0x308] sm:$0xff]
    %v1623 = vld [vmem:[%s1560 + $0x318] sm:$0xff]
    %v1624 = vld [vmem:[%s1560 + $0x320] sm:$0xff]
    %v1625 = vld [vmem:[%s1560 + $0x1] sm:$0xff]
    %v1626 = vld [vmem:[%s1560 + $0x9] sm:$0xff]
    %v1627 = vld [vmem:[%s1560 + $0x19] sm:$0xff]
    %v1628 = vld [vmem:[%s1560 + $0x21] sm:$0xff]
    %v1629 = vld [vmem:[%s1560 + $0x31] sm:$0xff]
    %v1630 = vld [vmem:[%s1560 + $0x39] sm:$0xff]
    %v1631 = vld [vmem:[%s1560 + $0x49] sm:$0xff]
    %v1632 = vld [vmem:[%s1560 + $0x51] sm:$0xff]
    %v1633 = vld [vmem:[%s1560 + $0x61] sm:$0xff]
    %v1634 = vld [vmem:[%s1560 + $0x69] sm:$0xff]
    %v1635 = vld [vmem:[%s1560 + $0x79] sm:$0xff]
    %v1636 = vld [vmem:[%s1560 + $0x81] sm:$0xff]
    %v1637 = vld [vmem:[%s1560 + $0x91] sm:$0xff]
    %v1638 = vld [vmem:[%s1560 + $0x99] sm:$0xff]
    %v1639 = vld [vmem:[%s1560 + $0xa9] sm:$0xff]
    %v1640 = vld [vmem:[%s1560 + $0xb1] sm:$0xff]
    %v1641 = vld [vmem:[%s1560 + $0xc1] sm:$0xff]
    %v1642 = vld [vmem:[%s1560 + $0xc9] sm:$0xff]
    %v1643 = vld [vmem:[%s1560 + $0xd9] sm:$0xff]
    %v1644 = vld [vmem:[%s1560 + $0xe1] sm:$0xff]
    %v1645 = vld [vmem:[%s1560 + $0xf1] sm:$0xff]
    %v1646 = vld [vmem:[%s1560 + $0xf9] sm:$0xff]
    %v1647 = vld [vmem:[%s1560 + $0x109] sm:$0xff]
    %v1648 = vld [vmem:[%s1560 + $0x111] sm:$0xff]
    %v1649 = vld [vmem:[%s1560 + $0x121] sm:$0xff]
    %v1650 = vld [vmem:[%s1560 + $0x129] sm:$0xff]
    %v1651 = vld [vmem:[%s1560 + $0x139] sm:$0xff]
    %v1652 = vld [vmem:[%s1560 + $0x141] sm:$0xff]
    %v1653 = vld [vmem:[%s1560 + $0x151] sm:$0xff]
    %v1654 = vld [vmem:[%s1560 + $0x159] sm:$0xff]
    %v1655 = vld [vmem:[%s1560 + $0x169] sm:$0xff]
    %v1656 = vld [vmem:[%s1560 + $0x171] sm:$0xff]
    %v1657 = vld [vmem:[%s1560 + $0x1b1] sm:$0xff]
    %v1658 = vld [vmem:[%s1560 + $0x1b9] sm:$0xff]
    %v1659 = vld [vmem:[%s1560 + $0x1c9] sm:$0xff]
    %v1660 = vld [vmem:[%s1560 + $0x1d1] sm:$0xff]
    %v1661 = vld [vmem:[%s1560 + $0x1e1] sm:$0xff]
    %v1662 = vld [vmem:[%s1560 + $0x1e9] sm:$0xff]
    %v1663 = vld [vmem:[%s1560 + $0x1f9] sm:$0xff]
    %v1664 = vld [vmem:[%s1560 + $0x201] sm:$0xff]
    %v1665 = vld [vmem:[%s1560 + $0x211] sm:$0xff]
    %v1666 = vld [vmem:[%s1560 + $0x219] sm:$0xff]
    %v1667 = vld [vmem:[%s1560 + $0x229] sm:$0xff]
    %v1668 = vld [vmem:[%s1560 + $0x231] sm:$0xff]
    %v1669 = vld [vmem:[%s1560 + $0x241] sm:$0xff]
    %v1670 = vld [vmem:[%s1560 + $0x249] sm:$0xff]
    %v1671 = vld [vmem:[%s1560 + $0x259] sm:$0xff]
    %v1672 = vld [vmem:[%s1560 + $0x261] sm:$0xff]
    %v1673 = vld [vmem:[%s1560 + $0x271] sm:$0xff]
    %v1674 = vld [vmem:[%s1560 + $0x279] sm:$0xff]
    %v1675 = vld [vmem:[%s1560 + $0x289] sm:$0xff]
    %v1676 = vld [vmem:[%s1560 + $0x291] sm:$0xff]
    %v1677 = vld [vmem:[%s1560 + $0x2a1] sm:$0xff]
    %v1678 = vld [vmem:[%s1560 + $0x2a9] sm:$0xff]
    %v1679 = vld [vmem:[%s1560 + $0x2b9] sm:$0xff]
    %v1680 = vld [vmem:[%s1560 + $0x2c1] sm:$0xff]
    %v1681 = vld [vmem:[%s1560 + $0x2d1] sm:$0xff]
    %v1682 = vld [vmem:[%s1560 + $0x2d9] sm:$0xff]
    %v1683 = vld [vmem:[%s1560 + $0x2e9] sm:$0xff]
    %v1684 = vld [vmem:[%s1560 + $0x2f1] sm:$0xff]
    %v1685 = vld [vmem:[%s1560 + $0x301] sm:$0xff]
    %v1686 = vld [vmem:[%s1560 + $0x309] sm:$0xff]
    %v1687 = vld [vmem:[%s1560 + $0x319] sm:$0xff]
    %v1688 = vld [vmem:[%s1560 + $0x321] sm:$0xff]
    %v1689 = vld [vmem:[%s1560 + $0x2] sm:$0xff]
    %v1690 = vld [vmem:[%s1560 + $0xa] sm:$0xff]
    %v1691 = vld [vmem:[%s1560 + $0x1a] sm:$0xff]
    %v1692 = vld [vmem:[%s1560 + $0x22] sm:$0xff]
    %v1693 = vld [vmem:[%s1560 + $0x32] sm:$0xff]
    %v1694 = vld [vmem:[%s1560 + $0x3a] sm:$0xff]
    %v1695 = vld [vmem:[%s1560 + $0x4a] sm:$0xff]
    %v1696 = vld [vmem:[%s1560 + $0x52] sm:$0xff]
    %v1697 = vld [vmem:[%s1560 + $0x62] sm:$0xff]
    %v1698 = vld [vmem:[%s1560 + $0x6a] sm:$0xff]
    %v1699 = vld [vmem:[%s1560 + $0x7a] sm:$0xff]
    %v1700 = vld [vmem:[%s1560 + $0x82] sm:$0xff]
    %v1701 = vld [vmem:[%s1560 + $0x92] sm:$0xff]
    %v1702 = vld [vmem:[%s1560 + $0x9a] sm:$0xff]
    %v1703 = vld [vmem:[%s1560 + $0xaa] sm:$0xff]
    %v1704 = vld [vmem:[%s1560 + $0xb2] sm:$0xff]
    %v1705 = vld [vmem:[%s1560 + $0xc2] sm:$0xff]
    %v1706 = vld [vmem:[%s1560 + $0xca] sm:$0xff]
    %v1707 = vld [vmem:[%s1560 + $0xda] sm:$0xff]
    %v1708 = vld [vmem:[%s1560 + $0xe2] sm:$0xff]
    %v1709 = vld [vmem:[%s1560 + $0xf2] sm:$0xff]
    %v1710 = vld [vmem:[%s1560 + $0xfa] sm:$0xff]
    %v1711 = vld [vmem:[%s1560 + $0x10a] sm:$0xff]
    %v1712 = vld [vmem:[%s1560 + $0x112] sm:$0xff]
    %v1713 = vld [vmem:[%s1560 + $0x122] sm:$0xff]
    %v1714 = vld [vmem:[%s1560 + $0x12a] sm:$0xff]
    %v1715 = vld [vmem:[%s1560 + $0x13a] sm:$0xff]
    %v1716 = vld [vmem:[%s1560 + $0x142] sm:$0xff]
    %v1717 = vld [vmem:[%s1560 + $0x152] sm:$0xff]
    %v1718 = vld [vmem:[%s1560 + $0x15a] sm:$0xff]
    %v1719 = vld [vmem:[%s1560 + $0x16a] sm:$0xff]
    %v1720 = vld [vmem:[%s1560 + $0x172] sm:$0xff]
    %v1721 = vld [vmem:[%s1560 + $0x1b2] sm:$0xff]
    %v1722 = vld [vmem:[%s1560 + $0x1ba] sm:$0xff]
    %v1723 = vld [vmem:[%s1560 + $0x1ca] sm:$0xff]
    %v1724 = vld [vmem:[%s1560 + $0x1d2] sm:$0xff]
    %v1725 = vld [vmem:[%s1560 + $0x1e2] sm:$0xff]
    %v1726 = vld [vmem:[%s1560 + $0x1ea] sm:$0xff]
    %v1727 = vld [vmem:[%s1560 + $0x1fa] sm:$0xff]
    %v1728 = vld [vmem:[%s1560 + $0x202] sm:$0xff]
    %v1729 = vld [vmem:[%s1560 + $0x212] sm:$0xff]
    %v1730 = vld [vmem:[%s1560 + $0x21a] sm:$0xff]
    %v1731 = vld [vmem:[%s1560 + $0x22a] sm:$0xff]
    %v1732 = vld [vmem:[%s1560 + $0x232] sm:$0xff]
    %v1733 = vld [vmem:[%s1560 + $0x242] sm:$0xff]
    %v1734 = vld [vmem:[%s1560 + $0x24a] sm:$0xff]
    %v1735 = vld [vmem:[%s1560 + $0x25a] sm:$0xff]
    %v1736 = vld [vmem:[%s1560 + $0x262] sm:$0xff]
    %v1737 = vld [vmem:[%s1560 + $0x272] sm:$0xff]
    %v1738 = vld [vmem:[%s1560 + $0x27a] sm:$0xff]
    %v1739 = vld [vmem:[%s1560 + $0x28a] sm:$0xff]
    %v1740 = vld [vmem:[%s1560 + $0x292] sm:$0xff]
    %v1741 = vld [vmem:[%s1560 + $0x2a2] sm:$0xff]
    %v1742 = vld [vmem:[%s1560 + $0x2aa] sm:$0xff]
    %v1743 = vld [vmem:[%s1560 + $0x2ba] sm:$0xff]
    %v1744 = vld [vmem:[%s1560 + $0x2c2] sm:$0xff]
    %v1745 = vld [vmem:[%s1560 + $0x2d2] sm:$0xff]
    %v1746 = vld [vmem:[%s1560 + $0x2da] sm:$0xff]
    %v1747 = vld [vmem:[%s1560 + $0x2ea] sm:$0xff]
    %v1748 = vld [vmem:[%s1560 + $0x2f2] sm:$0xff]
    %v1749 = vld [vmem:[%s1560 + $0x302] sm:$0xff]
    %v1750 = vld [vmem:[%s1560 + $0x30a] sm:$0xff]
    %v1751 = vld [vmem:[%s1560 + $0x31a] sm:$0xff]
    %v1752 = vld [vmem:[%s1560 + $0x322] sm:$0xff]
    %1817 = vrot.lane.b32.xlu0 %v1240, 32
    %v1818 = vpop.permute.xlu0 %1817
    %1819 = vrot.lane.b32.xlu0 %v1241, 32
    %v1820 = vpop.permute.xlu0 %1819
    %1821 = vrot.lane.b32.xlu0 %v1242, 32
    %v1822 = vpop.permute.xlu0 %1821
    %1823 = vrot.lane.b32.xlu0 %v1243, 32
    %v1824 = vpop.permute.xlu0 %1823
    %1825 = vrot.lane.b32.xlu0 %v1244, 32
    %v1826 = vpop.permute.xlu0 %1825
    %1827 = vrot.lane.b32.xlu0 %v1245, 32
    %v1828 = vpop.permute.xlu0 %1827
    %1829 = vrot.lane.b32.xlu0 %v1246, 32
    %v1830 = vpop.permute.xlu0 %1829
    %1831 = vrot.lane.b32.xlu0 %v1247, 32
    %v1832 = vpop.permute.xlu0 %1831
    %1833 = vrot.lane.b32.xlu0 %v1248, 32
    %v1834 = vpop.permute.xlu0 %1833
    %1835 = vrot.lane.b32.xlu0 %v1249, 32
    %v1836 = vpop.permute.xlu0 %1835
    %1837 = vrot.lane.b32.xlu0 %v1250, 32
    %v1838 = vpop.permute.xlu0 %1837
    %1839 = vrot.lane.b32.xlu0 %v1251, 32
    %v1840 = vpop.permute.xlu0 %1839
    %1841 = vrot.lane.b32.xlu0 %v1252, 32
    %v1842 = vpop.permute.xlu0 %1841
    %1843 = vrot.lane.b32.xlu0 %v1253, 32
    %v1844 = vpop.permute.xlu0 %1843
    %1845 = vrot.lane.b32.xlu0 %v1254, 32
    %v1846 = vpop.permute.xlu0 %1845
    %1847 = vrot.lane.b32.xlu0 %v1255, 32
    %v1848 = vpop.permute.xlu0 %1847
    %1849 = vrot.lane.b32.xlu0 %v1256, 32
    %v1850 = vpop.permute.xlu0 %1849
    %1851 = vrot.lane.b32.xlu0 %v1257, 32
    %v1852 = vpop.permute.xlu0 %1851
    %1853 = vrot.lane.b32.xlu0 %v1258, 32
    %v1854 = vpop.permute.xlu0 %1853
    %1855 = vrot.lane.b32.xlu0 %v1259, 32
    %v1856 = vpop.permute.xlu0 %1855
    %1857 = vrot.lane.b32.xlu0 %v1260, 32
    %v1858 = vpop.permute.xlu0 %1857
    %1859 = vrot.lane.b32.xlu0 %v1261, 32
    %v1860 = vpop.permute.xlu0 %1859
    %1861 = vrot.lane.b32.xlu0 %v1262, 32
    %v1862 = vpop.permute.xlu0 %1861
    %1863 = vrot.lane.b32.xlu0 %v1263, 32
    %v1864 = vpop.permute.xlu0 %1863
    %1865 = vrot.lane.b32.xlu0 %v1264, 32
    %v1866 = vpop.permute.xlu0 %1865
    %1867 = vrot.lane.b32.xlu0 %v1265, 32
    %v1868 = vpop.permute.xlu0 %1867
    %1869 = vrot.lane.b32.xlu0 %v1266, 32
    %v1870 = vpop.permute.xlu0 %1869
    %1871 = vrot.lane.b32.xlu0 %v1267, 32
    %v1872 = vpop.permute.xlu0 %1871
    %1873 = vrot.lane.b32.xlu0 %v1268, 32
    %v1874 = vpop.permute.xlu0 %1873
    %1875 = vrot.lane.b32.xlu0 %v1269, 32
    %v1876 = vpop.permute.xlu0 %1875
    %1877 = vrot.lane.b32.xlu0 %v1270, 32
    %v1878 = vpop.permute.xlu0 %1877
    %1879 = vrot.lane.b32.xlu0 %v1271, 32
    %v1880 = vpop.permute.xlu0 %1879
    %1881 = vrot.lane.b32.xlu0 %v1272, 32
    %v1882 = vpop.permute.xlu0 %1881
    %1883 = vrot.lane.b32.xlu0 %v1273, 32
    %v1884 = vpop.permute.xlu0 %1883
    %1885 = vrot.lane.b32.xlu0 %v1274, 32
    %v1886 = vpop.permute.xlu0 %1885
    %1887 = vrot.lane.b32.xlu0 %v1275, 32
    %v1888 = vpop.permute.xlu0 %1887
    %1889 = vrot.lane.b32.xlu0 %v1276, 32
    %v1890 = vpop.permute.xlu0 %1889
    %1891 = vrot.lane.b32.xlu0 %v1277, 32
    %v1892 = vpop.permute.xlu0 %1891
    %1893 = vrot.lane.b32.xlu0 %v1278, 32
    %v1894 = vpop.permute.xlu0 %1893
    %1895 = vrot.lane.b32.xlu0 %v1279, 32
    %v1896 = vpop.permute.xlu0 %1895
    %1897 = vrot.lane.b32.xlu0 %v1280, 32
    %v1898 = vpop.permute.xlu0 %1897
    %1899 = vrot.lane.b32.xlu0 %v1281, 32
    %v1900 = vpop.permute.xlu0 %1899
    %1901 = vrot.lane.b32.xlu0 %v1282, 32
    %v1902 = vpop.permute.xlu0 %1901
    %1903 = vrot.lane.b32.xlu0 %v1283, 32
    %v1904 = vpop.permute.xlu0 %1903
    %1905 = vrot.lane.b32.xlu0 %v1284, 32
    %v1906 = vpop.permute.xlu0 %1905
    %1907 = vrot.lane.b32.xlu0 %v1285, 32
    %v1908 = vpop.permute.xlu0 %1907
    %1909 = vrot.lane.b32.xlu0 %v1286, 32
    %v1910 = vpop.permute.xlu0 %1909
    %1911 = vrot.lane.b32.xlu0 %v1287, 32
    %v1912 = vpop.permute.xlu0 %1911
    %1913 = vrot.lane.b32.xlu0 %v1288, 32
    %v1914 = vpop.permute.xlu0 %1913
    %1915 = vrot.lane.b32.xlu0 %v1289, 32
    %v1916 = vpop.permute.xlu0 %1915
    %1917 = vrot.lane.b32.xlu0 %v1290, 32
    %v1918 = vpop.permute.xlu0 %1917
    %1919 = vrot.lane.b32.xlu0 %v1291, 32
    %v1920 = vpop.permute.xlu0 %1919
    %1921 = vrot.lane.b32.xlu0 %v1292, 32
    %v1922 = vpop.permute.xlu0 %1921
    %1923 = vrot.lane.b32.xlu0 %v1293, 32
    %v1924 = vpop.permute.xlu0 %1923
    %1925 = vrot.lane.b32.xlu0 %v1294, 32
    %v1926 = vpop.permute.xlu0 %1925
    %1927 = vrot.lane.b32.xlu0 %v1295, 32
    %v1928 = vpop.permute.xlu0 %1927
    %1929 = vrot.lane.b32.xlu0 %v1296, 32
    %v1930 = vpop.permute.xlu0 %1929
    %1931 = vrot.lane.b32.xlu0 %v1297, 32
    %v1932 = vpop.permute.xlu0 %1931
    %1933 = vrot.lane.b32.xlu0 %v1298, 32
    %v1934 = vpop.permute.xlu0 %1933
    %1935 = vrot.lane.b32.xlu0 %v1299, 32
    %v1936 = vpop.permute.xlu0 %1935
    %1937 = vrot.lane.b32.xlu0 %v1300, 32
    %v1938 = vpop.permute.xlu0 %1937
    %1939 = vrot.lane.b32.xlu0 %v1301, 32
    %v1940 = vpop.permute.xlu0 %1939
    %1941 = vrot.lane.b32.xlu0 %v1302, 32
    %v1942 = vpop.permute.xlu0 %1941
    %1943 = vrot.lane.b32.xlu0 %v1303, 32
    %v1944 = vpop.permute.xlu0 %1943
    %2073 = vrot.lane.b32.xlu0 %v1304, 64
    %v2074 = vpop.permute.xlu0 %2073
    %2075 = vrot.lane.b32.xlu0 %v1305, 64
    %v2076 = vpop.permute.xlu0 %2075
    %2077 = vrot.lane.b32.xlu0 %v1306, 64
    %v2078 = vpop.permute.xlu0 %2077
    %2079 = vrot.lane.b32.xlu0 %v1307, 64
    %v2080 = vpop.permute.xlu0 %2079
    %2081 = vrot.lane.b32.xlu0 %v1308, 64
    %v2082 = vpop.permute.xlu0 %2081
    %2083 = vrot.lane.b32.xlu0 %v1309, 64
    %v2084 = vpop.permute.xlu0 %2083
    %2085 = vrot.lane.b32.xlu0 %v1310, 64
    %v2086 = vpop.permute.xlu0 %2085
    %2087 = vrot.lane.b32.xlu0 %v1311, 64
    %v2088 = vpop.permute.xlu0 %2087
    %2089 = vrot.lane.b32.xlu0 %v1312, 64
    %v2090 = vpop.permute.xlu0 %2089
    %2091 = vrot.lane.b32.xlu0 %v1313, 64
    %v2092 = vpop.permute.xlu0 %2091
    %2093 = vrot.lane.b32.xlu0 %v1314, 64
    %v2094 = vpop.permute.xlu0 %2093
    %2095 = vrot.lane.b32.xlu0 %v1315, 64
    %v2096 = vpop.permute.xlu0 %2095
    %2097 = vrot.lane.b32.xlu0 %v1316, 64
    %v2098 = vpop.permute.xlu0 %2097
    %2099 = vrot.lane.b32.xlu0 %v1317, 64
    %v2100 = vpop.permute.xlu0 %2099
    %2101 = vrot.lane.b32.xlu0 %v1318, 64
    %v2102 = vpop.permute.xlu0 %2101
    %2103 = vrot.lane.b32.xlu0 %v1319, 64
    %v2104 = vpop.permute.xlu0 %2103
    %2105 = vrot.lane.b32.xlu0 %v1320, 64
    %v2106 = vpop.permute.xlu0 %2105
    %2107 = vrot.lane.b32.xlu0 %v1321, 64
    %v2108 = vpop.permute.xlu0 %2107
    %2109 = vrot.lane.b32.xlu0 %v1322, 64
    %v2110 = vpop.permute.xlu0 %2109
    %2111 = vrot.lane.b32.xlu0 %v1323, 64
    %v2112 = vpop.permute.xlu0 %2111
    %2113 = vrot.lane.b32.xlu0 %v1324, 64
    %v2114 = vpop.permute.xlu0 %2113
    %2115 = vrot.lane.b32.xlu0 %v1325, 64
    %v2116 = vpop.permute.xlu0 %2115
    %2117 = vrot.lane.b32.xlu0 %v1326, 64
    %v2118 = vpop.permute.xlu0 %2117
    %2119 = vrot.lane.b32.xlu0 %v1327, 64
    %v2120 = vpop.permute.xlu0 %2119
    %2121 = vrot.lane.b32.xlu0 %v1328, 64
    %v2122 = vpop.permute.xlu0 %2121
    %2123 = vrot.lane.b32.xlu0 %v1329, 64
    %v2124 = vpop.permute.xlu0 %2123
    %2125 = vrot.lane.b32.xlu0 %v1330, 64
    %v2126 = vpop.permute.xlu0 %2125
    %2127 = vrot.lane.b32.xlu0 %v1331, 64
    %v2128 = vpop.permute.xlu0 %2127
    %2129 = vrot.lane.b32.xlu0 %v1332, 64
    %v2130 = vpop.permute.xlu0 %2129
    %2131 = vrot.lane.b32.xlu0 %v1333, 64
    %v2132 = vpop.permute.xlu0 %2131
    %2133 = vrot.lane.b32.xlu0 %v1334, 64
    %v2134 = vpop.permute.xlu0 %2133
    %2135 = vrot.lane.b32.xlu0 %v1335, 64
    %v2136 = vpop.permute.xlu0 %2135
    %2137 = vrot.lane.b32.xlu0 %v1336, 64
    %v2138 = vpop.permute.xlu0 %2137
    %2139 = vrot.lane.b32.xlu0 %v1337, 64
    %v2140 = vpop.permute.xlu0 %2139
    %2141 = vrot.lane.b32.xlu0 %v1338, 64
    %v2142 = vpop.permute.xlu0 %2141
    %2143 = vrot.lane.b32.xlu0 %v1339, 64
    %v2144 = vpop.permute.xlu0 %2143
    %2145 = vrot.lane.b32.xlu0 %v1340, 64
    %v2146 = vpop.permute.xlu0 %2145
    %2147 = vrot.lane.b32.xlu0 %v1341, 64
    %v2148 = vpop.permute.xlu0 %2147
    %2149 = vrot.lane.b32.xlu0 %v1342, 64
    %v2150 = vpop.permute.xlu0 %2149
    %2151 = vrot.lane.b32.xlu0 %v1343, 64
    %v2152 = vpop.permute.xlu0 %2151
    %2153 = vrot.lane.b32.xlu0 %v1344, 64
    %v2154 = vpop.permute.xlu0 %2153
    %2155 = vrot.lane.b32.xlu0 %v1345, 64
    %v2156 = vpop.permute.xlu0 %2155
    %2157 = vrot.lane.b32.xlu0 %v1346, 64
    %v2158 = vpop.permute.xlu0 %2157
    %2159 = vrot.lane.b32.xlu0 %v1347, 64
    %v2160 = vpop.permute.xlu0 %2159
    %2161 = vrot.lane.b32.xlu0 %v1348, 64
    %v2162 = vpop.permute.xlu0 %2161
    %2163 = vrot.lane.b32.xlu0 %v1349, 64
    %v2164 = vpop.permute.xlu0 %2163
    %2165 = vrot.lane.b32.xlu0 %v1350, 64
    %v2166 = vpop.permute.xlu0 %2165
    %2167 = vrot.lane.b32.xlu0 %v1351, 64
    %v2168 = vpop.permute.xlu0 %2167
    %2169 = vrot.lane.b32.xlu0 %v1352, 64
    %v2170 = vpop.permute.xlu0 %2169
    %2171 = vrot.lane.b32.xlu0 %v1353, 64
    %v2172 = vpop.permute.xlu0 %2171
    %2173 = vrot.lane.b32.xlu0 %v1354, 64
    %v2174 = vpop.permute.xlu0 %2173
    %2175 = vrot.lane.b32.xlu0 %v1355, 64
    %v2176 = vpop.permute.xlu0 %2175
    %2177 = vrot.lane.b32.xlu0 %v1356, 64
    %v2178 = vpop.permute.xlu0 %2177
    %2179 = vrot.lane.b32.xlu0 %v1357, 64
    %v2180 = vpop.permute.xlu0 %2179
    %2181 = vrot.lane.b32.xlu0 %v1358, 64
    %v2182 = vpop.permute.xlu0 %2181
    %2183 = vrot.lane.b32.xlu0 %v1359, 64
    %v2184 = vpop.permute.xlu0 %2183
    %2185 = vrot.lane.b32.xlu0 %v1360, 64
    %v2186 = vpop.permute.xlu0 %2185
    %2187 = vrot.lane.b32.xlu0 %v1361, 64
    %v2188 = vpop.permute.xlu0 %2187
    %2189 = vrot.lane.b32.xlu0 %v1362, 64
    %v2190 = vpop.permute.xlu0 %2189
    %2191 = vrot.lane.b32.xlu0 %v1363, 64
    %v2192 = vpop.permute.xlu0 %2191
    %2193 = vrot.lane.b32.xlu0 %v1364, 64
    %v2194 = vpop.permute.xlu0 %2193
    %2195 = vrot.lane.b32.xlu0 %v1365, 64
    %v2196 = vpop.permute.xlu0 %2195
    %2197 = vrot.lane.b32.xlu0 %v1366, 64
    %v2198 = vpop.permute.xlu0 %2197
    %2199 = vrot.lane.b32.xlu0 %v1367, 64
    %v2200 = vpop.permute.xlu0 %2199
    %2329 = vrot.lane.b32.xlu0 %v1368, 96
    %v2330 = vpop.permute.xlu0 %2329
    %2331 = vrot.lane.b32.xlu0 %v1369, 96
    %v2332 = vpop.permute.xlu0 %2331
    %2333 = vrot.lane.b32.xlu0 %v1370, 96
    %v2334 = vpop.permute.xlu0 %2333
    %2335 = vrot.lane.b32.xlu0 %v1371, 96
    %v2336 = vpop.permute.xlu0 %2335
    %2337 = vrot.lane.b32.xlu0 %v1372, 96
    %v2338 = vpop.permute.xlu0 %2337
    %2339 = vrot.lane.b32.xlu0 %v1373, 96
    %v2340 = vpop.permute.xlu0 %2339
    %2341 = vrot.lane.b32.xlu0 %v1374, 96
    %v2342 = vpop.permute.xlu0 %2341
    %2343 = vrot.lane.b32.xlu0 %v1375, 96
    %v2344 = vpop.permute.xlu0 %2343
    %2345 = vrot.lane.b32.xlu0 %v1376, 96
    %v2346 = vpop.permute.xlu0 %2345
    %2347 = vrot.lane.b32.xlu0 %v1377, 96
    %v2348 = vpop.permute.xlu0 %2347
    %2349 = vrot.lane.b32.xlu0 %v1378, 96
    %v2350 = vpop.permute.xlu0 %2349
    %2351 = vrot.lane.b32.xlu0 %v1379, 96
    %v2352 = vpop.permute.xlu0 %2351
    %2353 = vrot.lane.b32.xlu0 %v1380, 96
    %v2354 = vpop.permute.xlu0 %2353
    %2355 = vrot.lane.b32.xlu0 %v1381, 96
    %v2356 = vpop.permute.xlu0 %2355
    %2357 = vrot.lane.b32.xlu0 %v1382, 96
    %v2358 = vpop.permute.xlu0 %2357
    %2359 = vrot.lane.b32.xlu0 %v1383, 96
    %v2360 = vpop.permute.xlu0 %2359
    %2361 = vrot.lane.b32.xlu0 %v1384, 96
    %v2362 = vpop.permute.xlu0 %2361
    %2363 = vrot.lane.b32.xlu0 %v1385, 96
    %v2364 = vpop.permute.xlu0 %2363
    %2365 = vrot.lane.b32.xlu0 %v1386, 96
    %v2366 = vpop.permute.xlu0 %2365
    %2367 = vrot.lane.b32.xlu0 %v1387, 96
    %v2368 = vpop.permute.xlu0 %2367
    %2369 = vrot.lane.b32.xlu0 %v1388, 96
    %v2370 = vpop.permute.xlu0 %2369
    %2371 = vrot.lane.b32.xlu0 %v1389, 96
    %v2372 = vpop.permute.xlu0 %2371
    %2373 = vrot.lane.b32.xlu0 %v1390, 96
    %v2374 = vpop.permute.xlu0 %2373
    %2375 = vrot.lane.b32.xlu0 %v1391, 96
    %v2376 = vpop.permute.xlu0 %2375
    %2377 = vrot.lane.b32.xlu0 %v1392, 96
    %v2378 = vpop.permute.xlu0 %2377
    %2379 = vrot.lane.b32.xlu0 %v1393, 96
    %v2380 = vpop.permute.xlu0 %2379
    %2381 = vrot.lane.b32.xlu0 %v1394, 96
    %v2382 = vpop.permute.xlu0 %2381
    %2383 = vrot.lane.b32.xlu0 %v1395, 96
    %v2384 = vpop.permute.xlu0 %2383
    %2385 = vrot.lane.b32.xlu0 %v1396, 96
    %v2386 = vpop.permute.xlu0 %2385
    %2387 = vrot.lane.b32.xlu0 %v1397, 96
    %v2388 = vpop.permute.xlu0 %2387
    %2389 = vrot.lane.b32.xlu0 %v1398, 96
    %v2390 = vpop.permute.xlu0 %2389
    %2391 = vrot.lane.b32.xlu0 %v1399, 96
    %v2392 = vpop.permute.xlu0 %2391
    %2393 = vrot.lane.b32.xlu0 %v1400, 96
    %v2394 = vpop.permute.xlu0 %2393
    %2395 = vrot.lane.b32.xlu0 %v1401, 96
    %v2396 = vpop.permute.xlu0 %2395
    %2397 = vrot.lane.b32.xlu0 %v1402, 96
    %v2398 = vpop.permute.xlu0 %2397
    %2399 = vrot.lane.b32.xlu0 %v1403, 96
    %v2400 = vpop.permute.xlu0 %2399
    %2401 = vrot.lane.b32.xlu0 %v1404, 96
    %v2402 = vpop.permute.xlu0 %2401
    %2403 = vrot.lane.b32.xlu0 %v1405, 96
    %v2404 = vpop.permute.xlu0 %2403
    %2405 = vrot.lane.b32.xlu0 %v1406, 96
    %v2406 = vpop.permute.xlu0 %2405
    %2407 = vrot.lane.b32.xlu0 %v1407, 96
    %v2408 = vpop.permute.xlu0 %2407
    %2409 = vrot.lane.b32.xlu0 %v1408, 96
    %v2410 = vpop.permute.xlu0 %2409
    %2411 = vrot.lane.b32.xlu0 %v1409, 96
    %v2412 = vpop.permute.xlu0 %2411
    %2413 = vrot.lane.b32.xlu0 %v1410, 96
    %v2414 = vpop.permute.xlu0 %2413
    %2415 = vrot.lane.b32.xlu0 %v1411, 96
    %v2416 = vpop.permute.xlu0 %2415
    %2417 = vrot.lane.b32.xlu0 %v1412, 96
    %v2418 = vpop.permute.xlu0 %2417
    %2419 = vrot.lane.b32.xlu0 %v1413, 96
    %v2420 = vpop.permute.xlu0 %2419
    %2421 = vrot.lane.b32.xlu0 %v1414, 96
    %v2422 = vpop.permute.xlu0 %2421
    %2423 = vrot.lane.b32.xlu0 %v1415, 96
    %v2424 = vpop.permute.xlu0 %2423
    %2425 = vrot.lane.b32.xlu0 %v1416, 96
    %v2426 = vpop.permute.xlu0 %2425
    %2427 = vrot.lane.b32.xlu0 %v1417, 96
    %v2428 = vpop.permute.xlu0 %2427
    %2429 = vrot.lane.b32.xlu0 %v1418, 96
    %v2430 = vpop.permute.xlu0 %2429
    %2431 = vrot.lane.b32.xlu0 %v1419, 96
    %v2432 = vpop.permute.xlu0 %2431
    %2433 = vrot.lane.b32.xlu0 %v1420, 96
    %v2434 = vpop.permute.xlu0 %2433
    %2435 = vrot.lane.b32.xlu0 %v1421, 96
    %v2436 = vpop.permute.xlu0 %2435
    %2437 = vrot.lane.b32.xlu0 %v1422, 96
    %v2438 = vpop.permute.xlu0 %2437
    %2439 = vrot.lane.b32.xlu0 %v1423, 96
    %v2440 = vpop.permute.xlu0 %2439
    %2441 = vrot.lane.b32.xlu0 %v1424, 96
    %v2442 = vpop.permute.xlu0 %2441
    %2443 = vrot.lane.b32.xlu0 %v1425, 96
    %v2444 = vpop.permute.xlu0 %2443
    %2445 = vrot.lane.b32.xlu0 %v1426, 96
    %v2446 = vpop.permute.xlu0 %2445
    %2447 = vrot.lane.b32.xlu0 %v1427, 96
    %v2448 = vpop.permute.xlu0 %2447
    %2449 = vrot.lane.b32.xlu0 %v1428, 96
    %v2450 = vpop.permute.xlu0 %2449
    %2451 = vrot.lane.b32.xlu0 %v1429, 96
    %v2452 = vpop.permute.xlu0 %2451
    %2453 = vrot.lane.b32.xlu0 %v1430, 96
    %v2454 = vpop.permute.xlu0 %2453
    %2455 = vrot.lane.b32.xlu0 %v1431, 96
    %v2456 = vpop.permute.xlu0 %2455
    %2585 = vrot.lane.b32.xlu0 %v1496, 32
    %v2586 = vpop.permute.xlu0 %2585
    %2587 = vrot.lane.b32.xlu0 %v1497, 32
    %v2588 = vpop.permute.xlu0 %2587
    %2589 = vrot.lane.b32.xlu0 %v1498, 32
    %v2590 = vpop.permute.xlu0 %2589
    %2591 = vrot.lane.b32.xlu0 %v1499, 32
    %v2592 = vpop.permute.xlu0 %2591
    %2593 = vrot.lane.b32.xlu0 %v1500, 32
    %v2594 = vpop.permute.xlu0 %2593
    %2595 = vrot.lane.b32.xlu0 %v1501, 32
    %v2596 = vpop.permute.xlu0 %2595
    %2597 = vrot.lane.b32.xlu0 %v1502, 32
    %v2598 = vpop.permute.xlu0 %2597
    %2599 = vrot.lane.b32.xlu0 %v1503, 32
    %v2600 = vpop.permute.xlu0 %2599
    %2601 = vrot.lane.b32.xlu0 %v1504, 32
    %v2602 = vpop.permute.xlu0 %2601
    %2603 = vrot.lane.b32.xlu0 %v1505, 32
    %v2604 = vpop.permute.xlu0 %2603
    %2605 = vrot.lane.b32.xlu0 %v1506, 32
    %v2606 = vpop.permute.xlu0 %2605
    %2607 = vrot.lane.b32.xlu0 %v1507, 32
    %v2608 = vpop.permute.xlu0 %2607
    %2609 = vrot.lane.b32.xlu0 %v1508, 32
    %v2610 = vpop.permute.xlu0 %2609
    %2611 = vrot.lane.b32.xlu0 %v1509, 32
    %v2612 = vpop.permute.xlu0 %2611
    %2613 = vrot.lane.b32.xlu0 %v1510, 32
    %v2614 = vpop.permute.xlu0 %2613
    %2615 = vrot.lane.b32.xlu0 %v1511, 32
    %v2616 = vpop.permute.xlu0 %2615
    %2617 = vrot.lane.b32.xlu0 %v1512, 32
    %v2618 = vpop.permute.xlu0 %2617
    %2619 = vrot.lane.b32.xlu0 %v1513, 32
    %v2620 = vpop.permute.xlu0 %2619
    %2621 = vrot.lane.b32.xlu0 %v1514, 32
    %v2622 = vpop.permute.xlu0 %2621
    %2623 = vrot.lane.b32.xlu0 %v1515, 32
    %v2624 = vpop.permute.xlu0 %2623
    %2625 = vrot.lane.b32.xlu0 %v1516, 32
    %v2626 = vpop.permute.xlu0 %2625
    %2627 = vrot.lane.b32.xlu0 %v1517, 32
    %v2628 = vpop.permute.xlu0 %2627
    %2629 = vrot.lane.b32.xlu0 %v1518, 32
    %v2630 = vpop.permute.xlu0 %2629
    %2631 = vrot.lane.b32.xlu0 %v1519, 32
    %v2632 = vpop.permute.xlu0 %2631
    %2633 = vrot.lane.b32.xlu0 %v1520, 32
    %v2634 = vpop.permute.xlu0 %2633
    %2635 = vrot.lane.b32.xlu0 %v1521, 32
    %v2636 = vpop.permute.xlu0 %2635
    %2637 = vrot.lane.b32.xlu0 %v1522, 32
    %v2638 = vpop.permute.xlu0 %2637
    %2639 = vrot.lane.b32.xlu0 %v1523, 32
    %v2640 = vpop.permute.xlu0 %2639
    %2641 = vrot.lane.b32.xlu0 %v1524, 32
    %v2642 = vpop.permute.xlu0 %2641
    %2643 = vrot.lane.b32.xlu0 %v1525, 32
    %v2644 = vpop.permute.xlu0 %2643
    %2645 = vrot.lane.b32.xlu0 %v1526, 32
    %v2646 = vpop.permute.xlu0 %2645
    %2647 = vrot.lane.b32.xlu0 %v1527, 32
    %v2648 = vpop.permute.xlu0 %2647
    %2649 = vrot.lane.b32.xlu0 %v1528, 32
    %v2650 = vpop.permute.xlu0 %2649
    %2651 = vrot.lane.b32.xlu0 %v1529, 32
    %v2652 = vpop.permute.xlu0 %2651
    %2653 = vrot.lane.b32.xlu0 %v1530, 32
    %v2654 = vpop.permute.xlu0 %2653
    %2655 = vrot.lane.b32.xlu0 %v1531, 32
    %v2656 = vpop.permute.xlu0 %2655
    %2657 = vrot.lane.b32.xlu0 %v1532, 32
    %v2658 = vpop.permute.xlu0 %2657
    %2659 = vrot.lane.b32.xlu0 %v1533, 32
    %v2660 = vpop.permute.xlu0 %2659
    %2661 = vrot.lane.b32.xlu0 %v1534, 32
    %v2662 = vpop.permute.xlu0 %2661
    %2663 = vrot.lane.b32.xlu0 %v1535, 32
    %v2664 = vpop.permute.xlu0 %2663
    %2665 = vrot.lane.b32.xlu0 %v1536, 32
    %v2666 = vpop.permute.xlu0 %2665
    %2667 = vrot.lane.b32.xlu0 %v1537, 32
    %v2668 = vpop.permute.xlu0 %2667
    %2669 = vrot.lane.b32.xlu0 %v1538, 32
    %v2670 = vpop.permute.xlu0 %2669
    %2671 = vrot.lane.b32.xlu0 %v1539, 32
    %v2672 = vpop.permute.xlu0 %2671
    %2673 = vrot.lane.b32.xlu0 %v1540, 32
    %v2674 = vpop.permute.xlu0 %2673
    %2675 = vrot.lane.b32.xlu0 %v1541, 32
    %v2676 = vpop.permute.xlu0 %2675
    %2677 = vrot.lane.b32.xlu0 %v1542, 32
    %v2678 = vpop.permute.xlu0 %2677
    %2679 = vrot.lane.b32.xlu0 %v1543, 32
    %v2680 = vpop.permute.xlu0 %2679
    %2681 = vrot.lane.b32.xlu0 %v1544, 32
    %v2682 = vpop.permute.xlu0 %2681
    %2683 = vrot.lane.b32.xlu0 %v1545, 32
    %v2684 = vpop.permute.xlu0 %2683
    %2685 = vrot.lane.b32.xlu0 %v1546, 32
    %v2686 = vpop.permute.xlu0 %2685
    %2687 = vrot.lane.b32.xlu0 %v1547, 32
    %v2688 = vpop.permute.xlu0 %2687
    %2689 = vrot.lane.b32.xlu0 %v1548, 32
    %v2690 = vpop.permute.xlu0 %2689
    %2691 = vrot.lane.b32.xlu0 %v1549, 32
    %v2692 = vpop.permute.xlu0 %2691
    %2693 = vrot.lane.b32.xlu0 %v1550, 32
    %v2694 = vpop.permute.xlu0 %2693
    %2695 = vrot.lane.b32.xlu0 %v1551, 32
    %v2696 = vpop.permute.xlu0 %2695
    %2697 = vrot.lane.b32.xlu0 %v1552, 32
    %v2698 = vpop.permute.xlu0 %2697
    %2699 = vrot.lane.b32.xlu0 %v1553, 32
    %v2700 = vpop.permute.xlu0 %2699
    %2701 = vrot.lane.b32.xlu0 %v1554, 32
    %v2702 = vpop.permute.xlu0 %2701
    %2703 = vrot.lane.b32.xlu0 %v1555, 32
    %v2704 = vpop.permute.xlu0 %2703
    %2705 = vrot.lane.b32.xlu0 %v1556, 32
    %v2706 = vpop.permute.xlu0 %2705
    %2707 = vrot.lane.b32.xlu0 %v1557, 32
    %v2708 = vpop.permute.xlu0 %2707
    %2709 = vrot.lane.b32.xlu0 %v1558, 32
    %v2710 = vpop.permute.xlu0 %2709
    %2711 = vrot.lane.b32.xlu0 %v1559, 32
    %v2712 = vpop.permute.xlu0 %2711
    %2841 = vrot.lane.b32.xlu0 %v1561, 64
    %v2842 = vpop.permute.xlu0 %2841
    %2843 = vrot.lane.b32.xlu0 %v1562, 64
    %v2844 = vpop.permute.xlu0 %2843
    %2845 = vrot.lane.b32.xlu0 %v1563, 64
    %v2846 = vpop.permute.xlu0 %2845
    %2847 = vrot.lane.b32.xlu0 %v1564, 64
    %v2848 = vpop.permute.xlu0 %2847
    %2849 = vrot.lane.b32.xlu0 %v1565, 64
    %v2850 = vpop.permute.xlu0 %2849
    %2851 = vrot.lane.b32.xlu0 %v1566, 64
    %v2852 = vpop.permute.xlu0 %2851
    %2853 = vrot.lane.b32.xlu0 %v1567, 64
    %v2854 = vpop.permute.xlu0 %2853
    %2855 = vrot.lane.b32.xlu0 %v1568, 64
    %v2856 = vpop.permute.xlu0 %2855
    %2857 = vrot.lane.b32.xlu0 %v1569, 64
    %v2858 = vpop.permute.xlu0 %2857
    %2859 = vrot.lane.b32.xlu0 %v1570, 64
    %v2860 = vpop.permute.xlu0 %2859
    %2861 = vrot.lane.b32.xlu0 %v1571, 64
    %v2862 = vpop.permute.xlu0 %2861
    %2863 = vrot.lane.b32.xlu0 %v1572, 64
    %v2864 = vpop.permute.xlu0 %2863
    %2865 = vrot.lane.b32.xlu0 %v1573, 64
    %v2866 = vpop.permute.xlu0 %2865
    %2867 = vrot.lane.b32.xlu0 %v1574, 64
    %v2868 = vpop.permute.xlu0 %2867
    %2869 = vrot.lane.b32.xlu0 %v1575, 64
    %v2870 = vpop.permute.xlu0 %2869
    %2871 = vrot.lane.b32.xlu0 %v1576, 64
    %v2872 = vpop.permute.xlu0 %2871
    %2873 = vrot.lane.b32.xlu0 %v1577, 64
    %v2874 = vpop.permute.xlu0 %2873
    %2875 = vrot.lane.b32.xlu0 %v1578, 64
    %v2876 = vpop.permute.xlu0 %2875
    %2877 = vrot.lane.b32.xlu0 %v1579, 64
    %v2878 = vpop.permute.xlu0 %2877
    %2879 = vrot.lane.b32.xlu0 %v1580, 64
    %v2880 = vpop.permute.xlu0 %2879
    %2881 = vrot.lane.b32.xlu0 %v1581, 64
    %v2882 = vpop.permute.xlu0 %2881
    %2883 = vrot.lane.b32.xlu0 %v1582, 64
    %v2884 = vpop.permute.xlu0 %2883
    %2885 = vrot.lane.b32.xlu0 %v1583, 64
    %v2886 = vpop.permute.xlu0 %2885
    %2887 = vrot.lane.b32.xlu0 %v1584, 64
    %v2888 = vpop.permute.xlu0 %2887
    %2889 = vrot.lane.b32.xlu0 %v1585, 64
    %v2890 = vpop.permute.xlu0 %2889
    %2891 = vrot.lane.b32.xlu0 %v1586, 64
    %v2892 = vpop.permute.xlu0 %2891
    %2893 = vrot.lane.b32.xlu0 %v1587, 64
    %v2894 = vpop.permute.xlu0 %2893
    %2895 = vrot.lane.b32.xlu0 %v1588, 64
    %v2896 = vpop.permute.xlu0 %2895
    %2897 = vrot.lane.b32.xlu0 %v1589, 64
    %v2898 = vpop.permute.xlu0 %2897
    %2899 = vrot.lane.b32.xlu0 %v1590, 64
    %v2900 = vpop.permute.xlu0 %2899
    %2901 = vrot.lane.b32.xlu0 %v1591, 64
    %v2902 = vpop.permute.xlu0 %2901
    %2903 = vrot.lane.b32.xlu0 %v1592, 64
    %v2904 = vpop.permute.xlu0 %2903
    %2905 = vrot.lane.b32.xlu0 %v1593, 64
    %v2906 = vpop.permute.xlu0 %2905
    %2907 = vrot.lane.b32.xlu0 %v1594, 64
    %v2908 = vpop.permute.xlu0 %2907
    %2909 = vrot.lane.b32.xlu0 %v1595, 64
    %v2910 = vpop.permute.xlu0 %2909
    %2911 = vrot.lane.b32.xlu0 %v1596, 64
    %v2912 = vpop.permute.xlu0 %2911
    %2913 = vrot.lane.b32.xlu0 %v1597, 64
    %v2914 = vpop.permute.xlu0 %2913
    %2915 = vrot.lane.b32.xlu0 %v1598, 64
    %v2916 = vpop.permute.xlu0 %2915
    %2917 = vrot.lane.b32.xlu0 %v1599, 64
    %v2918 = vpop.permute.xlu0 %2917
    %2919 = vrot.lane.b32.xlu0 %v1600, 64
    %v2920 = vpop.permute.xlu0 %2919
    %2921 = vrot.lane.b32.xlu0 %v1601, 64
    %v2922 = vpop.permute.xlu0 %2921
    %2923 = vrot.lane.b32.xlu0 %v1602, 64
    %v2924 = vpop.permute.xlu0 %2923
    %2925 = vrot.lane.b32.xlu0 %v1603, 64
    %v2926 = vpop.permute.xlu0 %2925
    %2927 = vrot.lane.b32.xlu0 %v1604, 64
    %v2928 = vpop.permute.xlu0 %2927
    %2929 = vrot.lane.b32.xlu0 %v1605, 64
    %v2930 = vpop.permute.xlu0 %2929
    %2931 = vrot.lane.b32.xlu0 %v1606, 64
    %v2932 = vpop.permute.xlu0 %2931
    %2933 = vrot.lane.b32.xlu0 %v1607, 64
    %v2934 = vpop.permute.xlu0 %2933
    %2935 = vrot.lane.b32.xlu0 %v1608, 64
    %v2936 = vpop.permute.xlu0 %2935
    %2937 = vrot.lane.b32.xlu0 %v1609, 64
    %v2938 = vpop.permute.xlu0 %2937
    %2939 = vrot.lane.b32.xlu0 %v1610, 64
    %v2940 = vpop.permute.xlu0 %2939
    %2941 = vrot.lane.b32.xlu0 %v1611, 64
    %v2942 = vpop.permute.xlu0 %2941
    %2943 = vrot.lane.b32.xlu0 %v1612, 64
    %v2944 = vpop.permute.xlu0 %2943
    %2945 = vrot.lane.b32.xlu0 %v1613, 64
    %v2946 = vpop.permute.xlu0 %2945
    %2947 = vrot.lane.b32.xlu0 %v1614, 64
    %v2948 = vpop.permute.xlu0 %2947
    %2949 = vrot.lane.b32.xlu0 %v1615, 64
    %v2950 = vpop.permute.xlu0 %2949
    %2951 = vrot.lane.b32.xlu0 %v1616, 64
    %v2952 = vpop.permute.xlu0 %2951
    %2953 = vrot.lane.b32.xlu0 %v1617, 64
    %v2954 = vpop.permute.xlu0 %2953
    %2955 = vrot.lane.b32.xlu0 %v1618, 64
    %v2956 = vpop.permute.xlu0 %2955
    %2957 = vrot.lane.b32.xlu0 %v1619, 64
    %v2958 = vpop.permute.xlu0 %2957
    %2959 = vrot.lane.b32.xlu0 %v1620, 64
    %v2960 = vpop.permute.xlu0 %2959
    %2961 = vrot.lane.b32.xlu0 %v1621, 64
    %v2962 = vpop.permute.xlu0 %2961
    %2963 = vrot.lane.b32.xlu0 %v1622, 64
    %v2964 = vpop.permute.xlu0 %2963
    %2965 = vrot.lane.b32.xlu0 %v1623, 64
    %v2966 = vpop.permute.xlu0 %2965
    %2967 = vrot.lane.b32.xlu0 %v1624, 64
    %v2968 = vpop.permute.xlu0 %2967
    %3097 = vrot.lane.b32.xlu0 %v1625, 96
    %v3098 = vpop.permute.xlu0 %3097
    %3099 = vrot.lane.b32.xlu0 %v1626, 96
    %v3100 = vpop.permute.xlu0 %3099
    %3101 = vrot.lane.b32.xlu0 %v1627, 96
    %v3102 = vpop.permute.xlu0 %3101
    %3103 = vrot.lane.b32.xlu0 %v1628, 96
    %v3104 = vpop.permute.xlu0 %3103
    %3105 = vrot.lane.b32.xlu0 %v1629, 96
    %v3106 = vpop.permute.xlu0 %3105
    %3107 = vrot.lane.b32.xlu0 %v1630, 96
    %v3108 = vpop.permute.xlu0 %3107
    %3109 = vrot.lane.b32.xlu0 %v1631, 96
    %v3110 = vpop.permute.xlu0 %3109
    %3111 = vrot.lane.b32.xlu0 %v1632, 96
    %v3112 = vpop.permute.xlu0 %3111
    %3113 = vrot.lane.b32.xlu0 %v1633, 96
    %v3114 = vpop.permute.xlu0 %3113
    %3115 = vrot.lane.b32.xlu0 %v1634, 96
    %v3116 = vpop.permute.xlu0 %3115
    %3117 = vrot.lane.b32.xlu0 %v1635, 96
    %v3118 = vpop.permute.xlu0 %3117
    %3119 = vrot.lane.b32.xlu0 %v1636, 96
    %v3120 = vpop.permute.xlu0 %3119
    %3121 = vrot.lane.b32.xlu0 %v1637, 96
    %v3122 = vpop.permute.xlu0 %3121
    %3123 = vrot.lane.b32.xlu0 %v1638, 96
    %v3124 = vpop.permute.xlu0 %3123
    %3125 = vrot.lane.b32.xlu0 %v1639, 96
    %v3126 = vpop.permute.xlu0 %3125
    %3127 = vrot.lane.b32.xlu0 %v1640, 96
    %v3128 = vpop.permute.xlu0 %3127
    %3129 = vrot.lane.b32.xlu0 %v1641, 96
    %v3130 = vpop.permute.xlu0 %3129
    %3131 = vrot.lane.b32.xlu0 %v1642, 96
    %v3132 = vpop.permute.xlu0 %3131
    %3133 = vrot.lane.b32.xlu0 %v1643, 96
    %v3134 = vpop.permute.xlu0 %3133
    %3135 = vrot.lane.b32.xlu0 %v1644, 96
    %v3136 = vpop.permute.xlu0 %3135
    %3137 = vrot.lane.b32.xlu0 %v1645, 96
    %v3138 = vpop.permute.xlu0 %3137
    %3139 = vrot.lane.b32.xlu0 %v1646, 96
    %v3140 = vpop.permute.xlu0 %3139
    %3141 = vrot.lane.b32.xlu0 %v1647, 96
    %v3142 = vpop.permute.xlu0 %3141
    %3143 = vrot.lane.b32.xlu0 %v1648, 96
    %v3144 = vpop.permute.xlu0 %3143
    %3145 = vrot.lane.b32.xlu0 %v1649, 96
    %v3146 = vpop.permute.xlu0 %3145
    %3147 = vrot.lane.b32.xlu0 %v1650, 96
    %v3148 = vpop.permute.xlu0 %3147
    %3149 = vrot.lane.b32.xlu0 %v1651, 96
    %v3150 = vpop.permute.xlu0 %3149
    %3151 = vrot.lane.b32.xlu0 %v1652, 96
    %v3152 = vpop.permute.xlu0 %3151
    %3153 = vrot.lane.b32.xlu0 %v1653, 96
    %v3154 = vpop.permute.xlu0 %3153
    %3155 = vrot.lane.b32.xlu0 %v1654, 96
    %v3156 = vpop.permute.xlu0 %3155
    %3157 = vrot.lane.b32.xlu0 %v1655, 96
    %v3158 = vpop.permute.xlu0 %3157
    %3159 = vrot.lane.b32.xlu0 %v1656, 96
    %v3160 = vpop.permute.xlu0 %3159
    %3161 = vrot.lane.b32.xlu0 %v1657, 96
    %v3162 = vpop.permute.xlu0 %3161
    %3163 = vrot.lane.b32.xlu0 %v1658, 96
    %v3164 = vpop.permute.xlu0 %3163
    %3165 = vrot.lane.b32.xlu0 %v1659, 96
    %v3166 = vpop.permute.xlu0 %3165
    %3167 = vrot.lane.b32.xlu0 %v1660, 96
    %v3168 = vpop.permute.xlu0 %3167
    %3169 = vrot.lane.b32.xlu0 %v1661, 96
    %v3170 = vpop.permute.xlu0 %3169
    %3171 = vrot.lane.b32.xlu0 %v1662, 96
    %v3172 = vpop.permute.xlu0 %3171
    %3173 = vrot.lane.b32.xlu0 %v1663, 96
    %v3174 = vpop.permute.xlu0 %3173
    %3175 = vrot.lane.b32.xlu0 %v1664, 96
    %v3176 = vpop.permute.xlu0 %3175
    %3177 = vrot.lane.b32.xlu0 %v1665, 96
    %v3178 = vpop.permute.xlu0 %3177
    %3179 = vrot.lane.b32.xlu0 %v1666, 96
    %v3180 = vpop.permute.xlu0 %3179
    %3181 = vrot.lane.b32.xlu0 %v1667, 96
    %v3182 = vpop.permute.xlu0 %3181
    %3183 = vrot.lane.b32.xlu0 %v1668, 96
    %v3184 = vpop.permute.xlu0 %3183
    %3185 = vrot.lane.b32.xlu0 %v1669, 96
    %v3186 = vpop.permute.xlu0 %3185
    %3187 = vrot.lane.b32.xlu0 %v1670, 96
    %v3188 = vpop.permute.xlu0 %3187
    %3189 = vrot.lane.b32.xlu0 %v1671, 96
    %v3190 = vpop.permute.xlu0 %3189
    %3191 = vrot.lane.b32.xlu0 %v1672, 96
    %v3192 = vpop.permute.xlu0 %3191
    %3193 = vrot.lane.b32.xlu0 %v1673, 96
    %v3194 = vpop.permute.xlu0 %3193
    %3195 = vrot.lane.b32.xlu0 %v1674, 96
    %v3196 = vpop.permute.xlu0 %3195
    %3197 = vrot.lane.b32.xlu0 %v1675, 96
    %v3198 = vpop.permute.xlu0 %3197
    %3199 = vrot.lane.b32.xlu0 %v1676, 96
    %v3200 = vpop.permute.xlu0 %3199
    %3201 = vrot.lane.b32.xlu0 %v1677, 96
    %v3202 = vpop.permute.xlu0 %3201
    %3203 = vrot.lane.b32.xlu0 %v1678, 96
    %v3204 = vpop.permute.xlu0 %3203
    %3205 = vrot.lane.b32.xlu0 %v1679, 96
    %v3206 = vpop.permute.xlu0 %3205
    %3207 = vrot.lane.b32.xlu0 %v1680, 96
    %v3208 = vpop.permute.xlu0 %3207
    %3209 = vrot.lane.b32.xlu0 %v1681, 96
    %v3210 = vpop.permute.xlu0 %3209
    %3211 = vrot.lane.b32.xlu0 %v1682, 96
    %v3212 = vpop.permute.xlu0 %3211
    %3213 = vrot.lane.b32.xlu0 %v1683, 96
    %v3214 = vpop.permute.xlu0 %3213
    %3215 = vrot.lane.b32.xlu0 %v1684, 96
    %v3216 = vpop.permute.xlu0 %3215
    %3217 = vrot.lane.b32.xlu0 %v1685, 96
    %v3218 = vpop.permute.xlu0 %3217
    %3219 = vrot.lane.b32.xlu0 %v1686, 96
    %v3220 = vpop.permute.xlu0 %3219
    %3221 = vrot.lane.b32.xlu0 %v1687, 96
    %v3222 = vpop.permute.xlu0 %3221
    %3223 = vrot.lane.b32.xlu0 %v1688, 96
    %v3224 = vpop.permute.xlu0 %3223
    %v3289 = vsel %vm358, %v1176, %v1818
    %v3290 = vsel %vm358, %v1177, %v1820
    %v3291 = vsel %vm358, %v1178, %v1822
    %v3292 = vsel %vm358, %v1179, %v1824
    %v3293 = vsel %vm358, %v1180, %v1826
    %v3294 = vsel %vm358, %v1181, %v1828
    %v3295 = vsel %vm358, %v1182, %v1830
    %v3296 = vsel %vm358, %v1183, %v1832
    %v3297 = vsel %vm358, %v1184, %v1834
    %v3298 = vsel %vm358, %v1185, %v1836
    %v3299 = vsel %vm358, %v1186, %v1838
    %v3300 = vsel %vm358, %v1187, %v1840
    %v3301 = vsel %vm358, %v1188, %v1842
    %v3302 = vsel %vm358, %v1189, %v1844
    %v3303 = vsel %vm358, %v1190, %v1846
    %v3304 = vsel %vm358, %v1191, %v1848
    %v3305 = vsel %vm358, %v1192, %v1850
    %v3306 = vsel %vm358, %v1193, %v1852
    %v3307 = vsel %vm358, %v1194, %v1854
    %v3308 = vsel %vm358, %v1195, %v1856
    %v3309 = vsel %vm358, %v1196, %v1858
    %v3310 = vsel %vm358, %v1197, %v1860
    %v3311 = vsel %vm358, %v1198, %v1862
    %v3312 = vsel %vm358, %v1199, %v1864
    %v3313 = vsel %vm358, %v1200, %v1866
    %v3314 = vsel %vm358, %v1201, %v1868
    %v3315 = vsel %vm358, %v1202, %v1870
    %v3316 = vsel %vm358, %v1203, %v1872
    %v3317 = vsel %vm358, %v1204, %v1874
    %v3318 = vsel %vm358, %v1205, %v1876
    %v3319 = vsel %vm358, %v1206, %v1878
    %v3320 = vsel %vm358, %v1207, %v1880
    %v3321 = vsel %vm358, %v1208, %v1882
    %v3322 = vsel %vm358, %v1209, %v1884
    %v3323 = vsel %vm358, %v1210, %v1886
    %v3324 = vsel %vm358, %v1211, %v1888
    %v3325 = vsel %vm358, %v1212, %v1890
    %v3326 = vsel %vm358, %v1213, %v1892
    %v3327 = vsel %vm358, %v1214, %v1894
    %v3328 = vsel %vm358, %v1215, %v1896
    %v3329 = vsel %vm358, %v1216, %v1898
    %v3330 = vsel %vm358, %v1217, %v1900
    %v3331 = vsel %vm358, %v1218, %v1902
    %v3332 = vsel %vm358, %v1219, %v1904
    %v3333 = vsel %vm358, %v1220, %v1906
    %v3334 = vsel %vm358, %v1221, %v1908
    %v3335 = vsel %vm358, %v1222, %v1910
    %v3336 = vsel %vm358, %v1223, %v1912
    %v3337 = vsel %vm358, %v1224, %v1914
    %v3338 = vsel %vm358, %v1225, %v1916
    %v3339 = vsel %vm358, %v1226, %v1918
    %v3340 = vsel %vm358, %v1227, %v1920
    %v3341 = vsel %vm358, %v1228, %v1922
    %v3342 = vsel %vm358, %v1229, %v1924
    %v3343 = vsel %vm358, %v1230, %v1926
    %v3344 = vsel %vm358, %v1231, %v1928
    %v3345 = vsel %vm358, %v1232, %v1930
    %v3346 = vsel %vm358, %v1233, %v1932
    %v3347 = vsel %vm358, %v1234, %v1934
    %v3348 = vsel %vm358, %v1235, %v1936
    %v3349 = vsel %vm358, %v1236, %v1938
    %v3350 = vsel %vm358, %v1237, %v1940
    %v3351 = vsel %vm358, %v1238, %v1942
    %v3352 = vsel %vm358, %v1239, %v1944
    %vm3353 = vcmask 523264
    %v3354 = vsel %vm3353, %v3289, %v2074
    %v3355 = vsel %vm3353, %v3290, %v2076
    %v3356 = vsel %vm3353, %v3291, %v2078
    %v3357 = vsel %vm3353, %v3292, %v2080
    %v3358 = vsel %vm3353, %v3293, %v2082
    %v3359 = vsel %vm3353, %v3294, %v2084
    %v3360 = vsel %vm3353, %v3295, %v2086
    %v3361 = vsel %vm3353, %v3296, %v2088
    %v3362 = vsel %vm3353, %v3297, %v2090
    %v3363 = vsel %vm3353, %v3298, %v2092
    %v3364 = vsel %vm3353, %v3299, %v2094
    %v3365 = vsel %vm3353, %v3300, %v2096
    %v3366 = vsel %vm3353, %v3301, %v2098
    %v3367 = vsel %vm3353, %v3302, %v2100
    %v3368 = vsel %vm3353, %v3303, %v2102
    %v3369 = vsel %vm3353, %v3304, %v2104
    %v3370 = vsel %vm3353, %v3305, %v2106
    %v3371 = vsel %vm3353, %v3306, %v2108
    %v3372 = vsel %vm3353, %v3307, %v2110
    %v3373 = vsel %vm3353, %v3308, %v2112
    %v3374 = vsel %vm3353, %v3309, %v2114
    %v3375 = vsel %vm3353, %v3310, %v2116
    %v3376 = vsel %vm3353, %v3311, %v2118
    %v3377 = vsel %vm3353, %v3312, %v2120
    %v3378 = vsel %vm3353, %v3313, %v2122
    %v3379 = vsel %vm3353, %v3314, %v2124
    %v3380 = vsel %vm3353, %v3315, %v2126
    %v3381 = vsel %vm3353, %v3316, %v2128
    %v3382 = vsel %vm3353, %v3317, %v2130
    %v3383 = vsel %vm3353, %v3318, %v2132
    %v3384 = vsel %vm3353, %v3319, %v2134
    %v3385 = vsel %vm3353, %v3320, %v2136
    %v3386 = vsel %vm3353, %v3321, %v2138
    %v3387 = vsel %vm3353, %v3322, %v2140
    %v3388 = vsel %vm3353, %v3323, %v2142
    %v3389 = vsel %vm3353, %v3324, %v2144
    %v3390 = vsel %vm3353, %v3325, %v2146
    %v3391 = vsel %vm3353, %v3326, %v2148
    %v3392 = vsel %vm3353, %v3327, %v2150
    %v3393 = vsel %vm3353, %v3328, %v2152
    %v3394 = vsel %vm3353, %v3329, %v2154
    %v3395 = vsel %vm3353, %v3330, %v2156
    %v3396 = vsel %vm3353, %v3331, %v2158
    %v3397 = vsel %vm3353, %v3332, %v2160
    %v3398 = vsel %vm3353, %v3333, %v2162
    %v3399 = vsel %vm3353, %v3334, %v2164
    %v3400 = vsel %vm3353, %v3335, %v2166
    %v3401 = vsel %vm3353, %v3336, %v2168
    %v3402 = vsel %vm3353, %v3337, %v2170
    %v3403 = vsel %vm3353, %v3338, %v2172
    %v3404 = vsel %vm3353, %v3339, %v2174
    %v3405 = vsel %vm3353, %v3340, %v2176
    %v3406 = vsel %vm3353, %v3341, %v2178
    %v3407 = vsel %vm3353, %v3342, %v2180
    %v3408 = vsel %vm3353, %v3343, %v2182
    %v3409 = vsel %vm3353, %v3344, %v2184
    %v3410 = vsel %vm3353, %v3345, %v2186
    %v3411 = vsel %vm3353, %v3346, %v2188
    %v3412 = vsel %vm3353, %v3347, %v2190
    %v3413 = vsel %vm3353, %v3348, %v2192
    %v3414 = vsel %vm3353, %v3349, %v2194
    %v3415 = vsel %vm3353, %v3350, %v2196
    %v3416 = vsel %vm3353, %v3351, %v2198
    %v3417 = vsel %vm3353, %v3352, %v2200
    %vm3418 = vcmask 785408
    %v3419 = vsel %vm3418, %v3354, %v2330
    %v3420 = vsel %vm3418, %v3355, %v2332
    %v3421 = vsel %vm3418, %v3356, %v2334
    %v3422 = vsel %vm3418, %v3357, %v2336
    %v3423 = vsel %vm3418, %v3358, %v2338
    %v3424 = vsel %vm3418, %v3359, %v2340
    %v3425 = vsel %vm3418, %v3360, %v2342
    %v3426 = vsel %vm3418, %v3361, %v2344
    %v3427 = vsel %vm3418, %v3362, %v2346
    %v3428 = vsel %vm3418, %v3363, %v2348
    %v3429 = vsel %vm3418, %v3364, %v2350
    %v3430 = vsel %vm3418, %v3365, %v2352
    %v3431 = vsel %vm3418, %v3366, %v2354
    %v3432 = vsel %vm3418, %v3367, %v2356
    %v3433 = vsel %vm3418, %v3368, %v2358
    %v3434 = vsel %vm3418, %v3369, %v2360
    %v3435 = vsel %vm3418, %v3370, %v2362
    %v3436 = vsel %vm3418, %v3371, %v2364
    %v3437 = vsel %vm3418, %v3372, %v2366
    %v3438 = vsel %vm3418, %v3373, %v2368
    %v3439 = vsel %vm3418, %v3374, %v2370
    %v3440 = vsel %vm3418, %v3375, %v2372
    %v3441 = vsel %vm3418, %v3376, %v2374
    %v3442 = vsel %vm3418, %v3377, %v2376
    %v3443 = vsel %vm3418, %v3378, %v2378
    %v3444 = vsel %vm3418, %v3379, %v2380
    %v3445 = vsel %vm3418, %v3380, %v2382
    %v3446 = vsel %vm3418, %v3381, %v2384
    %v3447 = vsel %vm3418, %v3382, %v2386
    %v3448 = vsel %vm3418, %v3383, %v2388
    %v3449 = vsel %vm3418, %v3384, %v2390
    %v3450 = vsel %vm3418, %v3385, %v2392
    %v3451 = vsel %vm3418, %v3386, %v2394
    %v3452 = vsel %vm3418, %v3387, %v2396
    %v3453 = vsel %vm3418, %v3388, %v2398
    %v3454 = vsel %vm3418, %v3389, %v2400
    %v3455 = vsel %vm3418, %v3390, %v2402
    %v3456 = vsel %vm3418, %v3391, %v2404
    %v3457 = vsel %vm3418, %v3392, %v2406
    %v3458 = vsel %vm3418, %v3393, %v2408
    %v3459 = vsel %vm3418, %v3394, %v2410
    %v3460 = vsel %vm3418, %v3395, %v2412
    %v3461 = vsel %vm3418, %v3396, %v2414
    %v3462 = vsel %vm3418, %v3397, %v2416
    %v3463 = vsel %vm3418, %v3398, %v2418
    %v3464 = vsel %vm3418, %v3399, %v2420
    %v3465 = vsel %vm3418, %v3400, %v2422
    %v3466 = vsel %vm3418, %v3401, %v2424
    %v3467 = vsel %vm3418, %v3402, %v2426
    %v3468 = vsel %vm3418, %v3403, %v2428
    %v3469 = vsel %vm3418, %v3404, %v2430
    %v3470 = vsel %vm3418, %v3405, %v2432
    %v3471 = vsel %vm3418, %v3406, %v2434
    %v3472 = vsel %vm3418, %v3407, %v2436
    %v3473 = vsel %vm3418, %v3408, %v2438
    %v3474 = vsel %vm3418, %v3409, %v2440
    %v3475 = vsel %vm3418, %v3410, %v2442
    %v3476 = vsel %vm3418, %v3411, %v2444
    %v3477 = vsel %vm3418, %v3412, %v2446
    %v3478 = vsel %vm3418, %v3413, %v2448
    %v3479 = vsel %vm3418, %v3414, %v2450
    %v3480 = vsel %vm3418, %v3415, %v2452
    %v3481 = vsel %vm3418, %v3416, %v2454
    %v3482 = vsel %vm3418, %v3417, %v2456
    %v3483 = vsel %vm358, %v1432, %v2586
    %v3484 = vsel %vm358, %v1433, %v2588
    %v3485 = vsel %vm358, %v1434, %v2590
    %v3486 = vsel %vm358, %v1435, %v2592
    %v3487 = vsel %vm358, %v1436, %v2594
    %v3488 = vsel %vm358, %v1437, %v2596
    %v3489 = vsel %vm358, %v1438, %v2598
    %v3490 = vsel %vm358, %v1439, %v2600
    %v3491 = vsel %vm358, %v1440, %v2602
    %v3492 = vsel %vm358, %v1441, %v2604
    %v3493 = vsel %vm358, %v1442, %v2606
    %v3494 = vsel %vm358, %v1443, %v2608
    %v3495 = vsel %vm358, %v1444, %v2610
    %v3496 = vsel %vm358, %v1445, %v2612
    %v3497 = vsel %vm358, %v1446, %v2614
    %v3498 = vsel %vm358, %v1447, %v2616
    %v3499 = vsel %vm358, %v1448, %v2618
    %v3500 = vsel %vm358, %v1449, %v2620
    %v3501 = vsel %vm358, %v1450, %v2622
    %v3502 = vsel %vm358, %v1451, %v2624
    %v3503 = vsel %vm358, %v1452, %v2626
    %v3504 = vsel %vm358, %v1453, %v2628
    %v3505 = vsel %vm358, %v1454, %v2630
    %v3506 = vsel %vm358, %v1455, %v2632
    %v3507 = vsel %vm358, %v1456, %v2634
    %v3508 = vsel %vm358, %v1457, %v2636
    %v3509 = vsel %vm358, %v1458, %v2638
    %v3510 = vsel %vm358, %v1459, %v2640
    %v3511 = vsel %vm358, %v1460, %v2642
    %v3512 = vsel %vm358, %v1461, %v2644
    %v3513 = vsel %vm358, %v1462, %v2646
    %v3514 = vsel %vm358, %v1463, %v2648
    %v3515 = vsel %vm358, %v1464, %v2650
    %v3516 = vsel %vm358, %v1465, %v2652
    %v3517 = vsel %vm358, %v1466, %v2654
    %v3518 = vsel %vm358, %v1467, %v2656
    %v3519 = vsel %vm358, %v1468, %v2658
    %v3520 = vsel %vm358, %v1469, %v2660
    %v3521 = vsel %vm358, %v1470, %v2662
    %v3522 = vsel %vm358, %v1471, %v2664
    %v3523 = vsel %vm358, %v1472, %v2666
    %v3524 = vsel %vm358, %v1473, %v2668
    %v3525 = vsel %vm358, %v1474, %v2670
    %v3526 = vsel %vm358, %v1475, %v2672
    %v3527 = vsel %vm358, %v1476, %v2674
    %v3528 = vsel %vm358, %v1477, %v2676
    %v3529 = vsel %vm358, %v1478, %v2678
    %v3530 = vsel %vm358, %v1479, %v2680
    %v3531 = vsel %vm358, %v1480, %v2682
    %v3532 = vsel %vm358, %v1481, %v2684
    %v3533 = vsel %vm358, %v1482, %v2686
    %v3534 = vsel %vm358, %v1483, %v2688
    %v3535 = vsel %vm358, %v1484, %v2690
    %v3536 = vsel %vm358, %v1485, %v2692
    %v3537 = vsel %vm358, %v1486, %v2694
    %v3538 = vsel %vm358, %v1487, %v2696
    %v3539 = vsel %vm358, %v1488, %v2698
    %v3540 = vsel %vm358, %v1489, %v2700
    %v3541 = vsel %vm358, %v1490, %v2702
    %v3542 = vsel %vm358, %v1491, %v2704
    %v3543 = vsel %vm358, %v1492, %v2706
    %v3544 = vsel %vm358, %v1493, %v2708
    %v3545 = vsel %vm358, %v1494, %v2710
    %v3546 = vsel %vm358, %v1495, %v2712
    %v3547 = vsel %vm3353, %v3483, %v2842
    %v3548 = vsel %vm3353, %v3484, %v2844
    %v3549 = vsel %vm3353, %v3485, %v2846
    %v3550 = vsel %vm3353, %v3486, %v2848
    %v3551 = vsel %vm3353, %v3487, %v2850
    %v3552 = vsel %vm3353, %v3488, %v2852
    %v3553 = vsel %vm3353, %v3489, %v2854
    %v3554 = vsel %vm3353, %v3490, %v2856
    %v3555 = vsel %vm3353, %v3491, %v2858
    %v3556 = vsel %vm3353, %v3492, %v2860
    %v3557 = vsel %vm3353, %v3493, %v2862
    %v3558 = vsel %vm3353, %v3494, %v2864
    %v3559 = vsel %vm3353, %v3495, %v2866
    %v3560 = vsel %vm3353, %v3496, %v2868
    %v3561 = vsel %vm3353, %v3497, %v2870
    %v3562 = vsel %vm3353, %v3498, %v2872
    %v3563 = vsel %vm3353, %v3499, %v2874
    %v3564 = vsel %vm3353, %v3500, %v2876
    %v3565 = vsel %vm3353, %v3501, %v2878
    %v3566 = vsel %vm3353, %v3502, %v2880
    %v3567 = vsel %vm3353, %v3503, %v2882
    %v3568 = vsel %vm3353, %v3504, %v2884
    %v3569 = vsel %vm3353, %v3505, %v2886
    %v3570 = vsel %vm3353, %v3506, %v2888
    %v3571 = vsel %vm3353, %v3507, %v2890
    %v3572 = vsel %vm3353, %v3508, %v2892
    %v3573 = vsel %vm3353, %v3509, %v2894
    %v3574 = vsel %vm3353, %v3510, %v2896
    %v3575 = vsel %vm3353, %v3511, %v2898
    %v3576 = vsel %vm3353, %v3512, %v2900
    %v3577 = vsel %vm3353, %v3513, %v2902
    %v3578 = vsel %vm3353, %v3514, %v2904
    %v3579 = vsel %vm3353, %v3515, %v2906
    %v3580 = vsel %vm3353, %v3516, %v2908
    %v3581 = vsel %vm3353, %v3517, %v2910
    %v3582 = vsel %vm3353, %v3518, %v2912
    %v3583 = vsel %vm3353, %v3519, %v2914
    %v3584 = vsel %vm3353, %v3520, %v2916
    %v3585 = vsel %vm3353, %v3521, %v2918
    %v3586 = vsel %vm3353, %v3522, %v2920
    %v3587 = vsel %vm3353, %v3523, %v2922
    %v3588 = vsel %vm3353, %v3524, %v2924
    %v3589 = vsel %vm3353, %v3525, %v2926
    %v3590 = vsel %vm3353, %v3526, %v2928
    %v3591 = vsel %vm3353, %v3527, %v2930
    %v3592 = vsel %vm3353, %v3528, %v2932
    %v3593 = vsel %vm3353, %v3529, %v2934
    %v3594 = vsel %vm3353, %v3530, %v2936
    %v3595 = vsel %vm3353, %v3531, %v2938
    %v3596 = vsel %vm3353, %v3532, %v2940
    %v3597 = vsel %vm3353, %v3533, %v2942
    %v3598 = vsel %vm3353, %v3534, %v2944
    %v3599 = vsel %vm3353, %v3535, %v2946
    %v3600 = vsel %vm3353, %v3536, %v2948
    %v3601 = vsel %vm3353, %v3537, %v2950
    %v3602 = vsel %vm3353, %v3538, %v2952
    %v3603 = vsel %vm3353, %v3539, %v2954
    %v3604 = vsel %vm3353, %v3540, %v2956
    %v3605 = vsel %vm3353, %v3541, %v2958
    %v3606 = vsel %vm3353, %v3542, %v2960
    %v3607 = vsel %vm3353, %v3543, %v2962
    %v3608 = vsel %vm3353, %v3544, %v2964
    %v3609 = vsel %vm3353, %v3545, %v2966
    %v3610 = vsel %vm3353, %v3546, %v2968
    %v3611 = vsel %vm3418, %v3547, %v3098
    %v3612 = vsel %vm3418, %v3548, %v3100
    %v3613 = vsel %vm3418, %v3549, %v3102
    %v3614 = vsel %vm3418, %v3550, %v3104
    %v3615 = vsel %vm3418, %v3551, %v3106
    %v3616 = vsel %vm3418, %v3552, %v3108
    %v3617 = vsel %vm3418, %v3553, %v3110
    %v3618 = vsel %vm3418, %v3554, %v3112
    %v3619 = vsel %vm3418, %v3555, %v3114
    %v3620 = vsel %vm3418, %v3556, %v3116
    %v3621 = vsel %vm3418, %v3557, %v3118
    %v3622 = vsel %vm3418, %v3558, %v3120
    %v3623 = vsel %vm3418, %v3559, %v3122
    %v3624 = vsel %vm3418, %v3560, %v3124
    %v3625 = vsel %vm3418, %v3561, %v3126
    %v3626 = vsel %vm3418, %v3562, %v3128
    %v3627 = vsel %vm3418, %v3563, %v3130
    %v3628 = vsel %vm3418, %v3564, %v3132
    %v3629 = vsel %vm3418, %v3565, %v3134
    %v3630 = vsel %vm3418, %v3566, %v3136
    %v3631 = vsel %vm3418, %v3567, %v3138
    %v3632 = vsel %vm3418, %v3568, %v3140
    %v3633 = vsel %vm3418, %v3569, %v3142
    %v3634 = vsel %vm3418, %v3570, %v3144
    %v3635 = vsel %vm3418, %v3571, %v3146
    %v3636 = vsel %vm3418, %v3572, %v3148
    %v3637 = vsel %vm3418, %v3573, %v3150
    %v3638 = vsel %vm3418, %v3574, %v3152
    %v3639 = vsel %vm3418, %v3575, %v3154
    %v3640 = vsel %vm3418, %v3576, %v3156
    %v3641 = vsel %vm3418, %v3577, %v3158
    %v3642 = vsel %vm3418, %v3578, %v3160
    %v3643 = vsel %vm3418, %v3579, %v3162
    %v3644 = vsel %vm3418, %v3580, %v3164
    %v3645 = vsel %vm3418, %v3581, %v3166
    %v3646 = vsel %vm3418, %v3582, %v3168
    %v3647 = vsel %vm3418, %v3583, %v3170
    %v3648 = vsel %vm3418, %v3584, %v3172
    %v3649 = vsel %vm3418, %v3585, %v3174
    %v3650 = vsel %vm3418, %v3586, %v3176
    %v3651 = vsel %vm3418, %v3587, %v3178
    %v3652 = vsel %vm3418, %v3588, %v3180
    %v3653 = vsel %vm3418, %v3589, %v3182
    %v3654 = vsel %vm3418, %v3590, %v3184
    %v3655 = vsel %vm3418, %v3591, %v3186
    %v3656 = vsel %vm3418, %v3592, %v3188
    %v3657 = vsel %vm3418, %v3593, %v3190
    %v3658 = vsel %vm3418, %v3594, %v3192
    %v3659 = vsel %vm3418, %v3595, %v3194
    %v3660 = vsel %vm3418, %v3596, %v3196
    %v3661 = vsel %vm3418, %v3597, %v3198
    %v3662 = vsel %vm3418, %v3598, %v3200
    %v3663 = vsel %vm3418, %v3599, %v3202
    %v3664 = vsel %vm3418, %v3600, %v3204
    %v3665 = vsel %vm3418, %v3601, %v3206
    %v3666 = vsel %vm3418, %v3602, %v3208
    %v3667 = vsel %vm3418, %v3603, %v3210
    %v3668 = vsel %vm3418, %v3604, %v3212
    %v3669 = vsel %vm3418, %v3605, %v3214
    %v3670 = vsel %vm3418, %v3606, %v3216
    %v3671 = vsel %vm3418, %v3607, %v3218
    %v3672 = vsel %vm3418, %v3608, %v3220
    %v3673 = vsel %vm3418, %v3609, %v3222
    %v3674 = vsel %vm3418, %v3610, %v3224
    %v3675 = vld [vmem:[%s7] sm:$0xff]
    %v3676 = vld [vmem:[%s7 + $0x8] sm:$0xff]
    %v3677 = vld [vmem:[%s7 + $0x10] sm:$0xff]
    %v3678 = vld [vmem:[%s7 + $0x18] sm:$0xff]
    %v3679 = vld [vmem:[%s7 + $0x20] sm:$0xff]
    %v3680 = vld [vmem:[%s7 + $0x28] sm:$0xff]
    %v3681 = vld [vmem:[%s7 + $0x30] sm:$0xff]
    %v3682 = vld [vmem:[%s7 + $0x38] sm:$0xff]
    %v3683 = vld [vmem:[%s7 + $0x40] sm:$0xff]
    %v3684 = vld [vmem:[%s7 + $0x48] sm:$0xff]
    %v3685 = vld [vmem:[%s7 + $0x50] sm:$0xff]
    %v3686 = vld [vmem:[%s7 + $0x58] sm:$0xff]
    %v3687 = vld [vmem:[%s7 + $0x60] sm:$0xff]
    %v3688 = vld [vmem:[%s7 + $0x68] sm:$0xff]
    %v3689 = vld [vmem:[%s7 + $0x70] sm:$0xff]
    %v3690 = vld [vmem:[%s7 + $0x78] sm:$0xff]
    %v3691 = vld [vmem:[%s7 + $0x80] sm:$0xff]
    %v3692 = vld [vmem:[%s7 + $0x88] sm:$0xff]
    %v3693 = vld [vmem:[%s7 + $0x90] sm:$0xff]
    %v3694 = vld [vmem:[%s7 + $0x98] sm:$0xff]
    %v3695 = vld [vmem:[%s7 + $0xa0] sm:$0xff]
    %v3696 = vld [vmem:[%s7 + $0xa8] sm:$0xff]
    %v3697 = vld [vmem:[%s7 + $0xb0] sm:$0xff]
    %v3698 = vld [vmem:[%s7 + $0xb8] sm:$0xff]
    %v3699 = vld [vmem:[%s7 + $0xc0] sm:$0xff]
    %v3700 = vld [vmem:[%s7 + $0xc8] sm:$0xff]
    %v3701 = vld [vmem:[%s7 + $0xd0] sm:$0xff]
    %v3702 = vld [vmem:[%s7 + $0xd8] sm:$0xff]
    %v3703 = vld [vmem:[%s7 + $0xe0] sm:$0xff]
    %v3704 = vld [vmem:[%s7 + $0xe8] sm:$0xff]
    %v3705 = vld [vmem:[%s7 + $0xf0] sm:$0xff]
    %v3706 = vld [vmem:[%s7 + $0xf8] sm:$0xff]
    %v3707 = vld [vmem:[%s7 + $0x100] sm:$0xff]
    %v3708 = vld [vmem:[%s7 + $0x108] sm:$0xff]
    %v3709 = vld [vmem:[%s7 + $0x110] sm:$0xff]
    %v3710 = vld [vmem:[%s7 + $0x118] sm:$0xff]
    %v3711 = vld [vmem:[%s8] sm:$0x1]
    %v3713 = vperm.slane %v3711, 0
    %v3716 = vsel %vm358, %v1689, 0
    %v3719 = vsel %vm358, %v1690, 0
    %v3722 = vsel %vm358, %v1691, 0
    %v3725 = vsel %vm358, %v1692, 0
    %v3728 = vsel %vm358, %v1693, 0
    %v3731 = vsel %vm358, %v1694, 0
    %v3734 = vsel %vm358, %v1695, 0
    %v3737 = vsel %vm358, %v1696, 0
    %v3740 = vsel %vm358, %v1697, 0
    %v3743 = vsel %vm358, %v1698, 0
    %v3746 = vsel %vm358, %v1699, 0
    %v3749 = vsel %vm358, %v1700, 0
    %v3752 = vsel %vm358, %v1701, 0
    %v3755 = vsel %vm358, %v1702, 0
    %v3758 = vsel %vm358, %v1703, 0
    %v3761 = vsel %vm358, %v1704, 0
    %v3764 = vsel %vm358, %v1705, 0
    %v3767 = vsel %vm358, %v1706, 0
    %v3770 = vsel %vm358, %v1707, 0
    %v3773 = vsel %vm358, %v1708, 0
    %v3776 = vsel %vm358, %v1709, 0
    %v3779 = vsel %vm358, %v1710, 0
    %v3782 = vsel %vm358, %v1711, 0
    %v3785 = vsel %vm358, %v1712, 0
    %v3788 = vsel %vm358, %v1713, 0
    %v3791 = vsel %vm358, %v1714, 0
    %v3794 = vsel %vm358, %v1715, 0
    %v3797 = vsel %vm358, %v1716, 0
    %v3800 = vsel %vm358, %v1717, 0
    %v3803 = vsel %vm358, %v1718, 0
    %v3806 = vsel %vm358, %v1719, 0
    %v3809 = vsel %vm358, %v1720, 0
    %v3812 = vsel %vm358, %v1721, 0
    %v3815 = vsel %vm358, %v1722, 0
    %v3818 = vsel %vm358, %v1723, 0
    %v3821 = vsel %vm358, %v1724, 0
    %v3824 = vsel %vm358, %v1725, 0
    %v3827 = vsel %vm358, %v1726, 0
    %v3830 = vsel %vm358, %v1727, 0
    %v3833 = vsel %vm358, %v1728, 0
    %v3836 = vsel %vm358, %v1729, 0
    %v3839 = vsel %vm358, %v1730, 0
    %v3842 = vsel %vm358, %v1731, 0
    %v3845 = vsel %vm358, %v1732, 0
    %v3848 = vsel %vm358, %v1733, 0
    %v3851 = vsel %vm358, %v1734, 0
    %v3854 = vsel %vm358, %v1735, 0
    %v3857 = vsel %vm358, %v1736, 0
    %v3860 = vsel %vm358, %v1737, 0
    %v3863 = vsel %vm358, %v1738, 0
    %v3866 = vsel %vm358, %v1739, 0
    %v3869 = vsel %vm358, %v1740, 0
    %v3872 = vsel %vm358, %v1741, 0
    %v3875 = vsel %vm358, %v1742, 0
    %v3878 = vsel %vm358, %v1743, 0
    %v3881 = vsel %vm358, %v1744, 0
    %v3884 = vsel %vm358, %v1745, 0
    %v3887 = vsel %vm358, %v1746, 0
    %v3890 = vsel %vm358, %v1747, 0
    %v3893 = vsel %vm358, %v1748, 0
    %v3896 = vsel %vm358, %v1749, 0
    %v3899 = vsel %vm358, %v1750, 0
    %v3902 = vsel %vm358, %v1751, 0
    %v3905 = vsel %vm358, %v1752, 0
    %3907 = vmatpush.msra.mxu0 %v3690
    %3908 = vmatpush.msra.mxu0 %v3689
    %3909 = vmatpush.msra.mxu0 %v3688
    %3910 = vmatpush.msra.mxu0 %v3687
    %3911 = vmatpush.msra.mxu0 %v3686
    %3912 = vmatpush.msra.mxu0 %v3685
    %3913 = vmatpush.msra.mxu0 %v3684
    %3914 = vmatpush.msra.mxu0 %v3683
    %3915 = vmatpush.msra.mxu0 %v3682
    %3916 = vmatpush.msra.mxu0 %v3681
    %3917 = vmatpush.msra.mxu0 %v3680
    %3918 = vmatpush.msra.mxu0 %v3679
    %3919 = vmatpush.msra.mxu0 %v3678
    %3920 = vmatpush.msra.mxu0 %v3677
    %3921 = vmatpush.msra.mxu0 %v3676
    %3922 = vmatpush.msra.mxu0 %v3675
    %3923 = vmatmul.f32.gmra.mxu0 %v3419
    %v3924 = vpop.f32.mrf.mxu0
    %v3925 = vadd.f32 %v3713, %v3924
    %3926 = vmatmul.f32.gmra.mxu0 %v3420
    %v3927 = vpop.f32.mrf.mxu0
    %v3928 = vadd.f32 %v3713, %v3927
    %3929 = vmatmul.f32.gmra.mxu0 %v3421
    %v3930 = vpop.f32.mrf.mxu0
    %v3931 = vadd.f32 %v3713, %v3930
    %3932 = vmatmul.f32.gmra.mxu0 %v3422
    %v3933 = vpop.f32.mrf.mxu0
    %v3934 = vadd.f32 %v3713, %v3933
    %3935 = vmatmul.f32.gmra.mxu0 %v3423
    %v3936 = vpop.f32.mrf.mxu0
    %v3937 = vadd.f32 %v3713, %v3936
    %3938 = vmatmul.f32.gmra.mxu0 %v3424
    %v3939 = vpop.f32.mrf.mxu0
    %v3940 = vadd.f32 %v3713, %v3939
    %3941 = vmatmul.f32.gmra.mxu0 %v3425
    %v3942 = vpop.f32.mrf.mxu0
    %v3943 = vadd.f32 %v3713, %v3942
    %3944 = vmatmul.f32.gmra.mxu0 %v3426
    %v3945 = vpop.f32.mrf.mxu0
    %v3946 = vadd.f32 %v3713, %v3945
    %3947 = vmatmul.f32.gmra.mxu0 %v3427
    %v3948 = vpop.f32.mrf.mxu0
    %v3949 = vadd.f32 %v3713, %v3948
    %3950 = vmatmul.f32.gmra.mxu0 %v3428
    %v3951 = vpop.f32.mrf.mxu0
    %v3952 = vadd.f32 %v3713, %v3951
    %3953 = vmatmul.f32.gmra.mxu0 %v3429
    %v3954 = vpop.f32.mrf.mxu0
    %v3955 = vadd.f32 %v3713, %v3954
    %3956 = vmatmul.f32.gmra.mxu0 %v3430
    %v3957 = vpop.f32.mrf.mxu0
    %v3958 = vadd.f32 %v3713, %v3957
    %3959 = vmatmul.f32.gmra.mxu0 %v3431
    %v3960 = vpop.f32.mrf.mxu0
    %v3961 = vadd.f32 %v3713, %v3960
    %3962 = vmatmul.f32.gmra.mxu0 %v3432
    %v3963 = vpop.f32.mrf.mxu0
    %v3964 = vadd.f32 %v3713, %v3963
    %3965 = vmatmul.f32.gmra.mxu0 %v3433
    %v3966 = vpop.f32.mrf.mxu0
    %v3967 = vadd.f32 %v3713, %v3966
    %3968 = vmatmul.f32.gmra.mxu0 %v3434
    %v3969 = vpop.f32.mrf.mxu0
    %v3970 = vadd.f32 %v3713, %v3969
    %3971 = vmatmul.f32.gmra.mxu0 %v3435
    %v3972 = vpop.f32.mrf.mxu0
    %v3973 = vadd.f32 %v3713, %v3972
    %3974 = vmatmul.f32.gmra.mxu0 %v3436
    %v3975 = vpop.f32.mrf.mxu0
    %v3976 = vadd.f32 %v3713, %v3975
    %3977 = vmatmul.f32.gmra.mxu0 %v3437
    %v3978 = vpop.f32.mrf.mxu0
    %v3979 = vadd.f32 %v3713, %v3978
    %3980 = vmatmul.f32.gmra.mxu0 %v3438
    %v3981 = vpop.f32.mrf.mxu0
    %v3982 = vadd.f32 %v3713, %v3981
    %3983 = vmatmul.f32.gmra.mxu0 %v3439
    %v3984 = vpop.f32.mrf.mxu0
    %v3985 = vadd.f32 %v3713, %v3984
    %3986 = vmatmul.f32.gmra.mxu0 %v3440
    %v3987 = vpop.f32.mrf.mxu0
    %v3988 = vadd.f32 %v3713, %v3987
    %3989 = vmatmul.f32.gmra.mxu0 %v3441
    %v3990 = vpop.f32.mrf.mxu0
    %v3991 = vadd.f32 %v3713, %v3990
    %3992 = vmatmul.f32.gmra.mxu0 %v3442
    %v3993 = vpop.f32.mrf.mxu0
    %v3994 = vadd.f32 %v3713, %v3993
    %3995 = vmatmul.f32.gmra.mxu0 %v3443
    %v3996 = vpop.f32.mrf.mxu0
    %v3997 = vadd.f32 %v3713, %v3996
    %3998 = vmatmul.f32.gmra.mxu0 %v3444
    %v3999 = vpop.f32.mrf.mxu0
    %v4000 = vadd.f32 %v3713, %v3999
    %4001 = vmatmul.f32.gmra.mxu0 %v3445
    %v4002 = vpop.f32.mrf.mxu0
    %v4003 = vadd.f32 %v3713, %v4002
    %4004 = vmatmul.f32.gmra.mxu0 %v3446
    %v4005 = vpop.f32.mrf.mxu0
    %v4006 = vadd.f32 %v3713, %v4005
    %4007 = vmatmul.f32.gmra.mxu0 %v3447
    %v4008 = vpop.f32.mrf.mxu0
    %v4009 = vadd.f32 %v3713, %v4008
    %4010 = vmatmul.f32.gmra.mxu0 %v3448
    %v4011 = vpop.f32.mrf.mxu0
    %v4012 = vadd.f32 %v3713, %v4011
    %4013 = vmatmul.f32.gmra.mxu0 %v3449
    %v4014 = vpop.f32.mrf.mxu0
    %v4015 = vadd.f32 %v3713, %v4014
    %4016 = vmatmul.f32.gmra.mxu0 %v3450
    %v4017 = vpop.f32.mrf.mxu0
    %v4018 = vadd.f32 %v3713, %v4017
    %4019 = vmatmul.f32.gmra.mxu0 %v3451
    %v4020 = vpop.f32.mrf.mxu0
    %v4021 = vadd.f32 %v3713, %v4020
    %4022 = vmatmul.f32.gmra.mxu0 %v3452
    %v4023 = vpop.f32.mrf.mxu0
    %v4024 = vadd.f32 %v3713, %v4023
    %4025 = vmatmul.f32.gmra.mxu0 %v3453
    %v4026 = vpop.f32.mrf.mxu0
    %v4027 = vadd.f32 %v3713, %v4026
    %4028 = vmatmul.f32.gmra.mxu0 %v3454
    %v4029 = vpop.f32.mrf.mxu0
    %v4030 = vadd.f32 %v3713, %v4029
    %4031 = vmatmul.f32.gmra.mxu0 %v3455
    %v4032 = vpop.f32.mrf.mxu0
    %v4033 = vadd.f32 %v3713, %v4032
    %4034 = vmatmul.f32.gmra.mxu0 %v3456
    %v4035 = vpop.f32.mrf.mxu0
    %v4036 = vadd.f32 %v3713, %v4035
    %4037 = vmatmul.f32.gmra.mxu0 %v3457
    %v4038 = vpop.f32.mrf.mxu0
    %v4039 = vadd.f32 %v3713, %v4038
    %4040 = vmatmul.f32.gmra.mxu0 %v3458
    %v4041 = vpop.f32.mrf.mxu0
    %v4042 = vadd.f32 %v3713, %v4041
    %4043 = vmatmul.f32.gmra.mxu0 %v3459
    %v4044 = vpop.f32.mrf.mxu0
    %v4045 = vadd.f32 %v3713, %v4044
    %4046 = vmatmul.f32.gmra.mxu0 %v3460
    %v4047 = vpop.f32.mrf.mxu0
    %v4048 = vadd.f32 %v3713, %v4047
    %4049 = vmatmul.f32.gmra.mxu0 %v3461
    %v4050 = vpop.f32.mrf.mxu0
    %v4051 = vadd.f32 %v3713, %v4050
    %4052 = vmatmul.f32.gmra.mxu0 %v3462
    %v4053 = vpop.f32.mrf.mxu0
    %v4054 = vadd.f32 %v3713, %v4053
    %4055 = vmatmul.f32.gmra.mxu0 %v3463
    %v4056 = vpop.f32.mrf.mxu0
    %v4057 = vadd.f32 %v3713, %v4056
    %4058 = vmatmul.f32.gmra.mxu0 %v3464
    %v4059 = vpop.f32.mrf.mxu0
    %v4060 = vadd.f32 %v3713, %v4059
    %4061 = vmatmul.f32.gmra.mxu0 %v3465
    %v4062 = vpop.f32.mrf.mxu0
    %v4063 = vadd.f32 %v3713, %v4062
    %4064 = vmatmul.f32.gmra.mxu0 %v3466
    %v4065 = vpop.f32.mrf.mxu0
    %v4066 = vadd.f32 %v3713, %v4065
    %4067 = vmatmul.f32.gmra.mxu0 %v3467
    %v4068 = vpop.f32.mrf.mxu0
    %v4069 = vadd.f32 %v3713, %v4068
    %4070 = vmatmul.f32.gmra.mxu0 %v3468
    %v4071 = vpop.f32.mrf.mxu0
    %v4072 = vadd.f32 %v3713, %v4071
    %4073 = vmatmul.f32.gmra.mxu0 %v3469
    %v4074 = vpop.f32.mrf.mxu0
    %v4075 = vadd.f32 %v3713, %v4074
    %4076 = vmatmul.f32.gmra.mxu0 %v3470
    %v4077 = vpop.f32.mrf.mxu0
    %v4078 = vadd.f32 %v3713, %v4077
    %4079 = vmatmul.f32.gmra.mxu0 %v3471
    %v4080 = vpop.f32.mrf.mxu0
    %v4081 = vadd.f32 %v3713, %v4080
    %4082 = vmatmul.f32.gmra.mxu0 %v3472
    %v4083 = vpop.f32.mrf.mxu0
    %v4084 = vadd.f32 %v3713, %v4083
    %4085 = vmatmul.f32.gmra.mxu0 %v3473
    %v4086 = vpop.f32.mrf.mxu0
    %v4087 = vadd.f32 %v3713, %v4086
    %4088 = vmatmul.f32.gmra.mxu0 %v3474
    %v4089 = vpop.f32.mrf.mxu0
    %v4090 = vadd.f32 %v3713, %v4089
    %4091 = vmatmul.f32.gmra.mxu0 %v3475
    %v4092 = vpop.f32.mrf.mxu0
    %v4093 = vadd.f32 %v3713, %v4092
    %4094 = vmatmul.f32.gmra.mxu0 %v3476
    %v4095 = vpop.f32.mrf.mxu0
    %v4096 = vadd.f32 %v3713, %v4095
    %4097 = vmatmul.f32.gmra.mxu0 %v3477
    %v4098 = vpop.f32.mrf.mxu0
    %v4099 = vadd.f32 %v3713, %v4098
    %4100 = vmatmul.f32.gmra.mxu0 %v3478
    %v4101 = vpop.f32.mrf.mxu0
    %v4102 = vadd.f32 %v3713, %v4101
    %4103 = vmatmul.f32.gmra.mxu0 %v3479
    %v4104 = vpop.f32.mrf.mxu0
    %v4105 = vadd.f32 %v3713, %v4104
    %4106 = vmatmul.f32.gmra.mxu0 %v3480
    %v4107 = vpop.f32.mrf.mxu0
    %v4108 = vadd.f32 %v3713, %v4107
    %4109 = vmatmul.f32.gmra.mxu0 %v3481
    %v4110 = vpop.f32.mrf.mxu0
    %v4111 = vadd.f32 %v3713, %v4110
    %4112 = vmatmul.f32.gmra.mxu0 %v3482
    %v4113 = vpop.f32.mrf.mxu0
    %v4114 = vadd.f32 %v3713, %v4113
    %4115 = vdwg.mxu0
    %4116 = vmatpush.msra.mxu0 %v3706
    %4117 = vmatpush.msra.mxu0 %v3705
    %4118 = vmatpush.msra.mxu0 %v3704
    %4119 = vmatpush.msra.mxu0 %v3703
    %4120 = vmatpush.msra.mxu0 %v3702
    %4121 = vmatpush.msra.mxu0 %v3701
    %4122 = vmatpush.msra.mxu0 %v3700
    %4123 = vmatpush.msra.mxu0 %v3699
    %4124 = vmatpush.msra.mxu0 %v3698
    %4125 = vmatpush.msra.mxu0 %v3697
    %4126 = vmatpush.msra.mxu0 %v3696
    %4127 = vmatpush.msra.mxu0 %v3695
    %4128 = vmatpush.msra.mxu0 %v3694
    %4129 = vmatpush.msra.mxu0 %v3693
    %4130 = vmatpush.msra.mxu0 %v3692
    %4131 = vmatpush.msra.mxu0 %v3691
    %4132 = vmatmul.f32.gmra.mxu0 %v3611
    %v4133 = vpop.f32.mrf.mxu0
    %v4134 = vadd.f32 %v3925, %v4133
    %4135 = vmatmul.f32.gmra.mxu0 %v3612
    %v4136 = vpop.f32.mrf.mxu0
    %v4137 = vadd.f32 %v3928, %v4136
    %4138 = vmatmul.f32.gmra.mxu0 %v3613
    %v4139 = vpop.f32.mrf.mxu0
    %v4140 = vadd.f32 %v3931, %v4139
    %4141 = vmatmul.f32.gmra.mxu0 %v3614
    %v4142 = vpop.f32.mrf.mxu0
    %v4143 = vadd.f32 %v3934, %v4142
    %4144 = vmatmul.f32.gmra.mxu0 %v3615
    %v4145 = vpop.f32.mrf.mxu0
    %v4146 = vadd.f32 %v3937, %v4145
    %4147 = vmatmul.f32.gmra.mxu0 %v3616
    %v4148 = vpop.f32.mrf.mxu0
    %v4149 = vadd.f32 %v3940, %v4148
    %4150 = vmatmul.f32.gmra.mxu0 %v3617
    %v4151 = vpop.f32.mrf.mxu0
    %v4152 = vadd.f32 %v3943, %v4151
    %4153 = vmatmul.f32.gmra.mxu0 %v3618
    %v4154 = vpop.f32.mrf.mxu0
    %v4155 = vadd.f32 %v3946, %v4154
    %4156 = vmatmul.f32.gmra.mxu0 %v3619
    %v4157 = vpop.f32.mrf.mxu0
    %v4158 = vadd.f32 %v3949, %v4157
    %4159 = vmatmul.f32.gmra.mxu0 %v3620
    %v4160 = vpop.f32.mrf.mxu0
    %v4161 = vadd.f32 %v3952, %v4160
    %4162 = vmatmul.f32.gmra.mxu0 %v3621
    %v4163 = vpop.f32.mrf.mxu0
    %v4164 = vadd.f32 %v3955, %v4163
    %4165 = vmatmul.f32.gmra.mxu0 %v3622
    %v4166 = vpop.f32.mrf.mxu0
    %v4167 = vadd.f32 %v3958, %v4166
    %4168 = vmatmul.f32.gmra.mxu0 %v3623
    %v4169 = vpop.f32.mrf.mxu0
    %v4170 = vadd.f32 %v3961, %v4169
    %4171 = vmatmul.f32.gmra.mxu0 %v3624
    %v4172 = vpop.f32.mrf.mxu0
    %v4173 = vadd.f32 %v3964, %v4172
    %4174 = vmatmul.f32.gmra.mxu0 %v3625
    %v4175 = vpop.f32.mrf.mxu0
    %v4176 = vadd.f32 %v3967, %v4175
    %4177 = vmatmul.f32.gmra.mxu0 %v3626
    %v4178 = vpop.f32.mrf.mxu0
    %v4179 = vadd.f32 %v3970, %v4178
    %4180 = vmatmul.f32.gmra.mxu0 %v3627
    %v4181 = vpop.f32.mrf.mxu0
    %v4182 = vadd.f32 %v3973, %v4181
    %4183 = vmatmul.f32.gmra.mxu0 %v3628
    %v4184 = vpop.f32.mrf.mxu0
    %v4185 = vadd.f32 %v3976, %v4184
    %4186 = vmatmul.f32.gmra.mxu0 %v3629
    %v4187 = vpop.f32.mrf.mxu0
    %v4188 = vadd.f32 %v3979, %v4187
    %4189 = vmatmul.f32.gmra.mxu0 %v3630
    %v4190 = vpop.f32.mrf.mxu0
    %v4191 = vadd.f32 %v3982, %v4190
    %4192 = vmatmul.f32.gmra.mxu0 %v3631
    %v4193 = vpop.f32.mrf.mxu0
    %v4194 = vadd.f32 %v3985, %v4193
    %4195 = vmatmul.f32.gmra.mxu0 %v3632
    %v4196 = vpop.f32.mrf.mxu0
    %v4197 = vadd.f32 %v3988, %v4196
    %4198 = vmatmul.f32.gmra.mxu0 %v3633
    %v4199 = vpop.f32.mrf.mxu0
    %v4200 = vadd.f32 %v3991, %v4199
    %4201 = vmatmul.f32.gmra.mxu0 %v3634
    %v4202 = vpop.f32.mrf.mxu0
    %v4203 = vadd.f32 %v3994, %v4202
    %4204 = vmatmul.f32.gmra.mxu0 %v3635
    %v4205 = vpop.f32.mrf.mxu0
    %v4206 = vadd.f32 %v3997, %v4205
    %4207 = vmatmul.f32.gmra.mxu0 %v3636
    %v4208 = vpop.f32.mrf.mxu0
    %v4209 = vadd.f32 %v4000, %v4208
    %4210 = vmatmul.f32.gmra.mxu0 %v3637
    %v4211 = vpop.f32.mrf.mxu0
    %v4212 = vadd.f32 %v4003, %v4211
    %4213 = vmatmul.f32.gmra.mxu0 %v3638
    %v4214 = vpop.f32.mrf.mxu0
    %v4215 = vadd.f32 %v4006, %v4214
    %4216 = vmatmul.f32.gmra.mxu0 %v3639
    %v4217 = vpop.f32.mrf.mxu0
    %v4218 = vadd.f32 %v4009, %v4217
    %4219 = vmatmul.f32.gmra.mxu0 %v3640
    %v4220 = vpop.f32.mrf.mxu0
    %v4221 = vadd.f32 %v4012, %v4220
    %4222 = vmatmul.f32.gmra.mxu0 %v3641
    %v4223 = vpop.f32.mrf.mxu0
    %v4224 = vadd.f32 %v4015, %v4223
    %4225 = vmatmul.f32.gmra.mxu0 %v3642
    %v4226 = vpop.f32.mrf.mxu0
    %v4227 = vadd.f32 %v4018, %v4226
    %4228 = vmatmul.f32.gmra.mxu0 %v3643
    %v4229 = vpop.f32.mrf.mxu0
    %v4230 = vadd.f32 %v4021, %v4229
    %4231 = vmatmul.f32.gmra.mxu0 %v3644
    %v4232 = vpop.f32.mrf.mxu0
    %v4233 = vadd.f32 %v4024, %v4232
    %4234 = vmatmul.f32.gmra.mxu0 %v3645
    %v4235 = vpop.f32.mrf.mxu0
    %v4236 = vadd.f32 %v4027, %v4235
    %4237 = vmatmul.f32.gmra.mxu0 %v3646
    %v4238 = vpop.f32.mrf.mxu0
    %v4239 = vadd.f32 %v4030, %v4238
    %4240 = vmatmul.f32.gmra.mxu0 %v3647
    %v4241 = vpop.f32.mrf.mxu0
    %v4242 = vadd.f32 %v4033, %v4241
    %4243 = vmatmul.f32.gmra.mxu0 %v3648
    %v4244 = vpop.f32.mrf.mxu0
    %v4245 = vadd.f32 %v4036, %v4244
    %4246 = vmatmul.f32.gmra.mxu0 %v3649
    %v4247 = vpop.f32.mrf.mxu0
    %v4248 = vadd.f32 %v4039, %v4247
    %4249 = vmatmul.f32.gmra.mxu0 %v3650
    %v4250 = vpop.f32.mrf.mxu0
    %v4251 = vadd.f32 %v4042, %v4250
    %4252 = vmatmul.f32.gmra.mxu0 %v3651
    %v4253 = vpop.f32.mrf.mxu0
    %v4254 = vadd.f32 %v4045, %v4253
    %4255 = vmatmul.f32.gmra.mxu0 %v3652
    %v4256 = vpop.f32.mrf.mxu0
    %v4257 = vadd.f32 %v4048, %v4256
    %4258 = vmatmul.f32.gmra.mxu0 %v3653
    %v4259 = vpop.f32.mrf.mxu0
    %v4260 = vadd.f32 %v4051, %v4259
    %4261 = vmatmul.f32.gmra.mxu0 %v3654
    %v4262 = vpop.f32.mrf.mxu0
    %v4263 = vadd.f32 %v4054, %v4262
    %4264 = vmatmul.f32.gmra.mxu0 %v3655
    %v4265 = vpop.f32.mrf.mxu0
    %v4266 = vadd.f32 %v4057, %v4265
    %4267 = vmatmul.f32.gmra.mxu0 %v3656
    %v4268 = vpop.f32.mrf.mxu0
    %v4269 = vadd.f32 %v4060, %v4268
    %4270 = vmatmul.f32.gmra.mxu0 %v3657
    %v4271 = vpop.f32.mrf.mxu0
    %v4272 = vadd.f32 %v4063, %v4271
    %4273 = vmatmul.f32.gmra.mxu0 %v3658
    %v4274 = vpop.f32.mrf.mxu0
    %v4275 = vadd.f32 %v4066, %v4274
    %4276 = vmatmul.f32.gmra.mxu0 %v3659
    %v4277 = vpop.f32.mrf.mxu0
    %v4278 = vadd.f32 %v4069, %v4277
    %4279 = vmatmul.f32.gmra.mxu0 %v3660
    %v4280 = vpop.f32.mrf.mxu0
    %v4281 = vadd.f32 %v4072, %v4280
    %4282 = vmatmul.f32.gmra.mxu0 %v3661
    %v4283 = vpop.f32.mrf.mxu0
    %v4284 = vadd.f32 %v4075, %v4283
    %4285 = vmatmul.f32.gmra.mxu0 %v3662
    %v4286 = vpop.f32.mrf.mxu0
    %v4287 = vadd.f32 %v4078, %v4286
    %4288 = vmatmul.f32.gmra.mxu0 %v3663
    %v4289 = vpop.f32.mrf.mxu0
    %v4290 = vadd.f32 %v4081, %v4289
    %4291 = vmatmul.f32.gmra.mxu0 %v3664
    %v4292 = vpop.f32.mrf.mxu0
    %v4293 = vadd.f32 %v4084, %v4292
    %4294 = vmatmul.f32.gmra.mxu0 %v3665
    %v4295 = vpop.f32.mrf.mxu0
    %v4296 = vadd.f32 %v4087, %v4295
    %4297 = vmatmul.f32.gmra.mxu0 %v3666
    %v4298 = vpop.f32.mrf.mxu0
    %v4299 = vadd.f32 %v4090, %v4298
    %4300 = vmatmul.f32.gmra.mxu0 %v3667
    %v4301 = vpop.f32.mrf.mxu0
    %v4302 = vadd.f32 %v4093, %v4301
    %4303 = vmatmul.f32.gmra.mxu0 %v3668
    %v4304 = vpop.f32.mrf.mxu0
    %v4305 = vadd.f32 %v4096, %v4304
    %4306 = vmatmul.f32.gmra.mxu0 %v3669
    %v4307 = vpop.f32.mrf.mxu0
    %v4308 = vadd.f32 %v4099, %v4307
    %4309 = vmatmul.f32.gmra.mxu0 %v3670
    %v4310 = vpop.f32.mrf.mxu0
    %v4311 = vadd.f32 %v4102, %v4310
    %4312 = vmatmul.f32.gmra.mxu0 %v3671
    %v4313 = vpop.f32.mrf.mxu0
    %v4314 = vadd.f32 %v4105, %v4313
    %4315 = vmatmul.f32.gmra.mxu0 %v3672
    %v4316 = vpop.f32.mrf.mxu0
    %v4317 = vadd.f32 %v4108, %v4316
    %4318 = vmatmul.f32.gmra.mxu0 %v3673
    %v4319 = vpop.f32.mrf.mxu0
    %v4320 = vadd.f32 %v4111, %v4319
    %4321 = vmatmul.f32.gmra.mxu0 %v3674
    %v4322 = vpop.f32.mrf.mxu0
    %v4323 = vadd.f32 %v4114, %v4322
    %4324 = vdwg.mxu0
    %4325 = vmatpush.msra.mxu0 0.0
    %4326 = vmatpush.msra.mxu0 0.0
    %4327 = vmatpush.msra.mxu0 0.0
    %4328 = vmatpush.msra.mxu0 0.0
    %4329 = vmatpush.msra.mxu0 0.0
    %4330 = vmatpush.msra.mxu0 0.0
    %4331 = vmatpush.msra.mxu0 0.0
    %4332 = vmatpush.msra.mxu0 0.0
    %4333 = vmatpush.msra.mxu0 0.0
    %4334 = vmatpush.msra.mxu0 0.0
    %4335 = vmatpush.msra.mxu0 0.0
    %4336 = vmatpush.msra.mxu0 0.0
    %4337 = vmatpush.msra.mxu0 %v3710
    %4338 = vmatpush.msra.mxu0 %v3709
    %4339 = vmatpush.msra.mxu0 %v3708
    %4340 = vmatpush.msra.mxu0 %v3707
    %4341 = vmatmul.f32.gmra.mxu0 %v3716
    %v4342 = vpop.f32.mrf.mxu0
    %v4343 = vadd.f32 %v4134, %v4342
    %4344 = vmatmul.f32.gmra.mxu0 %v3719
    %v4345 = vpop.f32.mrf.mxu0
    %v4346 = vadd.f32 %v4137, %v4345
    %4347 = vmatmul.f32.gmra.mxu0 %v3722
    %v4348 = vpop.f32.mrf.mxu0
    %v4349 = vadd.f32 %v4140, %v4348
    %4350 = vmatmul.f32.gmra.mxu0 %v3725
    %v4351 = vpop.f32.mrf.mxu0
    %v4352 = vadd.f32 %v4143, %v4351
    %4353 = vmatmul.f32.gmra.mxu0 %v3728
    %v4354 = vpop.f32.mrf.mxu0
    %v4355 = vadd.f32 %v4146, %v4354
    %4356 = vmatmul.f32.gmra.mxu0 %v3731
    %v4357 = vpop.f32.mrf.mxu0
    %v4358 = vadd.f32 %v4149, %v4357
    %4359 = vmatmul.f32.gmra.mxu0 %v3734
    %v4360 = vpop.f32.mrf.mxu0
    %v4361 = vadd.f32 %v4152, %v4360
    %4362 = vmatmul.f32.gmra.mxu0 %v3737
    %v4363 = vpop.f32.mrf.mxu0
    %v4364 = vadd.f32 %v4155, %v4363
    %4365 = vmatmul.f32.gmra.mxu0 %v3740
    %v4366 = vpop.f32.mrf.mxu0
    %v4367 = vadd.f32 %v4158, %v4366
    %4368 = vmatmul.f32.gmra.mxu0 %v3743
    %v4369 = vpop.f32.mrf.mxu0
    %v4370 = vadd.f32 %v4161, %v4369
    %4371 = vmatmul.f32.gmra.mxu0 %v3746
    %v4372 = vpop.f32.mrf.mxu0
    %v4373 = vadd.f32 %v4164, %v4372
    %4374 = vmatmul.f32.gmra.mxu0 %v3749
    %v4375 = vpop.f32.mrf.mxu0
    %v4376 = vadd.f32 %v4167, %v4375
    %4377 = vmatmul.f32.gmra.mxu0 %v3752
    %v4378 = vpop.f32.mrf.mxu0
    %v4379 = vadd.f32 %v4170, %v4378
    %4380 = vmatmul.f32.gmra.mxu0 %v3755
    %v4381 = vpop.f32.mrf.mxu0
    %v4382 = vadd.f32 %v4173, %v4381
    %4383 = vmatmul.f32.gmra.mxu0 %v3758
    %v4384 = vpop.f32.mrf.mxu0
    %v4385 = vadd.f32 %v4176, %v4384
    %4386 = vmatmul.f32.gmra.mxu0 %v3761
    %v4387 = vpop.f32.mrf.mxu0
    %v4388 = vadd.f32 %v4179, %v4387
    %4389 = vmatmul.f32.gmra.mxu0 %v3764
    %v4390 = vpop.f32.mrf.mxu0
    %v4391 = vadd.f32 %v4182, %v4390
    %4392 = vmatmul.f32.gmra.mxu0 %v3767
    %v4393 = vpop.f32.mrf.mxu0
    %v4394 = vadd.f32 %v4185, %v4393
    %4395 = vmatmul.f32.gmra.mxu0 %v3770
    %v4396 = vpop.f32.mrf.mxu0
    %v4397 = vadd.f32 %v4188, %v4396
    %4398 = vmatmul.f32.gmra.mxu0 %v3773
    %v4399 = vpop.f32.mrf.mxu0
    %v4400 = vadd.f32 %v4191, %v4399
    %4401 = vmatmul.f32.gmra.mxu0 %v3776
    %v4402 = vpop.f32.mrf.mxu0
    %v4403 = vadd.f32 %v4194, %v4402
    %4404 = vmatmul.f32.gmra.mxu0 %v3779
    %v4405 = vpop.f32.mrf.mxu0
    %v4406 = vadd.f32 %v4197, %v4405
    %4407 = vmatmul.f32.gmra.mxu0 %v3782
    %v4408 = vpop.f32.mrf.mxu0
    %v4409 = vadd.f32 %v4200, %v4408
    %4410 = vmatmul.f32.gmra.mxu0 %v3785
    %v4411 = vpop.f32.mrf.mxu0
    %v4412 = vadd.f32 %v4203, %v4411
    %4413 = vmatmul.f32.gmra.mxu0 %v3788
    %v4414 = vpop.f32.mrf.mxu0
    %v4415 = vadd.f32 %v4206, %v4414
    %4416 = vmatmul.f32.gmra.mxu0 %v3791
    %v4417 = vpop.f32.mrf.mxu0
    %v4418 = vadd.f32 %v4209, %v4417
    %4419 = vmatmul.f32.gmra.mxu0 %v3794
    %v4420 = vpop.f32.mrf.mxu0
    %v4421 = vadd.f32 %v4212, %v4420
    %4422 = vmatmul.f32.gmra.mxu0 %v3797
    %v4423 = vpop.f32.mrf.mxu0
    %v4424 = vadd.f32 %v4215, %v4423
    %4425 = vmatmul.f32.gmra.mxu0 %v3800
    %v4426 = vpop.f32.mrf.mxu0
    %v4427 = vadd.f32 %v4218, %v4426
    %4428 = vmatmul.f32.gmra.mxu0 %v3803
    %v4429 = vpop.f32.mrf.mxu0
    %v4430 = vadd.f32 %v4221, %v4429
    %4431 = vmatmul.f32.gmra.mxu0 %v3806
    %v4432 = vpop.f32.mrf.mxu0
    %v4433 = vadd.f32 %v4224, %v4432
    %4434 = vmatmul.f32.gmra.mxu0 %v3809
    %v4435 = vpop.f32.mrf.mxu0
    %v4436 = vadd.f32 %v4227, %v4435
    %4437 = vmatmul.f32.gmra.mxu0 %v3812
    %v4438 = vpop.f32.mrf.mxu0
    %v4439 = vadd.f32 %v4230, %v4438
    %4440 = vmatmul.f32.gmra.mxu0 %v3815
    %v4441 = vpop.f32.mrf.mxu0
    %v4442 = vadd.f32 %v4233, %v4441
    %4443 = vmatmul.f32.gmra.mxu0 %v3818
    %v4444 = vpop.f32.mrf.mxu0
    %v4445 = vadd.f32 %v4236, %v4444
    %4446 = vmatmul.f32.gmra.mxu0 %v3821
    %v4447 = vpop.f32.mrf.mxu0
    %v4448 = vadd.f32 %v4239, %v4447
    %4449 = vmatmul.f32.gmra.mxu0 %v3824
    %v4450 = vpop.f32.mrf.mxu0
    %v4451 = vadd.f32 %v4242, %v4450
    %4452 = vmatmul.f32.gmra.mxu0 %v3827
    %v4453 = vpop.f32.mrf.mxu0
    %v4454 = vadd.f32 %v4245, %v4453
    %4455 = vmatmul.f32.gmra.mxu0 %v3830
    %v4456 = vpop.f32.mrf.mxu0
    %v4457 = vadd.f32 %v4248, %v4456
    %4458 = vmatmul.f32.gmra.mxu0 %v3833
    %v4459 = vpop.f32.mrf.mxu0
    %v4460 = vadd.f32 %v4251, %v4459
    %4461 = vmatmul.f32.gmra.mxu0 %v3836
    %v4462 = vpop.f32.mrf.mxu0
    %v4463 = vadd.f32 %v4254, %v4462
    %4464 = vmatmul.f32.gmra.mxu0 %v3839
    %v4465 = vpop.f32.mrf.mxu0
    %v4466 = vadd.f32 %v4257, %v4465
    %4467 = vmatmul.f32.gmra.mxu0 %v3842
    %v4468 = vpop.f32.mrf.mxu0
    %v4469 = vadd.f32 %v4260, %v4468
    %4470 = vmatmul.f32.gmra.mxu0 %v3845
    %v4471 = vpop.f32.mrf.mxu0
    %v4472 = vadd.f32 %v4263, %v4471
    %4473 = vmatmul.f32.gmra.mxu0 %v3848
    %v4474 = vpop.f32.mrf.mxu0
    %v4475 = vadd.f32 %v4266, %v4474
    %4476 = vmatmul.f32.gmra.mxu0 %v3851
    %v4477 = vpop.f32.mrf.mxu0
    %v4478 = vadd.f32 %v4269, %v4477
    %4479 = vmatmul.f32.gmra.mxu0 %v3854
    %v4480 = vpop.f32.mrf.mxu0
    %v4481 = vadd.f32 %v4272, %v4480
    %4482 = vmatmul.f32.gmra.mxu0 %v3857
    %v4483 = vpop.f32.mrf.mxu0
    %v4484 = vadd.f32 %v4275, %v4483
    %4485 = vmatmul.f32.gmra.mxu0 %v3860
    %v4486 = vpop.f32.mrf.mxu0
    %v4487 = vadd.f32 %v4278, %v4486
    %4488 = vmatmul.f32.gmra.mxu0 %v3863
    %v4489 = vpop.f32.mrf.mxu0
    %v4490 = vadd.f32 %v4281, %v4489
    %4491 = vmatmul.f32.gmra.mxu0 %v3866
    %v4492 = vpop.f32.mrf.mxu0
    %v4493 = vadd.f32 %v4284, %v4492
    %4494 = vmatmul.f32.gmra.mxu0 %v3869
    %v4495 = vpop.f32.mrf.mxu0
    %v4496 = vadd.f32 %v4287, %v4495
    %4497 = vmatmul.f32.gmra.mxu0 %v3872
    %v4498 = vpop.f32.mrf.mxu0
    %v4499 = vadd.f32 %v4290, %v4498
    %4500 = vmatmul.f32.gmra.mxu0 %v3875
    %v4501 = vpop.f32.mrf.mxu0
    %v4502 = vadd.f32 %v4293, %v4501
    %4503 = vmatmul.f32.gmra.mxu0 %v3878
    %v4504 = vpop.f32.mrf.mxu0
    %v4505 = vadd.f32 %v4296, %v4504
    %4506 = vmatmul.f32.gmra.mxu0 %v3881
    %v4507 = vpop.f32.mrf.mxu0
    %v4508 = vadd.f32 %v4299, %v4507
    %4509 = vmatmul.f32.gmra.mxu0 %v3884
    %v4510 = vpop.f32.mrf.mxu0
    %v4511 = vadd.f32 %v4302, %v4510
    %4512 = vmatmul.f32.gmra.mxu0 %v3887
    %v4513 = vpop.f32.mrf.mxu0
    %v4514 = vadd.f32 %v4305, %v4513
    %4515 = vmatmul.f32.gmra.mxu0 %v3890
    %v4516 = vpop.f32.mrf.mxu0
    %v4517 = vadd.f32 %v4308, %v4516
    %4518 = vmatmul.f32.gmra.mxu0 %v3893
    %v4519 = vpop.f32.mrf.mxu0
    %v4520 = vadd.f32 %v4311, %v4519
    %4521 = vmatmul.f32.gmra.mxu0 %v3896
    %v4522 = vpop.f32.mrf.mxu0
    %v4523 = vadd.f32 %v4314, %v4522
    %4524 = vmatmul.f32.gmra.mxu0 %v3899
    %v4525 = vpop.f32.mrf.mxu0
    %v4526 = vadd.f32 %v4317, %v4525
    %4527 = vmatmul.f32.gmra.mxu0 %v3902
    %v4528 = vpop.f32.mrf.mxu0
    %v4529 = vadd.f32 %v4320, %v4528
    %4530 = vmatmul.f32.gmra.mxu0 %v3905
    %v4531 = vpop.f32.mrf.mxu0
    %v4532 = vadd.f32 %v4323, %v4531
    %4533 = vdwg.mxu0
    %v4566 = vrot.slane %v4349, 7
    %vm4567 = vcmask 1041409
    %v4568 = vsel %vm4567, %v4566, %v4343
    %v4569 = vrot.slane %v4355, 6
    %vm4570 = vcmask 1042434
    %v4571 = vsel %vm4570, %v4569, %v4568
    %v4572 = vrot.slane %v4361, 5
    %vm4573 = vcmask 1043459
    %v4574 = vsel %vm4573, %v4572, %v4571
    %v4575 = vrot.slane %v4367, 4
    %vm4576 = vcmask 1044484
    %v4577 = vsel %vm4576, %v4575, %v4574
    %v4578 = vrot.slane %v4373, 3
    %vm4579 = vcmask 1045509
    %v4580 = vsel %vm4579, %v4578, %v4577
    %v4581 = vrot.slane %v4379, 2
    %vm4582 = vcmask 1046534
    %v4583 = vsel %vm4582, %v4581, %v4580
    %v4584 = vrot.slane %v4385, 1
    %vm4585 = vcmask 1047559
    %v4586 = vsel %vm4585, %v4584, %v4583
    %v4587 = vrot.slane %v4397, 7
    %v4588 = vsel %vm4567, %v4587, %v4391
    %v4589 = vrot.slane %v4403, 6
    %v4590 = vsel %vm4570, %v4589, %v4588
    %v4591 = vrot.slane %v4409, 5
    %v4592 = vsel %vm4573, %v4591, %v4590
    %v4593 = vrot.slane %v4415, 4
    %v4594 = vsel %vm4576, %v4593, %v4592
    %v4595 = vrot.slane %v4421, 3
    %v4596 = vsel %vm4579, %v4595, %v4594
    %v4597 = vrot.slane %v4427, 2
    %v4598 = vsel %vm4582, %v4597, %v4596
    %v4599 = vrot.slane %v4433, 1
    %v4600 = vsel %vm4585, %v4599, %v4598
    %v4601 = vrot.slane %v4445, 7
    %v4602 = vsel %vm4567, %v4601, %v4439
    %v4603 = vrot.slane %v4451, 6
    %v4604 = vsel %vm4570, %v4603, %v4602
    %v4605 = vrot.slane %v4457, 5
    %v4606 = vsel %vm4573, %v4605, %v4604
    %v4607 = vrot.slane %v4463, 4
    %v4608 = vsel %vm4576, %v4607, %v4606
    %v4609 = vrot.slane %v4469, 3
    %v4610 = vsel %vm4579, %v4609, %v4608
    %v4611 = vrot.slane %v4475, 2
    %v4612 = vsel %vm4582, %v4611, %v4610
    %v4613 = vrot.slane %v4481, 1
    %v4614 = vsel %vm4585, %v4613, %v4612
    %v4615 = vrot.slane %v4493, 7
    %v4616 = vsel %vm4567, %v4615, %v4487
    %v4617 = vrot.slane %v4499, 6
    %v4618 = vsel %vm4570, %v4617, %v4616
    %v4619 = vrot.slane %v4505, 5
    %v4620 = vsel %vm4573, %v4619, %v4618
    %v4621 = vrot.slane %v4511, 4
    %v4622 = vsel %vm4576, %v4621, %v4620
    %v4623 = vrot.slane %v4517, 3
    %v4624 = vsel %vm4579, %v4623, %v4622
    %v4625 = vrot.slane %v4523, 2
    %v4626 = vsel %vm4582, %v4625, %v4624
    %v4627 = vrot.slane %v4529, 1
    %v4628 = vsel %vm4585, %v4627, %v4626
    %v4633 = vrot.slane %v4343, 1
    %v4634 = vsel %vm4567, %v4349, %v4633
    %v4635 = vrot.slane %v4355, 7
    %v4636 = vsel %vm4570, %v4635, %v4634
    %v4637 = vrot.slane %v4361, 6
    %v4638 = vsel %vm4573, %v4637, %v4636
    %v4639 = vrot.slane %v4367, 5
    %v4640 = vsel %vm4576, %v4639, %v4638
    %v4641 = vrot.slane %v4373, 4
    %v4642 = vsel %vm4579, %v4641, %v4640
    %v4643 = vrot.slane %v4379, 3
    %v4644 = vsel %vm4582, %v4643, %v4642
    %v4645 = vrot.slane %v4385, 2
    %v4646 = vsel %vm4585, %v4645, %v4644
    %v4647 = vrot.slane %v4391, 1
    %v4648 = vsel %vm4567, %v4397, %v4647
    %v4649 = vrot.slane %v4403, 7
    %v4650 = vsel %vm4570, %v4649, %v4648
    %v4651 = vrot.slane %v4409, 6
    %v4652 = vsel %vm4573, %v4651, %v4650
    %v4653 = vrot.slane %v4415, 5
    %v4654 = vsel %vm4576, %v4653, %v4652
    %v4655 = vrot.slane %v4421, 4
    %v4656 = vsel %vm4579, %v4655, %v4654
    %v4657 = vrot.slane %v4427, 3
    %v4658 = vsel %vm4582, %v4657, %v4656
    %v4659 = vrot.slane %v4433, 2
    %v4660 = vsel %vm4585, %v4659, %v4658
    %v4661 = vrot.slane %v4439, 1
    %v4662 = vsel %vm4567, %v4445, %v4661
    %v4663 = vrot.slane %v4451, 7
    %v4664 = vsel %vm4570, %v4663, %v4662
    %v4665 = vrot.slane %v4457, 6
    %v4666 = vsel %vm4573, %v4665, %v4664
    %v4667 = vrot.slane %v4463, 5
    %v4668 = vsel %vm4576, %v4667, %v4666
    %v4669 = vrot.slane %v4469, 4
    %v4670 = vsel %vm4579, %v4669, %v4668
    %v4671 = vrot.slane %v4475, 3
    %v4672 = vsel %vm4582, %v4671, %v4670
    %v4673 = vrot.slane %v4481, 2
    %v4674 = vsel %vm4585, %v4673, %v4672
    %v4675 = vrot.slane %v4487, 1
    %v4676 = vsel %vm4567, %v4493, %v4675
    %v4677 = vrot.slane %v4499, 7
    %v4678 = vsel %vm4570, %v4677, %v4676
    %v4679 = vrot.slane %v4505, 6
    %v4680 = vsel %vm4573, %v4679, %v4678
    %v4681 = vrot.slane %v4511, 5
    %v4682 = vsel %vm4576, %v4681, %v4680
    %v4683 = vrot.slane %v4517, 4
    %v4684 = vsel %vm4579, %v4683, %v4682
    %v4685 = vrot.slane %v4523, 3
    %v4686 = vsel %vm4582, %v4685, %v4684
    %v4687 = vrot.slane %v4529, 2
    %v4688 = vsel %vm4585, %v4687, %v4686
    %4689 = vrot.lane.b32.xlu0 %v4646, 32
    %v4690 = vpop.permute.xlu0 %4689
    %4691 = vrot.lane.b32.xlu0 %v4660, 32
    %v4692 = vpop.permute.xlu0 %4691
    %4693 = vrot.lane.b32.xlu0 %v4674, 32
    %v4694 = vpop.permute.xlu0 %4693
    %4695 = vrot.lane.b32.xlu0 %v4688, 32
    %v4696 = vpop.permute.xlu0 %4695
    %v4701 = vrot.slane %v4343, 2
    %v4702 = vrot.slane %v4349, 1
    %v4703 = vsel %vm4567, %v4702, %v4701
    %v4704 = vsel %vm4570, %v4355, %v4703
    %v4705 = vrot.slane %v4361, 7
    %v4706 = vsel %vm4573, %v4705, %v4704
    %v4707 = vrot.slane %v4367, 6
    %v4708 = vsel %vm4576, %v4707, %v4706
    %v4709 = vrot.slane %v4373, 5
    %v4710 = vsel %vm4579, %v4709, %v4708
    %v4711 = vrot.slane %v4379, 4
    %v4712 = vsel %vm4582, %v4711, %v4710
    %v4713 = vrot.slane %v4385, 3
    %v4714 = vsel %vm4585, %v4713, %v4712
    %v4715 = vrot.slane %v4391, 2
    %v4716 = vrot.slane %v4397, 1
    %v4717 = vsel %vm4567, %v4716, %v4715
    %v4718 = vsel %vm4570, %v4403, %v4717
    %v4719 = vrot.slane %v4409, 7
    %v4720 = vsel %vm4573, %v4719, %v4718
    %v4721 = vrot.slane %v4415, 6
    %v4722 = vsel %vm4576, %v4721, %v4720
    %v4723 = vrot.slane %v4421, 5
    %v4724 = vsel %vm4579, %v4723, %v4722
    %v4725 = vrot.slane %v4427, 4
    %v4726 = vsel %vm4582, %v4725, %v4724
    %v4727 = vrot.slane %v4433, 3
    %v4728 = vsel %vm4585, %v4727, %v4726
    %v4729 = vrot.slane %v4439, 2
    %v4730 = vrot.slane %v4445, 1
    %v4731 = vsel %vm4567, %v4730, %v4729
    %v4732 = vsel %vm4570, %v4451, %v4731
    %v4733 = vrot.slane %v4457, 7
    %v4734 = vsel %vm4573, %v4733, %v4732
    %v4735 = vrot.slane %v4463, 6
    %v4736 = vsel %vm4576, %v4735, %v4734
    %v4737 = vrot.slane %v4469, 5
    %v4738 = vsel %vm4579, %v4737, %v4736
    %v4739 = vrot.slane %v4475, 4
    %v4740 = vsel %vm4582, %v4739, %v4738
    %v4741 = vrot.slane %v4481, 3
    %v4742 = vsel %vm4585, %v4741, %v4740
    %v4743 = vrot.slane %v4487, 2
    %v4744 = vrot.slane %v4493, 1
    %v4745 = vsel %vm4567, %v4744, %v4743
    %v4746 = vsel %vm4570, %v4499, %v4745
    %v4747 = vrot.slane %v4505, 7
    %v4748 = vsel %vm4573, %v4747, %v4746
    %v4749 = vrot.slane %v4511, 6
    %v4750 = vsel %vm4576, %v4749, %v4748
    %v4751 = vrot.slane %v4517, 5
    %v4752 = vsel %vm4579, %v4751, %v4750
    %v4753 = vrot.slane %v4523, 4
    %v4754 = vsel %vm4582, %v4753, %v4752
    %v4755 = vrot.slane %v4529, 3
    %v4756 = vsel %vm4585, %v4755, %v4754
    %4757 = vrot.lane.b32.xlu0 %v4714, 64
    %v4758 = vpop.permute.xlu0 %4757
    %4759 = vrot.lane.b32.xlu0 %v4728, 64
    %v4760 = vpop.permute.xlu0 %4759
    %4761 = vrot.lane.b32.xlu0 %v4742, 64
    %v4762 = vpop.permute.xlu0 %4761
    %4763 = vrot.lane.b32.xlu0 %v4756, 64
    %v4764 = vpop.permute.xlu0 %4763
    %v4769 = vrot.slane %v4343, 3
    %v4770 = vrot.slane %v4349, 2
    %v4771 = vsel %vm4567, %v4770, %v4769
    %v4772 = vrot.slane %v4355, 1
    %v4773 = vsel %vm4570, %v4772, %v4771
    %v4774 = vsel %vm4573, %v4361, %v4773
    %v4775 = vrot.slane %v4367, 7
    %v4776 = vsel %vm4576, %v4775, %v4774
    %v4777 = vrot.slane %v4373, 6
    %v4778 = vsel %vm4579, %v4777, %v4776
    %v4779 = vrot.slane %v4379, 5
    %v4780 = vsel %vm4582, %v4779, %v4778
    %v4781 = vrot.slane %v4385, 4
    %v4782 = vsel %vm4585, %v4781, %v4780
    %v4783 = vrot.slane %v4391, 3
    %v4784 = vrot.slane %v4397, 2
    %v4785 = vsel %vm4567, %v4784, %v4783
    %v4786 = vrot.slane %v4403, 1
    %v4787 = vsel %vm4570, %v4786, %v4785
    %v4788 = vsel %vm4573, %v4409, %v4787
    %v4789 = vrot.slane %v4415, 7
    %v4790 = vsel %vm4576, %v4789, %v4788
    %v4791 = vrot.slane %v4421, 6
    %v4792 = vsel %vm4579, %v4791, %v4790
    %v4793 = vrot.slane %v4427, 5
    %v4794 = vsel %vm4582, %v4793, %v4792
    %v4795 = vrot.slane %v4433, 4
    %v4796 = vsel %vm4585, %v4795, %v4794
    %v4797 = vrot.slane %v4439, 3
    %v4798 = vrot.slane %v4445, 2
    %v4799 = vsel %vm4567, %v4798, %v4797
    %v4800 = vrot.slane %v4451, 1
    %v4801 = vsel %vm4570, %v4800, %v4799
    %v4802 = vsel %vm4573, %v4457, %v4801
    %v4803 = vrot.slane %v4463, 7
    %v4804 = vsel %vm4576, %v4803, %v4802
    %v4805 = vrot.slane %v4469, 6
    %v4806 = vsel %vm4579, %v4805, %v4804
    %v4807 = vrot.slane %v4475, 5
    %v4808 = vsel %vm4582, %v4807, %v4806
    %v4809 = vrot.slane %v4481, 4
    %v4810 = vsel %vm4585, %v4809, %v4808
    %v4811 = vrot.slane %v4487, 3
    %v4812 = vrot.slane %v4493, 2
    %v4813 = vsel %vm4567, %v4812, %v4811
    %v4814 = vrot.slane %v4499, 1
    %v4815 = vsel %vm4570, %v4814, %v4813
    %v4816 = vsel %vm4573, %v4505, %v4815
    %v4817 = vrot.slane %v4511, 7
    %v4818 = vsel %vm4576, %v4817, %v4816
    %v4819 = vrot.slane %v4517, 6
    %v4820 = vsel %vm4579, %v4819, %v4818
    %v4821 = vrot.slane %v4523, 5
    %v4822 = vsel %vm4582, %v4821, %v4820
    %v4823 = vrot.slane %v4529, 4
    %v4824 = vsel %vm4585, %v4823, %v4822
    %4825 = vrot.lane.b32.xlu0 %v4782, 96
    %v4826 = vpop.permute.xlu0 %4825
    %4827 = vrot.lane.b32.xlu0 %v4796, 96
    %v4828 = vpop.permute.xlu0 %4827
    %4829 = vrot.lane.b32.xlu0 %v4810, 96
    %v4830 = vpop.permute.xlu0 %4829
    %4831 = vrot.lane.b32.xlu0 %v4824, 96
    %v4832 = vpop.permute.xlu0 %4831
    %v4837 = vrot.slane %v4343, 4
    %v4838 = vrot.slane %v4349, 3
    %v4839 = vsel %vm4567, %v4838, %v4837
    %v4840 = vrot.slane %v4355, 2
    %v4841 = vsel %vm4570, %v4840, %v4839
    %v4842 = vrot.slane %v4361, 1
    %v4843 = vsel %vm4573, %v4842, %v4841
    %v4844 = vsel %vm4576, %v4367, %v4843
    %v4845 = vrot.slane %v4373, 7
    %v4846 = vsel %vm4579, %v4845, %v4844
    %v4847 = vrot.slane %v4379, 6
    %v4848 = vsel %vm4582, %v4847, %v4846
    %v4849 = vrot.slane %v4385, 5
    %v4850 = vsel %vm4585, %v4849, %v4848
    %v4851 = vrot.slane %v4391, 4
    %v4852 = vrot.slane %v4397, 3
    %v4853 = vsel %vm4567, %v4852, %v4851
    %v4854 = vrot.slane %v4403, 2
    %v4855 = vsel %vm4570, %v4854, %v4853
    %v4856 = vrot.slane %v4409, 1
    %v4857 = vsel %vm4573, %v4856, %v4855
    %v4858 = vsel %vm4576, %v4415, %v4857
    %v4859 = vrot.slane %v4421, 7
    %v4860 = vsel %vm4579, %v4859, %v4858
    %v4861 = vrot.slane %v4427, 6
    %v4862 = vsel %vm4582, %v4861, %v4860
    %v4863 = vrot.slane %v4433, 5
    %v4864 = vsel %vm4585, %v4863, %v4862
    %v4865 = vrot.slane %v4439, 4
    %v4866 = vrot.slane %v4445, 3
    %v4867 = vsel %vm4567, %v4866, %v4865
    %v4868 = vrot.slane %v4451, 2
    %v4869 = vsel %vm4570, %v4868, %v4867
    %v4870 = vrot.slane %v4457, 1
    %v4871 = vsel %vm4573, %v4870, %v4869
    %v4872 = vsel %vm4576, %v4463, %v4871
    %v4873 = vrot.slane %v4469, 7
    %v4874 = vsel %vm4579, %v4873, %v4872
    %v4875 = vrot.slane %v4475, 6
    %v4876 = vsel %vm4582, %v4875, %v4874
    %v4877 = vrot.slane %v4481, 5
    %v4878 = vsel %vm4585, %v4877, %v4876
    %v4879 = vrot.slane %v4487, 4
    %v4880 = vrot.slane %v4493, 3
    %v4881 = vsel %vm4567, %v4880, %v4879
    %v4882 = vrot.slane %v4499, 2
    %v4883 = vsel %vm4570, %v4882, %v4881
    %v4884 = vrot.slane %v4505, 1
    %v4885 = vsel %vm4573, %v4884, %v4883
    %v4886 = vsel %vm4576, %v4511, %v4885
    %v4887 = vrot.slane %v4517, 7
    %v4888 = vsel %vm4579, %v4887, %v4886
    %v4889 = vrot.slane %v4523, 6
    %v4890 = vsel %vm4582, %v4889, %v4888
    %v4891 = vrot.slane %v4529, 5
    %v4892 = vsel %vm4585, %v4891, %v4890
    %v4897 = vrot.slane %v4343, 5
    %v4898 = vrot.slane %v4349, 4
    %v4899 = vsel %vm4567, %v4898, %v4897
    %v4900 = vrot.slane %v4355, 3
    %v4901 = vsel %vm4570, %v4900, %v4899
    %v4902 = vrot.slane %v4361, 2
    %v4903 = vsel %vm4573, %v4902, %v4901
    %v4904 = vrot.slane %v4367, 1
    %v4905 = vsel %vm4576, %v4904, %v4903
    %v4906 = vsel %vm4579, %v4373, %v4905
    %v4907 = vrot.slane %v4379, 7
    %v4908 = vsel %vm4582, %v4907, %v4906
    %v4909 = vrot.slane %v4385, 6
    %v4910 = vsel %vm4585, %v4909, %v4908
    %v4911 = vrot.slane %v4391, 5
    %v4912 = vrot.slane %v4397, 4
    %v4913 = vsel %vm4567, %v4912, %v4911
    %v4914 = vrot.slane %v4403, 3
    %v4915 = vsel %vm4570, %v4914, %v4913
    %v4916 = vrot.slane %v4409, 2
    %v4917 = vsel %vm4573, %v4916, %v4915
    %v4918 = vrot.slane %v4415, 1
    %v4919 = vsel %vm4576, %v4918, %v4917
    %v4920 = vsel %vm4579, %v4421, %v4919
    %v4921 = vrot.slane %v4427, 7
    %v4922 = vsel %vm4582, %v4921, %v4920
    %v4923 = vrot.slane %v4433, 6
    %v4924 = vsel %vm4585, %v4923, %v4922
    %v4925 = vrot.slane %v4439, 5
    %v4926 = vrot.slane %v4445, 4
    %v4927 = vsel %vm4567, %v4926, %v4925
    %v4928 = vrot.slane %v4451, 3
    %v4929 = vsel %vm4570, %v4928, %v4927
    %v4930 = vrot.slane %v4457, 2
    %v4931 = vsel %vm4573, %v4930, %v4929
    %v4932 = vrot.slane %v4463, 1
    %v4933 = vsel %vm4576, %v4932, %v4931
    %v4934 = vsel %vm4579, %v4469, %v4933
    %v4935 = vrot.slane %v4475, 7
    %v4936 = vsel %vm4582, %v4935, %v4934
    %v4937 = vrot.slane %v4481, 6
    %v4938 = vsel %vm4585, %v4937, %v4936
    %v4939 = vrot.slane %v4487, 5
    %v4940 = vrot.slane %v4493, 4
    %v4941 = vsel %vm4567, %v4940, %v4939
    %v4942 = vrot.slane %v4499, 3
    %v4943 = vsel %vm4570, %v4942, %v4941
    %v4944 = vrot.slane %v4505, 2
    %v4945 = vsel %vm4573, %v4944, %v4943
    %v4946 = vrot.slane %v4511, 1
    %v4947 = vsel %vm4576, %v4946, %v4945
    %v4948 = vsel %vm4579, %v4517, %v4947
    %v4949 = vrot.slane %v4523, 7
    %v4950 = vsel %vm4582, %v4949, %v4948
    %v4951 = vrot.slane %v4529, 6
    %v4952 = vsel %vm4585, %v4951, %v4950
    %4953 = vrot.lane.b32.xlu0 %v4910, 32
    %v4954 = vpop.permute.xlu0 %4953
    %4955 = vrot.lane.b32.xlu0 %v4924, 32
    %v4956 = vpop.permute.xlu0 %4955
    %4957 = vrot.lane.b32.xlu0 %v4938, 32
    %v4958 = vpop.permute.xlu0 %4957
    %4959 = vrot.lane.b32.xlu0 %v4952, 32
    %v4960 = vpop.permute.xlu0 %4959
    %v4965 = vrot.slane %v4343, 6
    %v4966 = vrot.slane %v4349, 5
    %v4967 = vsel %vm4567, %v4966, %v4965
    %v4968 = vrot.slane %v4355, 4
    %v4969 = vsel %vm4570, %v4968, %v4967
    %v4970 = vrot.slane %v4361, 3
    %v4971 = vsel %vm4573, %v4970, %v4969
    %v4972 = vrot.slane %v4367, 2
    %v4973 = vsel %vm4576, %v4972, %v4971
    %v4974 = vrot.slane %v4373, 1
    %v4975 = vsel %vm4579, %v4974, %v4973
    %v4976 = vsel %vm4582, %v4379, %v4975
    %v4977 = vrot.slane %v4385, 7
    %v4978 = vsel %vm4585, %v4977, %v4976
    %v4979 = vrot.slane %v4391, 6
    %v4980 = vrot.slane %v4397, 5
    %v4981 = vsel %vm4567, %v4980, %v4979
    %v4982 = vrot.slane %v4403, 4
    %v4983 = vsel %vm4570, %v4982, %v4981
    %v4984 = vrot.slane %v4409, 3
    %v4985 = vsel %vm4573, %v4984, %v4983
    %v4986 = vrot.slane %v4415, 2
    %v4987 = vsel %vm4576, %v4986, %v4985
    %v4988 = vrot.slane %v4421, 1
    %v4989 = vsel %vm4579, %v4988, %v4987
    %v4990 = vsel %vm4582, %v4427, %v4989
    %v4991 = vrot.slane %v4433, 7
    %v4992 = vsel %vm4585, %v4991, %v4990
    %v4993 = vrot.slane %v4439, 6
    %v4994 = vrot.slane %v4445, 5
    %v4995 = vsel %vm4567, %v4994, %v4993
    %v4996 = vrot.slane %v4451, 4
    %v4997 = vsel %vm4570, %v4996, %v4995
    %v4998 = vrot.slane %v4457, 3
    %v4999 = vsel %vm4573, %v4998, %v4997
    %v5000 = vrot.slane %v4463, 2
    %v5001 = vsel %vm4576, %v5000, %v4999
    %v5002 = vrot.slane %v4469, 1
    %v5003 = vsel %vm4579, %v5002, %v5001
    %v5004 = vsel %vm4582, %v4475, %v5003
    %v5005 = vrot.slane %v4481, 7
    %v5006 = vsel %vm4585, %v5005, %v5004
    %v5007 = vrot.slane %v4487, 6
    %v5008 = vrot.slane %v4493, 5
    %v5009 = vsel %vm4567, %v5008, %v5007
    %v5010 = vrot.slane %v4499, 4
    %v5011 = vsel %vm4570, %v5010, %v5009
    %v5012 = vrot.slane %v4505, 3
    %v5013 = vsel %vm4573, %v5012, %v5011
    %v5014 = vrot.slane %v4511, 2
    %v5015 = vsel %vm4576, %v5014, %v5013
    %v5016 = vrot.slane %v4517, 1
    %v5017 = vsel %vm4579, %v5016, %v5015
    %v5018 = vsel %vm4582, %v4523, %v5017
    %v5019 = vrot.slane %v4529, 7
    %v5020 = vsel %vm4585, %v5019, %v5018
    %5021 = vrot.lane.b32.xlu0 %v4978, 64
    %v5022 = vpop.permute.xlu0 %5021
    %5023 = vrot.lane.b32.xlu0 %v4992, 64
    %v5024 = vpop.permute.xlu0 %5023
    %5025 = vrot.lane.b32.xlu0 %v5006, 64
    %v5026 = vpop.permute.xlu0 %5025
    %5027 = vrot.lane.b32.xlu0 %v5020, 64
    %v5028 = vpop.permute.xlu0 %5027
    %v5033 = vrot.slane %v4343, 7
    %v5034 = vrot.slane %v4349, 6
    %v5035 = vsel %vm4567, %v5034, %v5033
    %v5036 = vrot.slane %v4355, 5
    %v5037 = vsel %vm4570, %v5036, %v5035
    %v5038 = vrot.slane %v4361, 4
    %v5039 = vsel %vm4573, %v5038, %v5037
    %v5040 = vrot.slane %v4367, 3
    %v5041 = vsel %vm4576, %v5040, %v5039
    %v5042 = vrot.slane %v4373, 2
    %v5043 = vsel %vm4579, %v5042, %v5041
    %v5044 = vrot.slane %v4379, 1
    %v5045 = vsel %vm4582, %v5044, %v5043
    %v5046 = vsel %vm4585, %v4385, %v5045
    %v5047 = vrot.slane %v4391, 7
    %v5048 = vrot.slane %v4397, 6
    %v5049 = vsel %vm4567, %v5048, %v5047
    %v5050 = vrot.slane %v4403, 5
    %v5051 = vsel %vm4570, %v5050, %v5049
    %v5052 = vrot.slane %v4409, 4
    %v5053 = vsel %vm4573, %v5052, %v5051
    %v5054 = vrot.slane %v4415, 3
    %v5055 = vsel %vm4576, %v5054, %v5053
    %v5056 = vrot.slane %v4421, 2
    %v5057 = vsel %vm4579, %v5056, %v5055
    %v5058 = vrot.slane %v4427, 1
    %v5059 = vsel %vm4582, %v5058, %v5057
    %v5060 = vsel %vm4585, %v4433, %v5059
    %v5061 = vrot.slane %v4439, 7
    %v5062 = vrot.slane %v4445, 6
    %v5063 = vsel %vm4567, %v5062, %v5061
    %v5064 = vrot.slane %v4451, 5
    %v5065 = vsel %vm4570, %v5064, %v5063
    %v5066 = vrot.slane %v4457, 4
    %v5067 = vsel %vm4573, %v5066, %v5065
    %v5068 = vrot.slane %v4463, 3
    %v5069 = vsel %vm4576, %v5068, %v5067
    %v5070 = vrot.slane %v4469, 2
    %v5071 = vsel %vm4579, %v5070, %v5069
    %v5072 = vrot.slane %v4475, 1
    %v5073 = vsel %vm4582, %v5072, %v5071
    %v5074 = vsel %vm4585, %v4481, %v5073
    %v5075 = vrot.slane %v4487, 7
    %v5076 = vrot.slane %v4493, 6
    %v5077 = vsel %vm4567, %v5076, %v5075
    %v5078 = vrot.slane %v4499, 5
    %v5079 = vsel %vm4570, %v5078, %v5077
    %v5080 = vrot.slane %v4505, 4
    %v5081 = vsel %vm4573, %v5080, %v5079
    %v5082 = vrot.slane %v4511, 3
    %v5083 = vsel %vm4576, %v5082, %v5081
    %v5084 = vrot.slane %v4517, 2
    %v5085 = vsel %vm4579, %v5084, %v5083
    %v5086 = vrot.slane %v4523, 1
    %v5087 = vsel %vm4582, %v5086, %v5085
    %v5088 = vsel %vm4585, %v4529, %v5087
    %5089 = vrot.lane.b32.xlu0 %v5046, 96
    %v5090 = vpop.permute.xlu0 %5089
    %5091 = vrot.lane.b32.xlu0 %v5060, 96
    %v5092 = vpop.permute.xlu0 %5091
    %5093 = vrot.lane.b32.xlu0 %v5074, 96
    %v5094 = vpop.permute.xlu0 %5093
    %5095 = vrot.lane.b32.xlu0 %v5088, 96
    %v5096 = vpop.permute.xlu0 %5095
    %v5133 = vrot.slane %v4352, 7
    %v5134 = vsel %vm4567, %v5133, %v4346
    %v5135 = vrot.slane %v4358, 6
    %v5136 = vsel %vm4570, %v5135, %v5134
    %v5137 = vrot.slane %v4364, 5
    %v5138 = vsel %vm4573, %v5137, %v5136
    %v5139 = vrot.slane %v4370, 4
    %v5140 = vsel %vm4576, %v5139, %v5138
    %v5141 = vrot.slane %v4376, 3
    %v5142 = vsel %vm4579, %v5141, %v5140
    %v5143 = vrot.slane %v4382, 2
    %v5144 = vsel %vm4582, %v5143, %v5142
    %v5145 = vrot.slane %v4388, 1
    %v5146 = vsel %vm4585, %v5145, %v5144
    %v5147 = vrot.slane %v4400, 7
    %v5148 = vsel %vm4567, %v5147, %v4394
    %v5149 = vrot.slane %v4406, 6
    %v5150 = vsel %vm4570, %v5149, %v5148
    %v5151 = vrot.slane %v4412, 5
    %v5152 = vsel %vm4573, %v5151, %v5150
    %v5153 = vrot.slane %v4418, 4
    %v5154 = vsel %vm4576, %v5153, %v5152
    %v5155 = vrot.slane %v4424, 3
    %v5156 = vsel %vm4579, %v5155, %v5154
    %v5157 = vrot.slane %v4430, 2
    %v5158 = vsel %vm4582, %v5157, %v5156
    %v5159 = vrot.slane %v4436, 1
    %v5160 = vsel %vm4585, %v5159, %v5158
    %v5161 = vrot.slane %v4448, 7
    %v5162 = vsel %vm4567, %v5161, %v4442
    %v5163 = vrot.slane %v4454, 6
    %v5164 = vsel %vm4570, %v5163, %v5162
    %v5165 = vrot.slane %v4460, 5
    %v5166 = vsel %vm4573, %v5165, %v5164
    %v5167 = vrot.slane %v4466, 4
    %v5168 = vsel %vm4576, %v5167, %v5166
    %v5169 = vrot.slane %v4472, 3
    %v5170 = vsel %vm4579, %v5169, %v5168
    %v5171 = vrot.slane %v4478, 2
    %v5172 = vsel %vm4582, %v5171, %v5170
    %v5173 = vrot.slane %v4484, 1
    %v5174 = vsel %vm4585, %v5173, %v5172
    %v5175 = vrot.slane %v4496, 7
    %v5176 = vsel %vm4567, %v5175, %v4490
    %v5177 = vrot.slane %v4502, 6
    %v5178 = vsel %vm4570, %v5177, %v5176
    %v5179 = vrot.slane %v4508, 5
    %v5180 = vsel %vm4573, %v5179, %v5178
    %v5181 = vrot.slane %v4514, 4
    %v5182 = vsel %vm4576, %v5181, %v5180
    %v5183 = vrot.slane %v4520, 3
    %v5184 = vsel %vm4579, %v5183, %v5182
    %v5185 = vrot.slane %v4526, 2
    %v5186 = vsel %vm4582, %v5185, %v5184
    %v5187 = vrot.slane %v4532, 1
    %v5188 = vsel %vm4585, %v5187, %v5186
    %v5193 = vrot.slane %v4346, 1
    %v5194 = vsel %vm4567, %v4352, %v5193
    %v5195 = vrot.slane %v4358, 7
    %v5196 = vsel %vm4570, %v5195, %v5194
    %v5197 = vrot.slane %v4364, 6
    %v5198 = vsel %vm4573, %v5197, %v5196
    %v5199 = vrot.slane %v4370, 5
    %v5200 = vsel %vm4576, %v5199, %v5198
    %v5201 = vrot.slane %v4376, 4
    %v5202 = vsel %vm4579, %v5201, %v5200
    %v5203 = vrot.slane %v4382, 3
    %v5204 = vsel %vm4582, %v5203, %v5202
    %v5205 = vrot.slane %v4388, 2
    %v5206 = vsel %vm4585, %v5205, %v5204
    %v5207 = vrot.slane %v4394, 1
    %v5208 = vsel %vm4567, %v4400, %v5207
    %v5209 = vrot.slane %v4406, 7
    %v5210 = vsel %vm4570, %v5209, %v5208
    %v5211 = vrot.slane %v4412, 6
    %v5212 = vsel %vm4573, %v5211, %v5210
    %v5213 = vrot.slane %v4418, 5
    %v5214 = vsel %vm4576, %v5213, %v5212
    %v5215 = vrot.slane %v4424, 4
    %v5216 = vsel %vm4579, %v5215, %v5214
    %v5217 = vrot.slane %v4430, 3
    %v5218 = vsel %vm4582, %v5217, %v5216
    %v5219 = vrot.slane %v4436, 2
    %v5220 = vsel %vm4585, %v5219, %v5218
    %v5221 = vrot.slane %v4442, 1
    %v5222 = vsel %vm4567, %v4448, %v5221
    %v5223 = vrot.slane %v4454, 7
    %v5224 = vsel %vm4570, %v5223, %v5222
    %v5225 = vrot.slane %v4460, 6
    %v5226 = vsel %vm4573, %v5225, %v5224
    %v5227 = vrot.slane %v4466, 5
    %v5228 = vsel %vm4576, %v5227, %v5226
    %v5229 = vrot.slane %v4472, 4
    %v5230 = vsel %vm4579, %v5229, %v5228
    %v5231 = vrot.slane %v4478, 3
    %v5232 = vsel %vm4582, %v5231, %v5230
    %v5233 = vrot.slane %v4484, 2
    %v5234 = vsel %vm4585, %v5233, %v5232
    %v5235 = vrot.slane %v4490, 1
    %v5236 = vsel %vm4567, %v4496, %v5235
    %v5237 = vrot.slane %v4502, 7
    %v5238 = vsel %vm4570, %v5237, %v5236
    %v5239 = vrot.slane %v4508, 6
    %v5240 = vsel %vm4573, %v5239, %v5238
    %v5241 = vrot.slane %v4514, 5
    %v5242 = vsel %vm4576, %v5241, %v5240
    %v5243 = vrot.slane %v4520, 4
    %v5244 = vsel %vm4579, %v5243, %v5242
    %v5245 = vrot.slane %v4526, 3
    %v5246 = vsel %vm4582, %v5245, %v5244
    %v5247 = vrot.slane %v4532, 2
    %v5248 = vsel %vm4585, %v5247, %v5246
    %5249 = vrot.lane.b32.xlu0 %v5206, 32
    %v5250 = vpop.permute.xlu0 %5249
    %5251 = vrot.lane.b32.xlu0 %v5220, 32
    %v5252 = vpop.permute.xlu0 %5251
    %5253 = vrot.lane.b32.xlu0 %v5234, 32
    %v5254 = vpop.permute.xlu0 %5253
    %5255 = vrot.lane.b32.xlu0 %v5248, 32
    %v5256 = vpop.permute.xlu0 %5255
    %v5261 = vrot.slane %v4346, 2
    %v5262 = vrot.slane %v4352, 1
    %v5263 = vsel %vm4567, %v5262, %v5261
    %v5264 = vsel %vm4570, %v4358, %v5263
    %v5265 = vrot.slane %v4364, 7
    %v5266 = vsel %vm4573, %v5265, %v5264
    %v5267 = vrot.slane %v4370, 6
    %v5268 = vsel %vm4576, %v5267, %v5266
    %v5269 = vrot.slane %v4376, 5
    %v5270 = vsel %vm4579, %v5269, %v5268
    %v5271 = vrot.slane %v4382, 4
    %v5272 = vsel %vm4582, %v5271, %v5270
    %v5273 = vrot.slane %v4388, 3
    %v5274 = vsel %vm4585, %v5273, %v5272
    %v5275 = vrot.slane %v4394, 2
    %v5276 = vrot.slane %v4400, 1
    %v5277 = vsel %vm4567, %v5276, %v5275
    %v5278 = vsel %vm4570, %v4406, %v5277
    %v5279 = vrot.slane %v4412, 7
    %v5280 = vsel %vm4573, %v5279, %v5278
    %v5281 = vrot.slane %v4418, 6
    %v5282 = vsel %vm4576, %v5281, %v5280
    %v5283 = vrot.slane %v4424, 5
    %v5284 = vsel %vm4579, %v5283, %v5282
    %v5285 = vrot.slane %v4430, 4
    %v5286 = vsel %vm4582, %v5285, %v5284
    %v5287 = vrot.slane %v4436, 3
    %v5288 = vsel %vm4585, %v5287, %v5286
    %v5289 = vrot.slane %v4442, 2
    %v5290 = vrot.slane %v4448, 1
    %v5291 = vsel %vm4567, %v5290, %v5289
    %v5292 = vsel %vm4570, %v4454, %v5291
    %v5293 = vrot.slane %v4460, 7
    %v5294 = vsel %vm4573, %v5293, %v5292
    %v5295 = vrot.slane %v4466, 6
    %v5296 = vsel %vm4576, %v5295, %v5294
    %v5297 = vrot.slane %v4472, 5
    %v5298 = vsel %vm4579, %v5297, %v5296
    %v5299 = vrot.slane %v4478, 4
    %v5300 = vsel %vm4582, %v5299, %v5298
    %v5301 = vrot.slane %v4484, 3
    %v5302 = vsel %vm4585, %v5301, %v5300
    %v5303 = vrot.slane %v4490, 2
    %v5304 = vrot.slane %v4496, 1
    %v5305 = vsel %vm4567, %v5304, %v5303
    %v5306 = vsel %vm4570, %v4502, %v5305
    %v5307 = vrot.slane %v4508, 7
    %v5308 = vsel %vm4573, %v5307, %v5306
    %v5309 = vrot.slane %v4514, 6
    %v5310 = vsel %vm4576, %v5309, %v5308
    %v5311 = vrot.slane %v4520, 5
    %v5312 = vsel %vm4579, %v5311, %v5310
    %v5313 = vrot.slane %v4526, 4
    %v5314 = vsel %vm4582, %v5313, %v5312
    %v5315 = vrot.slane %v4532, 3
    %v5316 = vsel %vm4585, %v5315, %v5314
    %5317 = vrot.lane.b32.xlu0 %v5274, 64
    %v5318 = vpop.permute.xlu0 %5317
    %5319 = vrot.lane.b32.xlu0 %v5288, 64
    %v5320 = vpop.permute.xlu0 %5319
    %5321 = vrot.lane.b32.xlu0 %v5302, 64
    %v5322 = vpop.permute.xlu0 %5321
    %5323 = vrot.lane.b32.xlu0 %v5316, 64
    %v5324 = vpop.permute.xlu0 %5323
    %v5329 = vrot.slane %v4346, 3
    %v5330 = vrot.slane %v4352, 2
    %v5331 = vsel %vm4567, %v5330, %v5329
    %v5332 = vrot.slane %v4358, 1
    %v5333 = vsel %vm4570, %v5332, %v5331
    %v5334 = vsel %vm4573, %v4364, %v5333
    %v5335 = vrot.slane %v4370, 7
    %v5336 = vsel %vm4576, %v5335, %v5334
    %v5337 = vrot.slane %v4376, 6
    %v5338 = vsel %vm4579, %v5337, %v5336
    %v5339 = vrot.slane %v4382, 5
    %v5340 = vsel %vm4582, %v5339, %v5338
    %v5341 = vrot.slane %v4388, 4
    %v5342 = vsel %vm4585, %v5341, %v5340
    %v5343 = vrot.slane %v4394, 3
    %v5344 = vrot.slane %v4400, 2
    %v5345 = vsel %vm4567, %v5344, %v5343
    %v5346 = vrot.slane %v4406, 1
    %v5347 = vsel %vm4570, %v5346, %v5345
    %v5348 = vsel %vm4573, %v4412, %v5347
    %v5349 = vrot.slane %v4418, 7
    %v5350 = vsel %vm4576, %v5349, %v5348
    %v5351 = vrot.slane %v4424, 6
    %v5352 = vsel %vm4579, %v5351, %v5350
    %v5353 = vrot.slane %v4430, 5
    %v5354 = vsel %vm4582, %v5353, %v5352
    %v5355 = vrot.slane %v4436, 4
    %v5356 = vsel %vm4585, %v5355, %v5354
    %v5357 = vrot.slane %v4442, 3
    %v5358 = vrot.slane %v4448, 2
    %v5359 = vsel %vm4567, %v5358, %v5357
    %v5360 = vrot.slane %v4454, 1
    %v5361 = vsel %vm4570, %v5360, %v5359
    %v5362 = vsel %vm4573, %v4460, %v5361
    %v5363 = vrot.slane %v4466, 7
    %v5364 = vsel %vm4576, %v5363, %v5362
    %v5365 = vrot.slane %v4472, 6
    %v5366 = vsel %vm4579, %v5365, %v5364
    %v5367 = vrot.slane %v4478, 5
    %v5368 = vsel %vm4582, %v5367, %v5366
    %v5369 = vrot.slane %v4484, 4
    %v5370 = vsel %vm4585, %v5369, %v5368
    %v5371 = vrot.slane %v4490, 3
    %v5372 = vrot.slane %v4496, 2
    %v5373 = vsel %vm4567, %v5372, %v5371
    %v5374 = vrot.slane %v4502, 1
    %v5375 = vsel %vm4570, %v5374, %v5373
    %v5376 = vsel %vm4573, %v4508, %v5375
    %v5377 = vrot.slane %v4514, 7
    %v5378 = vsel %vm4576, %v5377, %v5376
    %v5379 = vrot.slane %v4520, 6
    %v5380 = vsel %vm4579, %v5379, %v5378
    %v5381 = vrot.slane %v4526, 5
    %v5382 = vsel %vm4582, %v5381, %v5380
    %v5383 = vrot.slane %v4532, 4
    %v5384 = vsel %vm4585, %v5383, %v5382
    %5385 = vrot.lane.b32.xlu0 %v5342, 96
    %v5386 = vpop.permute.xlu0 %5385
    %5387 = vrot.lane.b32.xlu0 %v5356, 96
    %v5388 = vpop.permute.xlu0 %5387
    %5389 = vrot.lane.b32.xlu0 %v5370, 96
    %v5390 = vpop.permute.xlu0 %5389
    %5391 = vrot.lane.b32.xlu0 %v5384, 96
    %v5392 = vpop.permute.xlu0 %5391
    %v5397 = vrot.slane %v4346, 4
    %v5398 = vrot.slane %v4352, 3
    %v5399 = vsel %vm4567, %v5398, %v5397
    %v5400 = vrot.slane %v4358, 2
    %v5401 = vsel %vm4570, %v5400, %v5399
    %v5402 = vrot.slane %v4364, 1
    %v5403 = vsel %vm4573, %v5402, %v5401
    %v5404 = vsel %vm4576, %v4370, %v5403
    %v5405 = vrot.slane %v4376, 7
    %v5406 = vsel %vm4579, %v5405, %v5404
    %v5407 = vrot.slane %v4382, 6
    %v5408 = vsel %vm4582, %v5407, %v5406
    %v5409 = vrot.slane %v4388, 5
    %v5410 = vsel %vm4585, %v5409, %v5408
    %v5411 = vrot.slane %v4394, 4
    %v5412 = vrot.slane %v4400, 3
    %v5413 = vsel %vm4567, %v5412, %v5411
    %v5414 = vrot.slane %v4406, 2
    %v5415 = vsel %vm4570, %v5414, %v5413
    %v5416 = vrot.slane %v4412, 1
    %v5417 = vsel %vm4573, %v5416, %v5415
    %v5418 = vsel %vm4576, %v4418, %v5417
    %v5419 = vrot.slane %v4424, 7
    %v5420 = vsel %vm4579, %v5419, %v5418
    %v5421 = vrot.slane %v4430, 6
    %v5422 = vsel %vm4582, %v5421, %v5420
    %v5423 = vrot.slane %v4436, 5
    %v5424 = vsel %vm4585, %v5423, %v5422
    %v5425 = vrot.slane %v4442, 4
    %v5426 = vrot.slane %v4448, 3
    %v5427 = vsel %vm4567, %v5426, %v5425
    %v5428 = vrot.slane %v4454, 2
    %v5429 = vsel %vm4570, %v5428, %v5427
    %v5430 = vrot.slane %v4460, 1
    %v5431 = vsel %vm4573, %v5430, %v5429
    %v5432 = vsel %vm4576, %v4466, %v5431
    %v5433 = vrot.slane %v4472, 7
    %v5434 = vsel %vm4579, %v5433, %v5432
    %v5435 = vrot.slane %v4478, 6
    %v5436 = vsel %vm4582, %v5435, %v5434
    %v5437 = vrot.slane %v4484, 5
    %v5438 = vsel %vm4585, %v5437, %v5436
    %v5439 = vrot.slane %v4490, 4
    %v5440 = vrot.slane %v4496, 3
    %v5441 = vsel %vm4567, %v5440, %v5439
    %v5442 = vrot.slane %v4502, 2
    %v5443 = vsel %vm4570, %v5442, %v5441
    %v5444 = vrot.slane %v4508, 1
    %v5445 = vsel %vm4573, %v5444, %v5443
    %v5446 = vsel %vm4576, %v4514, %v5445
    %v5447 = vrot.slane %v4520, 7
    %v5448 = vsel %vm4579, %v5447, %v5446
    %v5449 = vrot.slane %v4526, 6
    %v5450 = vsel %vm4582, %v5449, %v5448
    %v5451 = vrot.slane %v4532, 5
    %v5452 = vsel %vm4585, %v5451, %v5450
    %v5457 = vrot.slane %v4346, 5
    %v5458 = vrot.slane %v4352, 4
    %v5459 = vsel %vm4567, %v5458, %v5457
    %v5460 = vrot.slane %v4358, 3
    %v5461 = vsel %vm4570, %v5460, %v5459
    %v5462 = vrot.slane %v4364, 2
    %v5463 = vsel %vm4573, %v5462, %v5461
    %v5464 = vrot.slane %v4370, 1
    %v5465 = vsel %vm4576, %v5464, %v5463
    %v5466 = vsel %vm4579, %v4376, %v5465
    %v5467 = vrot.slane %v4382, 7
    %v5468 = vsel %vm4582, %v5467, %v5466
    %v5469 = vrot.slane %v4388, 6
    %v5470 = vsel %vm4585, %v5469, %v5468
    %v5471 = vrot.slane %v4394, 5
    %v5472 = vrot.slane %v4400, 4
    %v5473 = vsel %vm4567, %v5472, %v5471
    %v5474 = vrot.slane %v4406, 3
    %v5475 = vsel %vm4570, %v5474, %v5473
    %v5476 = vrot.slane %v4412, 2
    %v5477 = vsel %vm4573, %v5476, %v5475
    %v5478 = vrot.slane %v4418, 1
    %v5479 = vsel %vm4576, %v5478, %v5477
    %v5480 = vsel %vm4579, %v4424, %v5479
    %v5481 = vrot.slane %v4430, 7
    %v5482 = vsel %vm4582, %v5481, %v5480
    %v5483 = vrot.slane %v4436, 6
    %v5484 = vsel %vm4585, %v5483, %v5482
    %v5485 = vrot.slane %v4442, 5
    %v5486 = vrot.slane %v4448, 4
    %v5487 = vsel %vm4567, %v5486, %v5485
    %v5488 = vrot.slane %v4454, 3
    %v5489 = vsel %vm4570, %v5488, %v5487
    %v5490 = vrot.slane %v4460, 2
    %v5491 = vsel %vm4573, %v5490, %v5489
    %v5492 = vrot.slane %v4466, 1
    %v5493 = vsel %vm4576, %v5492, %v5491
    %v5494 = vsel %vm4579, %v4472, %v5493
    %v5495 = vrot.slane %v4478, 7
    %v5496 = vsel %vm4582, %v5495, %v5494
    %v5497 = vrot.slane %v4484, 6
    %v5498 = vsel %vm4585, %v5497, %v5496
    %v5499 = vrot.slane %v4490, 5
    %v5500 = vrot.slane %v4496, 4
    %v5501 = vsel %vm4567, %v5500, %v5499
    %v5502 = vrot.slane %v4502, 3
    %v5503 = vsel %vm4570, %v5502, %v5501
    %v5504 = vrot.slane %v4508, 2
    %v5505 = vsel %vm4573, %v5504, %v5503
    %v5506 = vrot.slane %v4514, 1
    %v5507 = vsel %vm4576, %v5506, %v5505
    %v5508 = vsel %vm4579, %v4520, %v5507
    %v5509 = vrot.slane %v4526, 7
    %v5510 = vsel %vm4582, %v5509, %v5508
    %v5511 = vrot.slane %v4532, 6
    %v5512 = vsel %vm4585, %v5511, %v5510
    %5513 = vrot.lane.b32.xlu0 %v5470, 32
    %v5514 = vpop.permute.xlu0 %5513
    %5515 = vrot.lane.b32.xlu0 %v5484, 32
    %v5516 = vpop.permute.xlu0 %5515
    %5517 = vrot.lane.b32.xlu0 %v5498, 32
    %v5518 = vpop.permute.xlu0 %5517
    %5519 = vrot.lane.b32.xlu0 %v5512, 32
    %v5520 = vpop.permute.xlu0 %5519
    %v5525 = vrot.slane %v4346, 6
    %v5526 = vrot.slane %v4352, 5
    %v5527 = vsel %vm4567, %v5526, %v5525
    %v5528 = vrot.slane %v4358, 4
    %v5529 = vsel %vm4570, %v5528, %v5527
    %v5530 = vrot.slane %v4364, 3
    %v5531 = vsel %vm4573, %v5530, %v5529
    %v5532 = vrot.slane %v4370, 2
    %v5533 = vsel %vm4576, %v5532, %v5531
    %v5534 = vrot.slane %v4376, 1
    %v5535 = vsel %vm4579, %v5534, %v5533
    %v5536 = vsel %vm4582, %v4382, %v5535
    %v5537 = vrot.slane %v4388, 7
    %v5538 = vsel %vm4585, %v5537, %v5536
    %v5539 = vrot.slane %v4394, 6
    %v5540 = vrot.slane %v4400, 5
    %v5541 = vsel %vm4567, %v5540, %v5539
    %v5542 = vrot.slane %v4406, 4
    %v5543 = vsel %vm4570, %v5542, %v5541
    %v5544 = vrot.slane %v4412, 3
    %v5545 = vsel %vm4573, %v5544, %v5543
    %v5546 = vrot.slane %v4418, 2
    %v5547 = vsel %vm4576, %v5546, %v5545
    %v5548 = vrot.slane %v4424, 1
    %v5549 = vsel %vm4579, %v5548, %v5547
    %v5550 = vsel %vm4582, %v4430, %v5549
    %v5551 = vrot.slane %v4436, 7
    %v5552 = vsel %vm4585, %v5551, %v5550
    %v5553 = vrot.slane %v4442, 6
    %v5554 = vrot.slane %v4448, 5
    %v5555 = vsel %vm4567, %v5554, %v5553
    %v5556 = vrot.slane %v4454, 4
    %v5557 = vsel %vm4570, %v5556, %v5555
    %v5558 = vrot.slane %v4460, 3
    %v5559 = vsel %vm4573, %v5558, %v5557
    %v5560 = vrot.slane %v4466, 2
    %v5561 = vsel %vm4576, %v5560, %v5559
    %v5562 = vrot.slane %v4472, 1
    %v5563 = vsel %vm4579, %v5562, %v5561
    %v5564 = vsel %vm4582, %v4478, %v5563
    %v5565 = vrot.slane %v4484, 7
    %v5566 = vsel %vm4585, %v5565, %v5564
    %v5567 = vrot.slane %v4490, 6
    %v5568 = vrot.slane %v4496, 5
    %v5569 = vsel %vm4567, %v5568, %v5567
    %v5570 = vrot.slane %v4502, 4
    %v5571 = vsel %vm4570, %v5570, %v5569
    %v5572 = vrot.slane %v4508, 3
    %v5573 = vsel %vm4573, %v5572, %v5571
    %v5574 = vrot.slane %v4514, 2
    %v5575 = vsel %vm4576, %v5574, %v5573
    %v5576 = vrot.slane %v4520, 1
    %v5577 = vsel %vm4579, %v5576, %v5575
    %v5578 = vsel %vm4582, %v4526, %v5577
    %v5579 = vrot.slane %v4532, 7
    %v5580 = vsel %vm4585, %v5579, %v5578
    %5581 = vrot.lane.b32.xlu0 %v5538, 64
    %v5582 = vpop.permute.xlu0 %5581
    %5583 = vrot.lane.b32.xlu0 %v5552, 64
    %v5584 = vpop.permute.xlu0 %5583
    %5585 = vrot.lane.b32.xlu0 %v5566, 64
    %v5586 = vpop.permute.xlu0 %5585
    %5587 = vrot.lane.b32.xlu0 %v5580, 64
    %v5588 = vpop.permute.xlu0 %5587
    %v5593 = vrot.slane %v4346, 7
    %v5594 = vrot.slane %v4352, 6
    %v5595 = vsel %vm4567, %v5594, %v5593
    %v5596 = vrot.slane %v4358, 5
    %v5597 = vsel %vm4570, %v5596, %v5595
    %v5598 = vrot.slane %v4364, 4
    %v5599 = vsel %vm4573, %v5598, %v5597
    %v5600 = vrot.slane %v4370, 3
    %v5601 = vsel %vm4576, %v5600, %v5599
    %v5602 = vrot.slane %v4376, 2
    %v5603 = vsel %vm4579, %v5602, %v5601
    %v5604 = vrot.slane %v4382, 1
    %v5605 = vsel %vm4582, %v5604, %v5603
    %v5606 = vsel %vm4585, %v4388, %v5605
    %v5607 = vrot.slane %v4394, 7
    %v5608 = vrot.slane %v4400, 6
    %v5609 = vsel %vm4567, %v5608, %v5607
    %v5610 = vrot.slane %v4406, 5
    %v5611 = vsel %vm4570, %v5610, %v5609
    %v5612 = vrot.slane %v4412, 4
    %v5613 = vsel %vm4573, %v5612, %v5611
    %v5614 = vrot.slane %v4418, 3
    %v5615 = vsel %vm4576, %v5614, %v5613
    %v5616 = vrot.slane %v4424, 2
    %v5617 = vsel %vm4579, %v5616, %v5615
    %v5618 = vrot.slane %v4430, 1
    %v5619 = vsel %vm4582, %v5618, %v5617
    %v5620 = vsel %vm4585, %v4436, %v5619
    %v5621 = vrot.slane %v4442, 7
    %v5622 = vrot.slane %v4448, 6
    %v5623 = vsel %vm4567, %v5622, %v5621
    %v5624 = vrot.slane %v4454, 5
    %v5625 = vsel %vm4570, %v5624, %v5623
    %v5626 = vrot.slane %v4460, 4
    %v5627 = vsel %vm4573, %v5626, %v5625
    %v5628 = vrot.slane %v4466, 3
    %v5629 = vsel %vm4576, %v5628, %v5627
    %v5630 = vrot.slane %v4472, 2
    %v5631 = vsel %vm4579, %v5630, %v5629
    %v5632 = vrot.slane %v4478, 1
    %v5633 = vsel %vm4582, %v5632, %v5631
    %v5634 = vsel %vm4585, %v4484, %v5633
    %v5635 = vrot.slane %v4490, 7
    %v5636 = vrot.slane %v4496, 6
    %v5637 = vsel %vm4567, %v5636, %v5635
    %v5638 = vrot.slane %v4502, 5
    %v5639 = vsel %vm4570, %v5638, %v5637
    %v5640 = vrot.slane %v4508, 4
    %v5641 = vsel %vm4573, %v5640, %v5639
    %v5642 = vrot.slane %v4514, 3
    %v5643 = vsel %vm4576, %v5642, %v5641
    %v5644 = vrot.slane %v4520, 2
    %v5645 = vsel %vm4579, %v5644, %v5643
    %v5646 = vrot.slane %v4526, 1
    %v5647 = vsel %vm4582, %v5646, %v5645
    %v5648 = vsel %vm4585, %v4532, %v5647
    %5649 = vrot.lane.b32.xlu0 %v5606, 96
    %v5650 = vpop.permute.xlu0 %5649
    %5651 = vrot.lane.b32.xlu0 %v5620, 96
    %v5652 = vpop.permute.xlu0 %5651
    %5653 = vrot.lane.b32.xlu0 %v5634, 96
    %v5654 = vpop.permute.xlu0 %5653
    %5655 = vrot.lane.b32.xlu0 %v5648, 96
    %v5656 = vpop.permute.xlu0 %5655
    %v5661 = vsel %vm358, %v4586, %v4690
    %v5662 = vsel %vm358, %v4600, %v4692
    %v5663 = vsel %vm358, %v4614, %v4694
    %v5664 = vsel %vm358, %v4628, %v4696
    %v5665 = vsel %vm3353, %v5661, %v4758
    %v5666 = vsel %vm3353, %v5662, %v4760
    %v5667 = vsel %vm3353, %v5663, %v4762
    %v5668 = vsel %vm3353, %v5664, %v4764
    %v5669 = vsel %vm3418, %v5665, %v4826
    %v5670 = vsel %vm3418, %v5666, %v4828
    %v5671 = vsel %vm3418, %v5667, %v4830
    %v5672 = vsel %vm3418, %v5668, %v4832
    %v5673 = vsel %vm358, %v4850, %v4954
    %v5674 = vsel %vm358, %v4864, %v4956
    %v5675 = vsel %vm358, %v4878, %v4958
    %v5676 = vsel %vm358, %v4892, %v4960
    %v5677 = vsel %vm3353, %v5673, %v5022
    %v5678 = vsel %vm3353, %v5674, %v5024
    %v5679 = vsel %vm3353, %v5675, %v5026
    %v5680 = vsel %vm3353, %v5676, %v5028
    %v5681 = vsel %vm3418, %v5677, %v5090
    %v5682 = vsel %vm3418, %v5678, %v5092
    %v5683 = vsel %vm3418, %v5679, %v5094
    %v5684 = vsel %vm3418, %v5680, %v5096
    %v5685 = vsel %vm358, %v5146, %v5250
    %v5686 = vsel %vm358, %v5160, %v5252
    %v5687 = vsel %vm358, %v5174, %v5254
    %v5688 = vsel %vm358, %v5188, %v5256
    %v5689 = vsel %vm3353, %v5685, %v5318
    %v5690 = vsel %vm3353, %v5686, %v5320
    %v5691 = vsel %vm3353, %v5687, %v5322
    %v5692 = vsel %vm3353, %v5688, %v5324
    %v5693 = vsel %vm3418, %v5689, %v5386
    %v5694 = vsel %vm3418, %v5690, %v5388
    %v5695 = vsel %vm3418, %v5691, %v5390
    %v5696 = vsel %vm3418, %v5692, %v5392
    %v5697 = vsel %vm358, %v5410, %v5514
    %v5698 = vsel %vm358, %v5424, %v5516
    %v5699 = vsel %vm358, %v5438, %v5518
    %v5700 = vsel %vm358, %v5452, %v5520
    %v5701 = vsel %vm3353, %v5697, %v5582
    %v5702 = vsel %vm3353, %v5698, %v5584
    %v5703 = vsel %vm3353, %v5699, %v5586
    %v5704 = vsel %vm3353, %v5700, %v5588
    %v5705 = vsel %vm3418, %v5701, %v5650
    %v5706 = vsel %vm3418, %v5702, %v5652
    %v5707 = vsel %vm3418, %v5703, %v5654
    %v5708 = vsel %vm3418, %v5704, %v5656
    %5709 = vst [vmem:[#allocation8] sm:$0xff] %v5669
    %5710 = vst [vmem:[#allocation8 + $0x8] sm:$0xff] %v5681
    %5711 = vst [vmem:[#allocation8 + $0x10] sm:$0xff] %v5693
    %5712 = vst [vmem:[#allocation8 + $0x18] sm:$0xff] %v5705
    %5713 = vst [vmem:[#allocation8 + $0x20] sm:$0xff] %v5670
    %5714 = vst [vmem:[#allocation8 + $0x28] sm:$0xff] %v5682
    %5715 = vst [vmem:[#allocation8 + $0x30] sm:$0xff] %v5694
    %5716 = vst [vmem:[#allocation8 + $0x38] sm:$0xff] %v5706
    %5717 = vst [vmem:[#allocation8 + $0x40] sm:$0xff] %v5671
    %5718 = vst [vmem:[#allocation8 + $0x48] sm:$0xff] %v5683
    %5719 = vst [vmem:[#allocation8 + $0x50] sm:$0xff] %v5695
    %5720 = vst [vmem:[#allocation8 + $0x58] sm:$0xff] %v5707
    %5721 = vst [vmem:[#allocation8 + $0x60] sm:$0xff] %v5672
    %5722 = vst [vmem:[#allocation8 + $0x68] sm:$0xff] %v5684
    %5723 = vst [vmem:[#allocation8 + $0x70] sm:$0xff] %v5696
    %5724 = vst [vmem:[#allocation8 + $0x78] sm:$0xff] %v5708
    // Predicated region
    $region46: #{tpu_custom_call.1} parent=1 // pred_check
      _
    $region47: #{tpu_custom_call.1} parent=1 // pred_check_branch
      %5726 = sbr.rel (0) target = $region49
    $region48: #{tpu_custom_call.1} parent=1 // pred_region
      %5728 = vsyncadd [#allocation5], 0
      %s5729 = sshll.u32 [#allocation8], 4
      %s5730 = int_to_ptr.vmem [resolvable:$true] %s5729
      %s5731 = sshll.u32 %s9, 4
      %s5732 = int_to_ptr.hbm [resolvable:$true] %s5731
      %5737 = dma.vmem_to_hbm [thread:$0]  %s5730, 2048, %s5732, [#allocation5], 512, 512, 32
    $region49: #{tpu_custom_call.1} parent=1 // pred_fallthru
      _
    // Predicated region
    $region50: #{tpu_custom_call.1} parent=1 // pred_check
      _
    $region51: #{tpu_custom_call.1} parent=1 // pred_check_branch
      %5739 = sbr.rel (0) target = $region53
    $region52: #{tpu_custom_call.1} parent=1 // pred_region
      %5741 = dma.done [#allocation5], 2048
    $region53: #{tpu_custom_call.1} parent=1 // pred_fallthru
      _
    %5742 = vsyncpa [#allocation4], 1
    %5743 = vsyncpa [#allocation7], 1
    %5744 = vsyncpa [#allocation5], 1

</llo_original>
